<compile_context>
chip_gen: v7x
topology: tpu7x:2x2x1
jax: 0.10.0
libtpu: 0.0.40
codegen_flags: <defaults>
</compile_context>

<pallas_src>
import functools

import numpy as np

import jax
import jax.numpy as jnp
from jax.experimental import pallas as pl
from jax.experimental.pallas import tpu as pltpu


# ----------------------------------------------------------------------------
# Small helpers
# ----------------------------------------------------------------------------
def _round_up(x, m):
    return ((x + m - 1) // m) * m


# ----------------------------------------------------------------------------
# Pallas kernels
# ----------------------------------------------------------------------------
def _mm_bn_lrelu_kernel(a_ref, b_ref, scale_ref, shift_ref, o_ref):
    # bf16 MXU matmul (f32 accumulate) fused with eval-BatchNorm + LeakyReLU(0.2)
    y = jnp.dot(a_ref[...], b_ref[...], preferred_element_type=jnp.float32)
    z = y * scale_ref[...] + shift_ref[...]
    o_ref[...] = jnp.where(z > 0, z, 0.2 * z)


def _mm_bias_kernel(a_ref, b_ref, shift_ref, o_ref):
    # bf16 MXU matmul (f32 accumulate) + bias
    o_ref[...] = (jnp.dot(a_ref[...], b_ref[...],
                          preferred_element_type=jnp.float32)
                  + shift_ref[...])


def _attn_final_kernel(x_ref, wa_ref, ba_ref, wf_ref, bf_ref, o_ref):
    # sigmoid(1x1 conv) attention gate fused with the final 1x1 projection.
    # wa is replicated into every lane, so attn is identical across lanes and
    # the gating is purely elementwise (no cross-lane traffic).
    x = x_ref[...]                                                  # bf16 [tm, Cp]
    logit = jnp.dot(x, wa_ref[...],
                    preferred_element_type=jnp.float32) + ba_ref[...]
    attn = jax.nn.sigmoid(logit)                                    # [tm, Cp]
    xa = (x.astype(jnp.float32) * attn).astype(jnp.bfloat16)
    o_ref[...] = (jnp.dot(xa, wf_ref[...],
                          preferred_element_type=jnp.float32)
                  + bf_ref[...])


def _make_convlstm_kernel(B, Hs, Ws, hid):
    """Fused ConvLSTM: grid over time, h/c live in VMEM scratch.

    The 3x3 conv over the recurrent state h is done as 9 shifted 2-D matmuls
    on a flat [M4, hid] buffer padded with P = Ws+1 zero rows on each side;
    spatial-wrap contributions are zeroed by a precomputed per-tap mask.
    The (x-conv + bias) part is precomputed outside for all timesteps.
    """
    M4 = B * Hs * Ws
    P = Ws + 1

    def kernel(xg_ref, wh_ref, mask_ref, h_out_ref, h_store_ref, c_ref):
        t = pl.program_id(0)

        @pl.when(t == 0)
        def _():
            h_store_ref[...] = jnp.zeros_like(h_store_ref)
            c_ref[...] = jnp.zeros_like(c_ref)

        g = xg_ref[0]                                  # [M4, 4*hid] f32 (bias included)
        for dh in range(3):
            for dw in range(3):
                tap = dh * 3 + dw
                off = (dh - 1) * Ws + (dw - 1)
                hs = h_store_ref[P + off:P + off + M4, :]     # [M4, hid]
                hs = hs * mask_ref[tap]                       # zero spatial wraps
                g = g + jnp.dot(hs, wh_ref[tap],
                                preferred_element_type=jnp.float32)

        i_g = jax.nn.sigmoid(g[:, 0:hid])
        f_g = jax.nn.sigmoid(g[:, hid:2 * hid])
        g_g = jnp.tanh(g[:, 2 * hid:3 * hid])
        o_g = jax.nn.sigmoid(g[:, 3 * hid:4 * hid])
        c_new = f_g * c_ref[...] + i_g * g_g
        h_new = o_g * jnp.tanh(c_new)

        c_ref[...] = c_new
        h_store_ref[P:P + M4, :] = h_new
        h_out_ref[...] = h_new                          # last step's value persists

    return kernel


# ----------------------------------------------------------------------------
# Pallas wrappers
# ----------------------------------------------------------------------------
def _mm_call(kernel, a, w_p, extras, n_valid, tm_max=512):
    """a: [M, K] f32 activations; w_p: [Kp, Np] bf16 pre-padded weight;
    extras: grid-invariant [1, Np] f32 rows (scale/shift/bias)."""
    M, K = a.shape
    Kp, Np = w_p.shape
    tm = min(tm_max, _round_up(M, 16))
    Mp = _round_up(M, tm)
    a_p = jnp.pad(a.astype(jnp.bfloat16), ((0, Mp - M), (0, Kp - K)))

    in_specs = ([pl.BlockSpec((tm, Kp), lambda i: (i, 0)),
                 pl.BlockSpec((Kp, Np), lambda i: (0, 0))]
                + [pl.BlockSpec((1, Np), lambda i: (0, 0)) for _ in extras])

    out = pl.pallas_call(
        kernel,
        out_shape=jax.ShapeDtypeStruct((Mp, Np), jnp.float32),
        grid_spec=pltpu.PrefetchScalarGridSpec(
            num_scalar_prefetch=0,
            grid=(Mp // tm,),
            in_specs=in_specs,
            out_specs=pl.BlockSpec((tm, Np), lambda i: (i, 0))),
        compiler_params=pltpu.CompilerParams(
            dimension_semantics=("parallel",)),
    )(a_p, w_p, *extras)
    return out[:M, :n_valid]


def mm_bn_lrelu(a, wp, n_valid):
    return _mm_call(_mm_bn_lrelu_kernel, a, wp['w'],
                    (wp['scale'], wp['shift']), n_valid)


def mm_bias(a, wp, n_valid):
    return _mm_call(_mm_bias_kernel, a, wp['w'], (wp['shift'],), n_valid)


def pallas_attn_final(x, wa_p, ba_p, wf_p, bf_p):
    """x: [M, C] f32 -> [M, 2] f32 (fused attention gate + final 1x1 conv)."""
    M, C = x.shape
    Cp = wa_p.shape[0]
    Np = wf_p.shape[1]
    tm = min(512, _round_up(M, 16))
    Mp = _round_up(M, tm)
    x_p = jnp.pad(x.astype(jnp.bfloat16), ((0, Mp - M), (0, Cp - C)))
    out = pl.pallas_call(
        _attn_final_kernel,
        out_shape=jax.ShapeDtypeStruct((Mp, Np), jnp.float32),
        grid_spec=pltpu.PrefetchScalarGridSpec(
            num_scalar_prefetch=0,
            grid=(Mp // tm,),
            in_specs=[pl.BlockSpec((tm, Cp), lambda i: (i, 0)),
                      pl.BlockSpec((Cp, Cp), lambda i: (0, 0)),
                      pl.BlockSpec((1, Cp), lambda i: (0, 0)),
                      pl.BlockSpec((Cp, Np), lambda i: (0, 0)),
                      pl.BlockSpec((1, Np), lambda i: (0, 0))],
            out_specs=pl.BlockSpec((tm, Np), lambda i: (i, 0))),
        compiler_params=pltpu.CompilerParams(
            dimension_semantics=("parallel",)),
    )(x_p, wa_p, ba_p, wf_p, bf_p)
    return out[:M, :2]


def _lstm_masks(B, Hs, Ws):
    """Per-tap validity masks for the flat [M4, hid] recurrent state."""
    M4 = B * Hs * Ws
    m = np.arange(M4)
    j = m % Ws
    i = (m // Ws) % Hs
    masks = np.zeros((9, M4, 1), np.float32)
    for dh in range(3):
        for dw in range(3):
            ii = i + dh - 1
            jj = j + dw - 1
            valid = (ii >= 0) & (ii < Hs) & (jj >= 0) & (jj < Ws)
            masks[dh * 3 + dw, :, 0] = valid.astype(np.float32)
    return jnp.asarray(masks)


def pallas_convlstm(xg, wh, masks, B, Hs, Ws, hid):
    """xg: [Te, M4, 4*hid] f32 (x-conv + bias), wh: [9, hid, 4*hid] f32.
    Returns h after the last time step: [M4, hid]."""
    Te, M4, hid4 = xg.shape
    P = Ws + 1
    kernel = _make_convlstm_kernel(B, Hs, Ws, hid)
    return pl.pallas_call(
        kernel,
        out_shape=jax.ShapeDtypeStruct((M4, hid), jnp.float32),
        grid_spec=pltpu.PrefetchScalarGridSpec(
            num_scalar_prefetch=0,
            grid=(Te,),
            in_specs=[pl.BlockSpec((1, M4, hid4), lambda t: (t, 0, 0)),
                      pl.BlockSpec((9, hid, hid4), lambda t: (0, 0, 0)),
                      pl.BlockSpec((9, M4, 1), lambda t: (0, 0, 0))],
            out_specs=pl.BlockSpec((M4, hid), lambda t: (0, 0)),
            scratch_shapes=[pltpu.VMEM((M4 + 2 * P, hid), jnp.float32),
                            pltpu.VMEM((M4, hid), jnp.float32)]),
        compiler_params=pltpu.CompilerParams(
            dimension_semantics=("arbitrary",)),
    )(xg, wh, masks)


# ----------------------------------------------------------------------------
# JAX glue: im2col, sub-pixel deconv, interpolation
# ----------------------------------------------------------------------------
def im2col3d(x, k, s, p):
    """x: [B, T, H, W, C] -> ([B, To, Ho, Wo, kd*kh*kw*C], (To, Ho, Wo))."""
    B, T, H, W, C = x.shape
    kd, kh, kw = k
    sd, sh, sw = s
    pd, ph, pw = p
    xp = jnp.pad(x, ((0, 0), (pd, pd), (ph, ph), (pw, pw), (0, 0)))
    To = (T + 2 * pd - kd) // sd + 1
    Ho = (H + 2 * ph - kh) // sh + 1
    Wo = (W + 2 * pw - kw) // sw + 1
    cols = []
    for dt in range(kd):
        for dh in range(kh):
            for dw in range(kw):
                cols.append(xp[:, dt:dt + To * sd:sd,
                               dh:dh + Ho * sh:sh,
                               dw:dw + Wo * sw:sw, :])
    patches = jnp.stack(cols, axis=4)            # [B, To, Ho, Wo, K, C]
    return patches.reshape(B, To, Ho, Wo, kd * kh * kw * C), (To, Ho, Wo)


def im2col2d(x, k, s, p):
    """x: [B, H, W, C] -> ([B, Ho, Wo, kh*kw*C], (Ho, Wo))."""
    B, H, W, C = x.shape
    kh, kw = k
    sh, sw = s
    ph, pw = p
    xp = jnp.pad(x, ((0, 0), (ph, ph), (pw, pw), (0, 0)))
    Ho = (H + 2 * ph - kh) // sh + 1
    Wo = (W + 2 * pw - kw) // sw + 1
    cols = []
    for dh in range(kh):
        for dw in range(kw):
            cols.append(xp[:, dh:dh + Ho * sh:sh, dw:dw + Wo * sw:sw, :])
    patches = jnp.stack(cols, axis=3)            # [B, Ho, Wo, K, C]
    return patches.reshape(B, Ho, Wo, kh * kw * C), (Ho, Wo)


def bilinear_upsample(x, out_h, out_w):
    """Trilinear with T_in=T_out=1 reduces to bilinear, align_corners=False."""
    B, Hi, Wi, C = x.shape

    def idx(in_size, out_size):
        o = jnp.arange(out_size, dtype=jnp.float32)
        src = jnp.clip((o + 0.5) * (in_size / out_size) - 0.5, 0.0, in_size - 1.0)
        i0 = jnp.floor(src).astype(jnp.int32)
        i1 = jnp.minimum(i0 + 1, in_size - 1)
        w1 = src - i0.astype(jnp.float32)
        return i0, i1, w1

    h0, h1, wh = idx(Hi, out_h)
    w0, w1i, ww = idx(Wi, out_w)
    xh = (x[:, h0, :, :] * (1.0 - wh)[None, :, None, None]
          + x[:, h1, :, :] * wh[None, :, None, None])
    xw = (xh[:, :, w0, :] * (1.0 - ww)[None, None, :, None]
          + xh[:, :, w1i, :] * ww[None, None, :, None])
    return xw


def conv_block3d(x, wp, cout):
    """Conv3d(k=3, stride=(1,2,2), pad=1) + BN(eval) + LeakyReLU(0.2) + Dropout(id)."""
    B = x.shape[0]
    patches, (To, Ho, Wo) = im2col3d(x, (3, 3, 3), (1, 2, 2), (1, 1, 1))
    y = mm_bn_lrelu(patches.reshape(B * To * Ho * Wo, -1), wp, n_valid=cout)
    return y.reshape(B, To, Ho, Wo, cout)


def deconv_block(x, wp, cout):
    """ConvTranspose3d(k=3, stride=(1,2,2), pad=1, out_pad=(0,1,1)) on a single
    time frame, via packed sub-pixel matmul (no zero dilation), + BN + LeakyReLU."""
    B, Hi, Wi, _ = x.shape
    xp = jnp.pad(x, ((0, 0), (0, 1), (0, 1), (0, 0)))
    shifts = [(0, 0), (0, 1), (1, 0), (1, 1)]
    patches = jnp.concatenate(
        [xp[:, dh:dh + Hi, dw:dw + Wi, :] for dh, dw in shifts], axis=-1)
    y = mm_bn_lrelu(patches.reshape(B * Hi * Wi, -1), wp, n_valid=4 * cout)
    y = y.reshape(B, Hi, Wi, 2, 2, cout)
    y = y.transpose(0, 1, 3, 2, 4, 5).reshape(B, 2 * Hi, 2 * Wi, cout)
    return y


# ----------------------------------------------------------------------------
# Parameter initialization (PyTorch layouts) and one-time preparation
# ----------------------------------------------------------------------------
def init_params(key, in_channels, base, hidden, lstm):
    keys = iter(jax.random.split(key, 32))

    def rnd(shape, s=0.1):
        return s * jax.random.normal(next(keys), shape, jnp.float32)

    def bn(c):
        return dict(gamma=jnp.ones((c,), jnp.float32)
                    + 0.05 * jax.random.normal(next(keys), (c,), jnp.float32),
                    beta=0.05 * jax.random.normal(next(keys), (c,), jnp.float32),
                    mean=jnp.zeros((c,), jnp.float32),
                    var=jnp.ones((c,), jnp.float32))

    p = {}
    p['enc1_w'] = rnd((base, in_channels, 3, 3, 3)); p['enc1_b'] = rnd((base,))
    p['enc1_bn'] = bn(base)
    p['enc2_w'] = rnd((2 * base, base, 3, 3, 3)); p['enc2_b'] = rnd((2 * base,))
    p['enc2_bn'] = bn(2 * base)
    p['lstm_w'] = rnd((4 * lstm, 2 * base + lstm, 3, 3)); p['lstm_b'] = rnd((4 * lstm,))
    p['dec1_w'] = rnd((lstm, hidden, 3, 3, 3)); p['dec1_b'] = rnd((hidden,))
    p['dec1_bn'] = bn(hidden)
    p['dec2_w'] = rnd((hidden + 2 * base, hidden // 2, 3, 3, 3)); p['dec2_b'] = rnd((hidden // 2,))
    p['dec2_bn'] = bn(hidden // 2)
    p['final_w'] = rnd((2, hidden // 2 + base, 1, 1, 1)); p['final_b'] = rnd((2,))
    p['attn_w'] = rnd((1, hidden // 2 + base, 1, 1, 1)); p['attn_b'] = rnd((1,))
    return p


def _prep_mm(wmat, scale, shift):
    """Pad a [K, N] weight to bf16 [Kp, Np]; scale/shift to f32 [1, Np]."""
    K, N = wmat.shape
    Kp = _round_up(K, 128)
    Np = _round_up(N, 128)
    d = {'w': jnp.pad(wmat.astype(jnp.bfloat16), ((0, Kp - K), (0, Np - N)))}
    if scale is not None:
        d['scale'] = jnp.pad(scale.astype(jnp.float32)[None, :],
                             ((0, 0), (0, Np - N)))
    d['shift'] = jnp.pad(shift.astype(jnp.float32)[None, :],
                         ((0, 0), (0, Np - N)))
    return d


def _deconv_pack_weight(w_t):
    """w_t: [Cin, Cout, 3, 3, 3] (ConvTranspose3d). Returns the [4*Cin, 4*Cout]
    packed sub-pixel weight for stride (1,2,2), pad 1, out_pad (0,1,1), T_in=1."""
    Cin, Cout = w_t.shape[0], w_t.shape[1]
    W2 = w_t[:, :, 1]                                   # middle temporal tap

    def tap(parity, shift):
        if parity == 0:
            return 1 if shift == 0 else None
        return 2 if shift == 0 else 0

    rows = []
    for dh in range(2):
        for dw in range(2):
            cols = []
            for r in range(2):
                for s in range(2):
                    kh, kw = tap(r, dh), tap(s, dw)
                    if kh is None or kw is None:
                        cols.append(jnp.zeros((Cin, Cout), jnp.float32))
                    else:
                        cols.append(W2[:, :, kh, kw])
            rows.append(jnp.concatenate(cols, axis=1))  # [Cin, 4*Cout]
    return jnp.concatenate(rows, axis=0)                # [4*Cin, 4*Cout]


def prepare_params(p):
    pp = {}

    def fold_bn(b, bn):
        scale = bn['gamma'] / jnp.sqrt(bn['var'] + 1e-5)
        shift = (b - bn['mean']) * scale + bn['beta']
        return scale, shift

    def prep_conv3d(w, b, bn):
        Cout, Cin = w.shape[0], w.shape[1]
        wmat = jnp.transpose(w, (2, 3, 4, 1, 0)).reshape(27 * Cin, Cout)
        scale, shift = fold_bn(b, bn)
        return _prep_mm(wmat, scale, shift)

    pp['enc1'] = prep_conv3d(p['enc1_w'], p['enc1_b'], p['enc1_bn'])
    pp['enc2'] = prep_conv3d(p['enc2_w'], p['enc2_b'], p['enc2_bn'])

    w = p['lstm_w']                                     # [4*hid, C_e2 + hid, 3, 3]
    hid4 = w.shape[0]
    hid = hid4 // 4
    cx = w.shape[1] - hid
    w_x = jnp.transpose(w[:, :cx], (2, 3, 1, 0)).reshape(9 * cx, hid4)
    pp['lstm_x'] = _prep_mm(w_x, None, p['lstm_b'])
    pp['lstm_wh'] = jnp.transpose(w[:, cx:], (2, 3, 1, 0)).reshape(
        9, hid, hid4).astype(jnp.float32)

    def prep_deconv(w_t, b, bn):
        wmat = _deconv_pack_weight(w_t)
        scale, shift = fold_bn(b, bn)
        return _prep_mm(wmat, jnp.tile(scale, 4), jnp.tile(shift, 4))

    pp['dec1'] = prep_deconv(p['dec1_w'], p['dec1_b'], p['dec1_bn'])
    pp['dec2'] = prep_deconv(p['dec2_w'], p['dec2_b'], p['dec2_bn'])

    c_cat = p['final_w'].shape[1]
    cp = _round_up(c_cat, 128)
    wa = jnp.zeros((cp,), jnp.float32).at[:c_cat].set(p['attn_w'].reshape(c_cat))
    pp['attn_wa'] = jnp.tile(wa[:, None], (1, cp)).astype(jnp.bfloat16)
    pp['attn_ba'] = jnp.full((1, cp), p['attn_b'][0], jnp.float32)
    wf = jnp.transpose(p['final_w'].reshape(2, c_cat))          # [c_cat, 2]
    pp['final_wf'] = jnp.zeros((cp, 128), jnp.bfloat16).at[:c_cat, :2].set(
        wf.astype(jnp.bfloat16))
    pp['final_bf'] = jnp.zeros((1, 128), jnp.float32).at[0, :2].set(p['final_b'])
    return pp


# ----------------------------------------------------------------------------
# Forward pass
# ----------------------------------------------------------------------------
def forward(pp, x, *, in_channels, seq_length, base, hidden, lstm):
    # --- input normalization (mirrors the PyTorch forward) ---
    if x.ndim == 4:
        x = x[:, None]
    elif x.ndim == 5:
        _, s1, _, _, s4 = x.shape
        if s1 == in_channels and s4 == seq_length:
            x = jnp.transpose(x, (0, 4, 1, 2, 3))
    B, T, C_in, H, W = x.shape
    xi = jnp.transpose(x, (0, 1, 3, 4, 2)).astype(jnp.float32)   # [B,T,H,W,C]

    # --- encoder (fused conv + BN + LeakyReLU) ---
    e1 = conv_block3d(xi, pp['enc1'], base)              # [B, T, H/2, W/2, base]
    e2 = conv_block3d(e1, pp['enc2'], 2 * base)          # [B, T, H/4, W/4, 2*base]

    # --- ConvLSTM bottleneck: precompute x-gates for all t, then one fused
    #     pallas_call with h/c resident in VMEM across the time grid ---
    _, Te, Hs, Ws, Ce2 = e2.shape
    hid = lstm
    e2f = e2.reshape(B * Te, Hs, Ws, Ce2)
    xpat, _ = im2col2d(e2f, (3, 3), (1, 1), (1, 1))
    xg = mm_bias(xpat.reshape(B * Te * Hs * Ws, -1), pp['lstm_x'], n_valid=4 * hid)
    xg = (xg.reshape(B, Te, Hs, Ws, 4 * hid)
            .transpose(1, 0, 2, 3, 4)
            .reshape(Te, B * Hs * Ws, 4 * hid))
    masks = _lstm_masks(B, Hs, Ws)
    h_last = pallas_convlstm(xg, pp['lstm_wh'], masks, B, Hs, Ws, hid)
    h_last = h_last.reshape(B, Hs, Ws, hid)

    # --- decoder (packed sub-pixel transposed conv, fused BN + LeakyReLU) ---
    d1 = deconv_block(h_last, pp['dec1'], hidden)                 # [B, H/2, W/2, hidden]
    skip2_up = bilinear_upsample(e2[:, -1], H // 2, W // 2)
    d1_cat = jnp.concatenate([d1, skip2_up], axis=-1)
    d2 = deconv_block(d1_cat, pp['dec2'], hidden // 2)            # [B, H, W, hidden//2]
    skip1_up = bilinear_upsample(e1[:, -1], H, W)
    d2_cat = jnp.concatenate([d2, skip1_up], axis=-1)

    # --- fused attention gate + final 1x1x1 conv ---
    out2 = pallas_attn_final(d2_cat.reshape(B * H * W, -1),
                             pp['attn_wa'], pp['attn_ba'],
                             pp['final_wf'], pp['final_bf'])
    return out2.reshape(B, H, W, 2).transpose(0, 3, 1, 2)         # [B, 2, H, W]


# ----------------------------------------------------------------------------
# Main
# ----------------------------------------------------------------------------
if __name__ == "__main__":
    key = jax.random.PRNGKey(0)
    B, T, C_in, H, W = 2, 4, 4, 16, 16
    base_channels, hidden_channels, lstm_channels = 8, 16, 16
    seq_length = 12

    pkey, xkey = jax.random.split(key)
    raw = init_params(pkey, C_in, base_channels, hidden_channels, lstm_channels)
    params = prepare_params(raw)                       # one-time weight prep
    x = jax.random.normal(xkey, (B, T, C_in, H, W), jnp.float32)

    fwd = jax.jit(functools.partial(
        forward, in_channels=C_in, seq_length=seq_length,
        base=base_channels, hidden=hidden_channels, lstm=lstm_channels))
    out = fwd(params, x)
    out = jax.block_until_ready(out)

    assert out.shape == (B, 2, H, W), out.shape
    assert bool(jnp.all(jnp.isfinite(out)))
    print("KERNEL_OK")
</pallas_src>

<mosaic_0001>
module attributes {stable_mosaic.version = 11 : i64} {
  func.func @_mm_bn_lrelu_kernel(%arg0: i32, %arg1: memref<512x128xbf16, #tpu.memory_space<vmem>>, %arg2: memref<128x128xbf16, #tpu.memory_space<vmem>>, %arg3: memref<1x128xf32, #tpu.memory_space<vmem>>, %arg4: memref<1x128xf32, #tpu.memory_space<vmem>>, %arg5: memref<512x128xf32, #tpu.memory_space<vmem>>) attributes {dimension_semantics = [#tpu.dimension_semantics<parallel>], iteration_bounds = array<i64: 1>, scalar_prefetch = 0 : i64, scratch_operands = 0 : i64, tpu.core_type = #tpu.core_type<tc>, window_params = [{transform_indices = @transform_0, window_bounds = array<i64: 512, 128>}, {pipeline_mode = #tpu.pipeline_mode<synchronous>, transform_indices = @transform_1, window_bounds = array<i64: 128, 128>}, {pipeline_mode = #tpu.pipeline_mode<synchronous>, transform_indices = @transform_2, window_bounds = array<i64: 1, 128>}, {pipeline_mode = #tpu.pipeline_mode<synchronous>, transform_indices = @transform_3, window_bounds = array<i64: 1, 128>}, {transform_indices = @transform_4, window_bounds = array<i64: 512, 128>}]} {
    %c0 = arith.constant 0 : index
    %c0_0 = arith.constant 0 : index
    %0 = vector.load %arg1[%c0, %c0_0] : memref<512x128xbf16, #tpu.memory_space<vmem>>, vector<512x128xbf16>
    %c0_1 = arith.constant 0 : index
    %c0_2 = arith.constant 0 : index
    %1 = vector.load %arg2[%c0_1, %c0_2] : memref<128x128xbf16, #tpu.memory_space<vmem>>, vector<128x128xbf16>
    %cst = arith.constant dense<0.000000e+00> : vector<512x128xf32>
    %2 = tpu.matmul %0, %1, %cst {dimension_numbers = #tpu.dot_dimension_numbers<[1], [0], [0], [1], [0, 0, 1, 1], [], []>} : vector<512x128xbf16>, vector<128x128xbf16>, vector<512x128xf32> -> vector<512x128xf32>
    %c0_3 = arith.constant 0 : index
    %c0_4 = arith.constant 0 : index
    %3 = vector.load %arg3[%c0_3, %c0_4] : memref<1x128xf32, #tpu.memory_space<vmem>>, vector<1x128xf32>
    %4 = vector.broadcast %3 : vector<1x128xf32> to vector<512x128xf32>
    %5 = arith.mulf %2, %4 : vector<512x128xf32>
    %c0_5 = arith.constant 0 : index
    %c0_6 = arith.constant 0 : index
    %6 = vector.load %arg4[%c0_5, %c0_6] : memref<1x128xf32, #tpu.memory_space<vmem>>, vector<1x128xf32>
    %7 = vector.broadcast %6 : vector<1x128xf32> to vector<512x128xf32>
    %8 = arith.addf %5, %7 : vector<512x128xf32>
    %cst_7 = arith.constant 0.000000e+00 : f32
    %9 = vector.broadcast %cst_7 : f32 to vector<512x128xf32>
    %10 = arith.cmpf ogt, %8, %9 : vector<512x128xf32>
    %cst_8 = arith.constant 2.000000e-01 : f32
    %11 = vector.broadcast %cst_8 : f32 to vector<512x128xf32>
    %12 = arith.mulf %11, %8 : vector<512x128xf32>
    %13 = arith.select %10, %8, %12 : vector<512x128xi1>, vector<512x128xf32>
    %c0_9 = arith.constant 0 : index
    %c0_10 = arith.constant 0 : index
    %14 = vector.load %arg5[%c0_9, %c0_10] : memref<512x128xf32, #tpu.memory_space<vmem>>, vector<512x128xf32>
    tpu.vector_store %arg5[%c0_9, %c0_10], %13 {strides = array<i32>} : memref<512x128xf32, #tpu.memory_space<vmem>>, vector<512x128xf32>,
    return
  }
  func.func @transform_0(%arg0: i32) -> (i32, i32) {
    %c0_i32 = arith.constant 0 : i32
    %c0_i32_0 = arith.constant 0 : i32
    return %arg0, %c0_i32 : i32, i32
  }
  func.func @transform_1(%arg0: i32) -> (i32, i32) {
    %c0_i32 = arith.constant 0 : i32
    %c0_i32_0 = arith.constant 0 : i32
    %c0_i32_1 = arith.constant 0 : i32
    return %c0_i32, %c0_i32_0 : i32, i32
  }
  func.func @transform_2(%arg0: i32) -> (i32, i32) {
    %c0_i32 = arith.constant 0 : i32
    %c0_i32_0 = arith.constant 0 : i32
    %c0_i32_1 = arith.constant 0 : i32
    return %c0_i32, %c0_i32_0 : i32, i32
  }
  func.func @transform_3(%arg0: i32) -> (i32, i32) {
    %c0_i32 = arith.constant 0 : i32
    %c0_i32_0 = arith.constant 0 : i32
    %c0_i32_1 = arith.constant 0 : i32
    return %c0_i32, %c0_i32_0 : i32, i32
  }
  func.func @transform_4(%arg0: i32) -> (i32, i32) {
    %c0_i32 = arith.constant 0 : i32
    %c0_i32_0 = arith.constant 0 : i32
    return %arg0, %c0_i32 : i32, i32
  }
}

module attributes {stable_mosaic.version = 11 : i64} {
  func.func @_mm_bn_lrelu_kernel(%arg0: i32, %arg1: memref<128x256xbf16, #tpu.memory_space<vmem>>, %arg2: memref<256x128xbf16, #tpu.memory_space<vmem>>, %arg3: memref<1x128xf32, #tpu.memory_space<vmem>>, %arg4: memref<1x128xf32, #tpu.memory_space<vmem>>, %arg5: memref<128x128xf32, #tpu.memory_space<vmem>>) attributes {dimension_semantics = [#tpu.dimension_semantics<parallel>], iteration_bounds = array<i64: 1>, scalar_prefetch = 0 : i64, scratch_operands = 0 : i64, tpu.core_type = #tpu.core_type<tc>, window_params = [{transform_indices = @transform_0, window_bounds = array<i64: 128, 256>}, {pipeline_mode = #tpu.pipeline_mode<synchronous>, transform_indices = @transform_1, window_bounds = array<i64: 256, 128>}, {pipeline_mode = #tpu.pipeline_mode<synchronous>, transform_indices = @transform_2, window_bounds = array<i64: 1, 128>}, {pipeline_mode = #tpu.pipeline_mode<synchronous>, transform_indices = @transform_3, window_bounds = array<i64: 1, 128>}, {transform_indices = @transform_4, window_bounds = array<i64: 128, 128>}]} {
    %c0 = arith.constant 0 : index
    %c0_0 = arith.constant 0 : index
    %0 = vector.load %arg1[%c0, %c0_0] : memref<128x256xbf16, #tpu.memory_space<vmem>>, vector<128x256xbf16>
    %c0_1 = arith.constant 0 : index
    %c0_2 = arith.constant 0 : index
    %1 = vector.load %arg2[%c0_1, %c0_2] : memref<256x128xbf16, #tpu.memory_space<vmem>>, vector<256x128xbf16>
    %cst = arith.constant dense<0.000000e+00> : vector<128x128xf32>
    %2 = tpu.matmul %0, %1, %cst {dimension_numbers = #tpu.dot_dimension_numbers<[1], [0], [0], [1], [0, 0, 1, 1], [], []>} : vector<128x256xbf16>, vector<256x128xbf16>, vector<128x128xf32> -> vector<128x128xf32>
    %c0_3 = arith.constant 0 : index
    %c0_4 = arith.constant 0 : index
    %3 = vector.load %arg3[%c0_3, %c0_4] : memref<1x128xf32, #tpu.memory_space<vmem>>, vector<1x128xf32>
    %4 = vector.broadcast %3 : vector<1x128xf32> to vector<128x128xf32>
    %5 = arith.mulf %2, %4 : vector<128x128xf32>
    %c0_5 = arith.constant 0 : index
    %c0_6 = arith.constant 0 : index
    %6 = vector.load %arg4[%c0_5, %c0_6] : memref<1x128xf32, #tpu.memory_space<vmem>>, vector<1x128xf32>
    %7 = vector.broadcast %6 : vector<1x128xf32> to vector<128x128xf32>
    %8 = arith.addf %5, %7 : vector<128x128xf32>
    %cst_7 = arith.constant 0.000000e+00 : f32
    %9 = vector.broadcast %cst_7 : f32 to vector<128x128xf32>
    %10 = arith.cmpf ogt, %8, %9 : vector<128x128xf32>
    %cst_8 = arith.constant 2.000000e-01 : f32
    %11 = vector.broadcast %cst_8 : f32 to vector<128x128xf32>
    %12 = arith.mulf %11, %8 : vector<128x128xf32>
    %13 = arith.select %10, %8, %12 : vector<128x128xi1>, vector<128x128xf32>
    %c0_9 = arith.constant 0 : index
    %c0_10 = arith.constant 0 : index
    %14 = vector.load %arg5[%c0_9, %c0_10] : memref<128x128xf32, #tpu.memory_space<vmem>>, vector<128x128xf32>
    tpu.vector_store %arg5[%c0_9, %c0_10], %13 {strides = array<i32>} : memref<128x128xf32, #tpu.memory_space<vmem>>, vector<128x128xf32>,
    return
  }
  func.func @transform_0(%arg0: i32) -> (i32, i32) {
    %c0_i32 = arith.constant 0 : i32
    %c0_i32_0 = arith.constant 0 : i32
    return %arg0, %c0_i32 : i32, i32
  }
  func.func @transform_1(%arg0: i32) -> (i32, i32) {
    %c0_i32 = arith.constant 0 : i32
    %c0_i32_0 = arith.constant 0 : i32
    %c0_i32_1 = arith.constant 0 : i32
    return %c0_i32, %c0_i32_0 : i32, i32
  }
  func.func @transform_2(%arg0: i32) -> (i32, i32) {
    %c0_i32 = arith.constant 0 : i32
    %c0_i32_0 = arith.constant 0 : i32
    %c0_i32_1 = arith.constant 0 : i32
    return %c0_i32, %c0_i32_0 : i32, i32
  }
  func.func @transform_3(%arg0: i32) -> (i32, i32) {
    %c0_i32 = arith.constant 0 : i32
    %c0_i32_0 = arith.constant 0 : i32
    %c0_i32_1 = arith.constant 0 : i32
    return %c0_i32, %c0_i32_0 : i32, i32
  }
  func.func @transform_4(%arg0: i32) -> (i32, i32) {
    %c0_i32 = arith.constant 0 : i32
    %c0_i32_0 = arith.constant 0 : i32
    return %arg0, %c0_i32 : i32, i32
  }
}

module attributes {stable_mosaic.version = 11 : i64} {
  func.func @_mm_bias_kernel(%arg0: i32, %arg1: memref<128x256xbf16, #tpu.memory_space<vmem>>, %arg2: memref<256x128xbf16, #tpu.memory_space<vmem>>, %arg3: memref<1x128xf32, #tpu.memory_space<vmem>>, %arg4: memref<128x128xf32, #tpu.memory_space<vmem>>) attributes {dimension_semantics = [#tpu.dimension_semantics<parallel>], iteration_bounds = array<i64: 1>, scalar_prefetch = 0 : i64, scratch_operands = 0 : i64, tpu.core_type = #tpu.core_type<tc>, window_params = [{transform_indices = @transform_0, window_bounds = array<i64: 128, 256>}, {pipeline_mode = #tpu.pipeline_mode<synchronous>, transform_indices = @transform_1, window_bounds = array<i64: 256, 128>}, {pipeline_mode = #tpu.pipeline_mode<synchronous>, transform_indices = @transform_2, window_bounds = array<i64: 1, 128>}, {transform_indices = @transform_3, window_bounds = array<i64: 128, 128>}]} {
    %c0 = arith.constant 0 : index
    %c0_0 = arith.constant 0 : index
    %0 = vector.load %arg1[%c0, %c0_0] : memref<128x256xbf16, #tpu.memory_space<vmem>>, vector<128x256xbf16>
    %c0_1 = arith.constant 0 : index
    %c0_2 = arith.constant 0 : index
    %1 = vector.load %arg2[%c0_1, %c0_2] : memref<256x128xbf16, #tpu.memory_space<vmem>>, vector<256x128xbf16>
    %cst = arith.constant dense<0.000000e+00> : vector<128x128xf32>
    %2 = tpu.matmul %0, %1, %cst {dimension_numbers = #tpu.dot_dimension_numbers<[1], [0], [0], [1], [0, 0, 1, 1], [], []>} : vector<128x256xbf16>, vector<256x128xbf16>, vector<128x128xf32> -> vector<128x128xf32>
    %c0_3 = arith.constant 0 : index
    %c0_4 = arith.constant 0 : index
    %3 = vector.load %arg3[%c0_3, %c0_4] : memref<1x128xf32, #tpu.memory_space<vmem>>, vector<1x128xf32>
    %4 = vector.broadcast %3 : vector<1x128xf32> to vector<128x128xf32>
    %5 = arith.addf %2, %4 : vector<128x128xf32>
    %c0_5 = arith.constant 0 : index
    %c0_6 = arith.constant 0 : index
    %6 = vector.load %arg4[%c0_5, %c0_6] : memref<128x128xf32, #tpu.memory_space<vmem>>, vector<128x128xf32>
    tpu.vector_store %arg4[%c0_5, %c0_6], %5 {strides = array<i32>} : memref<128x128xf32, #tpu.memory_space<vmem>>, vector<128x128xf32>,
    return
  }
  func.func @transform_0(%arg0: i32) -> (i32, i32) {
    %c0_i32 = arith.constant 0 : i32
    %c0_i32_0 = arith.constant 0 : i32
    return %arg0, %c0_i32 : i32, i32
  }
  func.func @transform_1(%arg0: i32) -> (i32, i32) {
    %c0_i32 = arith.constant 0 : i32
    %c0_i32_0 = arith.constant 0 : i32
    %c0_i32_1 = arith.constant 0 : i32
    return %c0_i32, %c0_i32_0 : i32, i32
  }
  func.func @transform_2(%arg0: i32) -> (i32, i32) {
    %c0_i32 = arith.constant 0 : i32
    %c0_i32_0 = arith.constant 0 : i32
    %c0_i32_1 = arith.constant 0 : i32
    return %c0_i32, %c0_i32_0 : i32, i32
  }
  func.func @transform_3(%arg0: i32) -> (i32, i32) {
    %c0_i32 = arith.constant 0 : i32
    %c0_i32_0 = arith.constant 0 : i32
    return %arg0, %c0_i32 : i32, i32
  }
}

module attributes {stable_mosaic.version = 11 : i64} {
  func.func @kernel(%arg0: i32, %arg1: memref<1x32x64xf32, #tpu.memory_space<vmem>>, %arg2: memref<9x16x64xf32, #tpu.memory_space<vmem>>, %arg3: memref<9x32x1xf32, #tpu.memory_space<vmem>>, %arg4: memref<32x16xf32, #tpu.memory_space<vmem>>, %arg5: memref<42x16xf32, #tpu.memory_space<vmem>>, %arg6: memref<32x16xf32, #tpu.memory_space<vmem>>) attributes {dimension_semantics = [#tpu.dimension_semantics<arbitrary>], iteration_bounds = array<i64: 4>, scalar_prefetch = 0 : i64, scratch_operands = 2 : i64, tpu.core_type = #tpu.core_type<tc>, window_params = [{transform_indices = @transform_0, window_bounds = array<i64: 1, 32, 64>}, {pipeline_mode = #tpu.pipeline_mode<synchronous>, transform_indices = @transform_1, window_bounds = array<i64: 9, 16, 64>}, {pipeline_mode = #tpu.pipeline_mode<synchronous>, transform_indices = @transform_2, window_bounds = array<i64: 9, 32, 1>}, {pipeline_mode = #tpu.pipeline_mode<synchronous>, transform_indices = @transform_3, window_bounds = array<i64: 32, 16>}]} {
    %c0_i32 = arith.constant 0 : i32
    %0 = arith.cmpi eq, %arg0, %c0_i32 : i32
    %1 = arith.extui %0 : i1 to i32
    %c0_i32_0 = arith.constant 0 : i32
    %2 = arith.cmpi ne, %1, %c0_i32_0 : i32
    scf.if %2 {
      %cst_84 = arith.constant 0.000000e+00 : f32
      %115 = vector.broadcast %cst_84 : f32 to vector<42x16xf32>
      %c0_85 = arith.constant 0 : index
      %c0_86 = arith.constant 0 : index
      %116 = vector.load %arg5[%c0_85, %c0_86] : memref<42x16xf32, #tpu.memory_space<vmem>>, vector<42x16xf32>
      tpu.vector_store %arg5[%c0_85, %c0_86], %115 {strides = array<i32>} : memref<42x16xf32, #tpu.memory_space<vmem>>, vector<42x16xf32>,
      %cst_87 = arith.constant 0.000000e+00 : f32
      %117 = vector.broadcast %cst_87 : f32 to vector<32x16xf32>
      %c0_88 = arith.constant 0 : index
      %c0_89 = arith.constant 0 : index
      %118 = vector.load %arg6[%c0_88, %c0_89] : memref<32x16xf32, #tpu.memory_space<vmem>>, vector<32x16xf32>
      tpu.vector_store %arg6[%c0_88, %c0_89], %117 {strides = array<i32>} : memref<32x16xf32, #tpu.memory_space<vmem>>, vector<32x16xf32>,
    } else {
    }
    %c0 = arith.constant 0 : index
    %c0_1 = arith.constant 0 : index
    %c0_2 = arith.constant 0 : index
    %3 = vector.load %arg1[%c0, %c0_1, %c0_2] : memref<1x32x64xf32, #tpu.memory_space<vmem>>, vector<1x32x64xf32>
    %4 = vector.shape_cast %3 : vector<1x32x64xf32> to vector<32x64xf32>
    %c0_3 = arith.constant 0 : index
    %c0_4 = arith.constant 0 : index
    %5 = vector.load %arg5[%c0_3, %c0_4] : memref<42x16xf32, #tpu.memory_space<vmem>>, vector<32x16xf32>
    %c0_5 = arith.constant 0 : index
    %c0_6 = arith.constant 0 : index
    %c0_7 = arith.constant 0 : index
    %6 = vector.load %arg3[%c0_5, %c0_6, %c0_7] : memref<9x32x1xf32, #tpu.memory_space<vmem>>, vector<1x32x1xf32>
    %7 = vector.shape_cast %6 : vector<1x32x1xf32> to vector<32x1xf32>
    %8 = vector.broadcast %7 : vector<32x1xf32> to vector<32x16xf32>
    %9 = arith.mulf %5, %8 : vector<32x16xf32>
    %c0_8 = arith.constant 0 : index
    %c0_9 = arith.constant 0 : index
    %c0_10 = arith.constant 0 : index
    %10 = vector.load %arg2[%c0_8, %c0_9, %c0_10] : memref<9x16x64xf32, #tpu.memory_space<vmem>>, vector<1x16x64xf32>
    %11 = vector.shape_cast %10 : vector<1x16x64xf32> to vector<16x64xf32>
    %cst = arith.constant dense<0.000000e+00> : vector<32x64xf32>
    %12 = tpu.matmul %9, %11, %cst {dimension_numbers = #tpu.dot_dimension_numbers<[1], [0], [0], [1], [0, 0, 1, 1], [], []>} : vector<32x16xf32>, vector<16x64xf32>, vector<32x64xf32> -> vector<32x64xf32>
    %13 = arith.addf %4, %12 : vector<32x64xf32>
    %c1 = arith.constant 1 : index
    %c0_11 = arith.constant 0 : index
    %14 = vector.load %arg5[%c1, %c0_11] : memref<42x16xf32, #tpu.memory_space<vmem>>, vector<32x16xf32>
    %c1_12 = arith.constant 1 : index
    %c0_13 = arith.constant 0 : index
    %c0_14 = arith.constant 0 : index
    %15 = vector.load %arg3[%c1_12, %c0_13, %c0_14] : memref<9x32x1xf32, #tpu.memory_space<vmem>>, vector<1x32x1xf32>
    %16 = vector.shape_cast %15 : vector<1x32x1xf32> to vector<32x1xf32>
    %17 = vector.broadcast %16 : vector<32x1xf32> to vector<32x16xf32>
    %18 = arith.mulf %14, %17 : vector<32x16xf32>
    %c1_15 = arith.constant 1 : index
    %c0_16 = arith.constant 0 : index
    %c0_17 = arith.constant 0 : index
    %19 = vector.load %arg2[%c1_15, %c0_16, %c0_17] : memref<9x16x64xf32, #tpu.memory_space<vmem>>, vector<1x16x64xf32>
    %20 = vector.shape_cast %19 : vector<1x16x64xf32> to vector<16x64xf32>
    %cst_18 = arith.constant dense<0.000000e+00> : vector<32x64xf32>
    %21 = tpu.matmul %18, %20, %cst_18 {dimension_numbers = #tpu.dot_dimension_numbers<[1], [0], [0], [1], [0, 0, 1, 1], [], []>} : vector<32x16xf32>, vector<16x64xf32>, vector<32x64xf32> -> vector<32x64xf32>
    %22 = arith.addf %13, %21 : vector<32x64xf32>
    %c2 = arith.constant 2 : index
    %c0_19 = arith.constant 0 : index
    %23 = vector.load %arg5[%c2, %c0_19] : memref<42x16xf32, #tpu.memory_space<vmem>>, vector<32x16xf32>
    %c2_20 = arith.constant 2 : index
    %c0_21 = arith.constant 0 : index
    %c0_22 = arith.constant 0 : index
    %24 = vector.load %arg3[%c2_20, %c0_21, %c0_22] : memref<9x32x1xf32, #tpu.memory_space<vmem>>, vector<1x32x1xf32>
    %25 = vector.shape_cast %24 : vector<1x32x1xf32> to vector<32x1xf32>
    %26 = vector.broadcast %25 : vector<32x1xf32> to vector<32x16xf32>
    %27 = arith.mulf %23, %26 : vector<32x16xf32>
    %c2_23 = arith.constant 2 : index
    %c0_24 = arith.constant 0 : index
    %c0_25 = arith.constant 0 : index
    %28 = vector.load %arg2[%c2_23, %c0_24, %c0_25] : memref<9x16x64xf32, #tpu.memory_space<vmem>>, vector<1x16x64xf32>
    %29 = vector.shape_cast %28 : vector<1x16x64xf32> to vector<16x64xf32>
    %cst_26 = arith.constant dense<0.000000e+00> : vector<32x64xf32>
    %30 = tpu.matmul %27, %29, %cst_26 {dimension_numbers = #tpu.dot_dimension_numbers<[1], [0], [0], [1], [0, 0, 1, 1], [], []>} : vector<32x16xf32>, vector<16x64xf32>, vector<32x64xf32> -> vector<32x64xf32>
    %31 = arith.addf %22, %30 : vector<32x64xf32>
    %c4 = arith.constant 4 : index
    %c0_27 = arith.constant 0 : index
    %32 = vector.load %arg5[%c4, %c0_27] : memref<42x16xf32, #tpu.memory_space<vmem>>, vector<32x16xf32>
    %c3 = arith.constant 3 : index
    %c0_28 = arith.constant 0 : index
    %c0_29 = arith.constant 0 : index
    %33 = vector.load %arg3[%c3, %c0_28, %c0_29] : memref<9x32x1xf32, #tpu.memory_space<vmem>>, vector<1x32x1xf32>
    %34 = vector.shape_cast %33 : vector<1x32x1xf32> to vector<32x1xf32>
    %35 = vector.broadcast %34 : vector<32x1xf32> to vector<32x16xf32>
    %36 = arith.mulf %32, %35 : vector<32x16xf32>
    %c3_30 = arith.constant 3 : index
    %c0_31 = arith.constant 0 : index
    %c0_32 = arith.constant 0 : index
    %37 = vector.load %arg2[%c3_30, %c0_31, %c0_32] : memref<9x16x64xf32, #tpu.memory_space<vmem>>, vector<1x16x64xf32>
    %38 = vector.shape_cast %37 : vector<1x16x64xf32> to vector<16x64xf32>
    %cst_33 = arith.constant dense<0.000000e+00> : vector<32x64xf32>
    %39 = tpu.matmul %36, %38, %cst_33 {dimension_numbers = #tpu.dot_dimension_numbers<[1], [0], [0], [1], [0, 0, 1, 1], [], []>} : vector<32x16xf32>, vector<16x64xf32>, vector<32x64xf32> -> vector<32x64xf32>
    %40 = arith.addf %31, %39 : vector<32x64xf32>
    %c5 = arith.constant 5 : index
    %c0_34 = arith.constant 0 : index
    %41 = vector.load %arg5[%c5, %c0_34] : memref<42x16xf32, #tpu.memory_space<vmem>>, vector<32x16xf32>
    %c4_35 = arith.constant 4 : index
    %c0_36 = arith.constant 0 : index
    %c0_37 = arith.constant 0 : index
    %42 = vector.load %arg3[%c4_35, %c0_36, %c0_37] : memref<9x32x1xf32, #tpu.memory_space<vmem>>, vector<1x32x1xf32>
    %43 = vector.shape_cast %42 : vector<1x32x1xf32> to vector<32x1xf32>
    %44 = vector.broadcast %43 : vector<32x1xf32> to vector<32x16xf32>
    %45 = arith.mulf %41, %44 : vector<32x16xf32>
    %c4_38 = arith.constant 4 : index
    %c0_39 = arith.constant 0 : index
    %c0_40 = arith.constant 0 : index
    %46 = vector.load %arg2[%c4_38, %c0_39, %c0_40] : memref<9x16x64xf32, #tpu.memory_space<vmem>>, vector<1x16x64xf32>
    %47 = vector.shape_cast %46 : vector<1x16x64xf32> to vector<16x64xf32>
    %cst_41 = arith.constant dense<0.000000e+00> : vector<32x64xf32>
    %48 = tpu.matmul %45, %47, %cst_41 {dimension_numbers = #tpu.dot_dimension_numbers<[1], [0], [0], [1], [0, 0, 1, 1], [], []>} : vector<32x16xf32>, vector<16x64xf32>, vector<32x64xf32> -> vector<32x64xf32>
    %49 = arith.addf %40, %48 : vector<32x64xf32>
    %c6 = arith.constant 6 : index
    %c0_42 = arith.constant 0 : index
    %50 = vector.load %arg5[%c6, %c0_42] : memref<42x16xf32, #tpu.memory_space<vmem>>, vector<32x16xf32>
    %c5_43 = arith.constant 5 : index
    %c0_44 = arith.constant 0 : index
    %c0_45 = arith.constant 0 : index
    %51 = vector.load %arg3[%c5_43, %c0_44, %c0_45] : memref<9x32x1xf32, #tpu.memory_space<vmem>>, vector<1x32x1xf32>
    %52 = vector.shape_cast %51 : vector<1x32x1xf32> to vector<32x1xf32>
    %53 = vector.broadcast %52 : vector<32x1xf32> to vector<32x16xf32>
    %54 = arith.mulf %50, %53 : vector<32x16xf32>
    %c5_46 = arith.constant 5 : index
    %c0_47 = arith.constant 0 : index
    %c0_48 = arith.constant 0 : index
    %55 = vector.load %arg2[%c5_46, %c0_47, %c0_48] : memref<9x16x64xf32, #tpu.memory_space<vmem>>, vector<1x16x64xf32>
    %56 = vector.shape_cast %55 : vector<1x16x64xf32> to vector<16x64xf32>
    %cst_49 = arith.constant dense<0.000000e+00> : vector<32x64xf32>
    %57 = tpu.matmul %54, %56, %cst_49 {dimension_numbers = #tpu.dot_dimension_numbers<[1], [0], [0], [1], [0, 0, 1, 1], [], []>} : vector<32x16xf32>, vector<16x64xf32>, vector<32x64xf32> -> vector<32x64xf32>
    %58 = arith.addf %49, %57 : vector<32x64xf32>
    %c8 = arith.constant 8 : index
    %c0_50 = arith.constant 0 : index
    %59 = vector.load %arg5[%c8, %c0_50] : memref<42x16xf32, #tpu.memory_space<vmem>>, vector<32x16xf32>
    %c6_51 = arith.constant 6 : index
    %c0_52 = arith.constant 0 : index
    %c0_53 = arith.constant 0 : index
    %60 = vector.load %arg3[%c6_51, %c0_52, %c0_53] : memref<9x32x1xf32, #tpu.memory_space<vmem>>, vector<1x32x1xf32>
    %61 = vector.shape_cast %60 : vector<1x32x1xf32> to vector<32x1xf32>
    %62 = vector.broadcast %61 : vector<32x1xf32> to vector<32x16xf32>
    %63 = arith.mulf %59, %62 : vector<32x16xf32>
    %c6_54 = arith.constant 6 : index
    %c0_55 = arith.constant 0 : index
    %c0_56 = arith.constant 0 : index
    %64 = vector.load %arg2[%c6_54, %c0_55, %c0_56] : memref<9x16x64xf32, #tpu.memory_space<vmem>>, vector<1x16x64xf32>
    %65 = vector.shape_cast %64 : vector<1x16x64xf32> to vector<16x64xf32>
    %cst_57 = arith.constant dense<0.000000e+00> : vector<32x64xf32>
    %66 = tpu.matmul %63, %65, %cst_57 {dimension_numbers = #tpu.dot_dimension_numbers<[1], [0], [0], [1], [0, 0, 1, 1], [], []>} : vector<32x16xf32>, vector<16x64xf32>, vector<32x64xf32> -> vector<32x64xf32>
    %67 = arith.addf %58, %66 : vector<32x64xf32>
    %c9 = arith.constant 9 : index
    %c0_58 = arith.constant 0 : index
    %68 = vector.load %arg5[%c9, %c0_58] : memref<42x16xf32, #tpu.memory_space<vmem>>, vector<32x16xf32>
    %c7 = arith.constant 7 : index
    %c0_59 = arith.constant 0 : index
    %c0_60 = arith.constant 0 : index
    %69 = vector.load %arg3[%c7, %c0_59, %c0_60] : memref<9x32x1xf32, #tpu.memory_space<vmem>>, vector<1x32x1xf32>
    %70 = vector.shape_cast %69 : vector<1x32x1xf32> to vector<32x1xf32>
    %71 = vector.broadcast %70 : vector<32x1xf32> to vector<32x16xf32>
    %72 = arith.mulf %68, %71 : vector<32x16xf32>
    %c7_61 = arith.constant 7 : index
    %c0_62 = arith.constant 0 : index
    %c0_63 = arith.constant 0 : index
    %73 = vector.load %arg2[%c7_61, %c0_62, %c0_63] : memref<9x16x64xf32, #tpu.memory_space<vmem>>, vector<1x16x64xf32>
    %74 = vector.shape_cast %73 : vector<1x16x64xf32> to vector<16x64xf32>
    %cst_64 = arith.constant dense<0.000000e+00> : vector<32x64xf32>
    %75 = tpu.matmul %72, %74, %cst_64 {dimension_numbers = #tpu.dot_dimension_numbers<[1], [0], [0], [1], [0, 0, 1, 1], [], []>} : vector<32x16xf32>, vector<16x64xf32>, vector<32x64xf32> -> vector<32x64xf32>
    %76 = arith.addf %67, %75 : vector<32x64xf32>
    %c10 = arith.constant 10 : index
    %c0_65 = arith.constant 0 : index
    %77 = vector.load %arg5[%c10, %c0_65] : memref<42x16xf32, #tpu.memory_space<vmem>>, vector<32x16xf32>
    %c8_66 = arith.constant 8 : index
    %c0_67 = arith.constant 0 : index
    %c0_68 = arith.constant 0 : index
    %78 = vector.load %arg3[%c8_66, %c0_67, %c0_68] : memref<9x32x1xf32, #tpu.memory_space<vmem>>, vector<1x32x1xf32>
    %79 = vector.shape_cast %78 : vector<1x32x1xf32> to vector<32x1xf32>
    %80 = vector.broadcast %79 : vector<32x1xf32> to vector<32x16xf32>
    %81 = arith.mulf %77, %80 : vector<32x16xf32>
    %c8_69 = arith.constant 8 : index
    %c0_70 = arith.constant 0 : index
    %c0_71 = arith.constant 0 : index
    %82 = vector.load %arg2[%c8_69, %c0_70, %c0_71] : memref<9x16x64xf32, #tpu.memory_space<vmem>>, vector<1x16x64xf32>
    %83 = vector.shape_cast %82 : vector<1x16x64xf32> to vector<16x64xf32>
    %cst_72 = arith.constant dense<0.000000e+00> : vector<32x64xf32>
    %84 = tpu.matmul %81, %83, %cst_72 {dimension_numbers = #tpu.dot_dimension_numbers<[1], [0], [0], [1], [0, 0, 1, 1], [], []>} : vector<32x16xf32>, vector<16x64xf32>, vector<32x64xf32> -> vector<32x64xf32>
    %85 = arith.addf %76, %84 : vector<32x64xf32>
    %86 = vector.extract_strided_slice %85 {offsets = [0, 0], sizes = [32, 16], strides = [1, 1]} : vector<32x64xf32> to vector<32x16xf32>
    %87 = arith.negf %86 : vector<32x16xf32>
    %88 = math.exp %87 : vector<32x16xf32>
    %cst_73 = arith.constant 1.000000e+00 : f32
    %89 = vector.broadcast %cst_73 : f32 to vector<32x16xf32>
    %90 = arith.addf %89, %88 : vector<32x16xf32>
    %91 = arith.divf %89, %90 : vector<32x16xf32>
    %92 = vector.extract_strided_slice %85 {offsets = [0, 16], sizes = [32, 16], strides = [1, 1]} : vector<32x64xf32> to vector<32x16xf32>
    %93 = arith.negf %92 : vector<32x16xf32>
    %94 = math.exp %93 : vector<32x16xf32>
    %cst_74 = arith.constant 1.000000e+00 : f32
    %95 = vector.broadcast %cst_74 : f32 to vector<32x16xf32>
    %96 = arith.addf %95, %94 : vector<32x16xf32>
    %97 = arith.divf %95, %96 : vector<32x16xf32>
    %98 = vector.extract_strided_slice %85 {offsets = [0, 32], sizes = [32, 16], strides = [1, 1]} : vector<32x64xf32> to vector<32x16xf32>
    %99 = math.tanh %98 : vector<32x16xf32>
    %100 = vector.extract_strided_slice %85 {offsets = [0, 48], sizes = [32, 16], strides = [1, 1]} : vector<32x64xf32> to vector<32x16xf32>
    %101 = arith.negf %100 : vector<32x16xf32>
    %102 = math.exp %101 : vector<32x16xf32>
    %cst_75 = arith.constant 1.000000e+00 : f32
    %103 = vector.broadcast %cst_75 : f32 to vector<32x16xf32>
    %104 = arith.addf %103, %102 : vector<32x16xf32>
    %105 = arith.divf %103, %104 : vector<32x16xf32>
    %c0_76 = arith.constant 0 : index
    %c0_77 = arith.constant 0 : index
    %106 = vector.load %arg6[%c0_76, %c0_77] : memref<32x16xf32, #tpu.memory_space<vmem>>, vector<32x16xf32>
    %107 = arith.mulf %97, %106 : vector<32x16xf32>
    %108 = arith.mulf %91, %99 : vector<32x16xf32>
    %109 = arith.addf %107, %108 : vector<32x16xf32>
    %110 = math.tanh %109 : vector<32x16xf32>
    %111 = arith.mulf %105, %110 : vector<32x16xf32>
    %c0_78 = arith.constant 0 : index
    %c0_79 = arith.constant 0 : index
    %112 = vector.load %arg6[%c0_78, %c0_79] : memref<32x16xf32, #tpu.memory_space<vmem>>, vector<32x16xf32>
    tpu.vector_store %arg6[%c0_78, %c0_79], %109 {strides = array<i32>} : memref<32x16xf32, #tpu.memory_space<vmem>>, vector<32x16xf32>,
    %c5_80 = arith.constant 5 : index
    %c0_81 = arith.constant 0 : index
    %113 = vector.load %arg5[%c5_80, %c0_81] : memref<42x16xf32, #tpu.memory_space<vmem>>, vector<32x16xf32>
    tpu.vector_store %arg5[%c5_80, %c0_81], %111 {strides = array<i32>} : memref<42x16xf32, #tpu.memory_space<vmem>>, vector<32x16xf32>,
    %c0_82 = arith.constant 0 : index
    %c0_83 = arith.constant 0 : index
    %114 = vector.load %arg4[%c0_82, %c0_83] : memref<32x16xf32, #tpu.memory_space<vmem>>, vector<32x16xf32>
    tpu.vector_store %arg4[%c0_82, %c0_83], %111 {strides = array<i32>} : memref<32x16xf32, #tpu.memory_space<vmem>>, vector<32x16xf32>,
    return
  }
  func.func @transform_0(%arg0: i32) -> (i32, i32, i32) {
    %c0_i32 = arith.constant 0 : i32
    %c0_i32_0 = arith.constant 0 : i32
    %c0_i32_1 = arith.constant 0 : i32
    return %arg0, %c0_i32, %c0_i32_0 : i32, i32, i32
  }
  func.func @transform_1(%arg0: i32) -> (i32, i32, i32) {
    %c0_i32 = arith.constant 0 : i32
    %c0_i32_0 = arith.constant 0 : i32
    %c0_i32_1 = arith.constant 0 : i32
    %c0_i32_2 = arith.constant 0 : i32
    return %c0_i32, %c0_i32_0, %c0_i32_1 : i32, i32, i32
  }
  func.func @transform_2(%arg0: i32) -> (i32, i32, i32) {
    %c0_i32 = arith.constant 0 : i32
    %c0_i32_0 = arith.constant 0 : i32
    %c0_i32_1 = arith.constant 0 : i32
    %c0_i32_2 = arith.constant 0 : i32
    return %c0_i32, %c0_i32_0, %c0_i32_1 : i32, i32, i32
  }
  func.func @transform_3(%arg0: i32) -> (i32, i32) {
    %c0_i32 = arith.constant 0 : i32
    %c0_i32_0 = arith.constant 0 : i32
    %c0_i32_1 = arith.constant 0 : i32
    return %c0_i32, %c0_i32_0 : i32, i32
  }
}

module attributes {stable_mosaic.version = 11 : i64} {
  func.func @_mm_bn_lrelu_kernel(%arg0: i32, %arg1: memref<32x128xbf16, #tpu.memory_space<vmem>>, %arg2: memref<128x128xbf16, #tpu.memory_space<vmem>>, %arg3: memref<1x128xf32, #tpu.memory_space<vmem>>, %arg4: memref<1x128xf32, #tpu.memory_space<vmem>>, %arg5: memref<32x128xf32, #tpu.memory_space<vmem>>) attributes {dimension_semantics = [#tpu.dimension_semantics<parallel>], iteration_bounds = array<i64: 1>, scalar_prefetch = 0 : i64, scratch_operands = 0 : i64, tpu.core_type = #tpu.core_type<tc>, window_params = [{transform_indices = @transform_0, window_bounds = array<i64: 32, 128>}, {pipeline_mode = #tpu.pipeline_mode<synchronous>, transform_indices = @transform_1, window_bounds = array<i64: 128, 128>}, {pipeline_mode = #tpu.pipeline_mode<synchronous>, transform_indices = @transform_2, window_bounds = array<i64: 1, 128>}, {pipeline_mode = #tpu.pipeline_mode<synchronous>, transform_indices = @transform_3, window_bounds = array<i64: 1, 128>}, {transform_indices = @transform_4, window_bounds = array<i64: 32, 128>}]} {
    %c0 = arith.constant 0 : index
    %c0_0 = arith.constant 0 : index
    %0 = vector.load %arg1[%c0, %c0_0] : memref<32x128xbf16, #tpu.memory_space<vmem>>, vector<32x128xbf16>
    %c0_1 = arith.constant 0 : index
    %c0_2 = arith.constant 0 : index
    %1 = vector.load %arg2[%c0_1, %c0_2] : memref<128x128xbf16, #tpu.memory_space<vmem>>, vector<128x128xbf16>
    %cst = arith.constant dense<0.000000e+00> : vector<32x128xf32>
    %2 = tpu.matmul %0, %1, %cst {dimension_numbers = #tpu.dot_dimension_numbers<[1], [0], [0], [1], [0, 0, 1, 1], [], []>} : vector<32x128xbf16>, vector<128x128xbf16>, vector<32x128xf32> -> vector<32x128xf32>
    %c0_3 = arith.constant 0 : index
    %c0_4 = arith.constant 0 : index
    %3 = vector.load %arg3[%c0_3, %c0_4] : memref<1x128xf32, #tpu.memory_space<vmem>>, vector<1x128xf32>
    %4 = vector.broadcast %3 : vector<1x128xf32> to vector<32x128xf32>
    %5 = arith.mulf %2, %4 : vector<32x128xf32>
    %c0_5 = arith.constant 0 : index
    %c0_6 = arith.constant 0 : index
    %6 = vector.load %arg4[%c0_5, %c0_6] : memref<1x128xf32, #tpu.memory_space<vmem>>, vector<1x128xf32>
    %7 = vector.broadcast %6 : vector<1x128xf32> to vector<32x128xf32>
    %8 = arith.addf %5, %7 : vector<32x128xf32>
    %cst_7 = arith.constant 0.000000e+00 : f32
    %9 = vector.broadcast %cst_7 : f32 to vector<32x128xf32>
    %10 = arith.cmpf ogt, %8, %9 : vector<32x128xf32>
    %cst_8 = arith.constant 2.000000e-01 : f32
    %11 = vector.broadcast %cst_8 : f32 to vector<32x128xf32>
    %12 = arith.mulf %11, %8 : vector<32x128xf32>
    %13 = arith.select %10, %8, %12 : vector<32x128xi1>, vector<32x128xf32>
    %c0_9 = arith.constant 0 : index
    %c0_10 = arith.constant 0 : index
    %14 = vector.load %arg5[%c0_9, %c0_10] : memref<32x128xf32, #tpu.memory_space<vmem>>, vector<32x128xf32>
    tpu.vector_store %arg5[%c0_9, %c0_10], %13 {strides = array<i32>} : memref<32x128xf32, #tpu.memory_space<vmem>>, vector<32x128xf32>,
    return
  }
  func.func @transform_0(%arg0: i32) -> (i32, i32) {
    %c0_i32 = arith.constant 0 : i32
    %c0_i32_0 = arith.constant 0 : i32
    return %arg0, %c0_i32 : i32, i32
  }
  func.func @transform_1(%arg0: i32) -> (i32, i32) {
    %c0_i32 = arith.constant 0 : i32
    %c0_i32_0 = arith.constant 0 : i32
    %c0_i32_1 = arith.constant 0 : i32
    return %c0_i32, %c0_i32_0 : i32, i32
  }
  func.func @transform_2(%arg0: i32) -> (i32, i32) {
    %c0_i32 = arith.constant 0 : i32
    %c0_i32_0 = arith.constant 0 : i32
    %c0_i32_1 = arith.constant 0 : i32
    return %c0_i32, %c0_i32_0 : i32, i32
  }
  func.func @transform_3(%arg0: i32) -> (i32, i32) {
    %c0_i32 = arith.constant 0 : i32
    %c0_i32_0 = arith.constant 0 : i32
    %c0_i32_1 = arith.constant 0 : i32
    return %c0_i32, %c0_i32_0 : i32, i32
  }
  func.func @transform_4(%arg0: i32) -> (i32, i32) {
    %c0_i32 = arith.constant 0 : i32
    %c0_i32_0 = arith.constant 0 : i32
    return %arg0, %c0_i32 : i32, i32
  }
}

module attributes {stable_mosaic.version = 11 : i64} {
  func.func @_mm_bn_lrelu_kernel(%arg0: i32, %arg1: memref<128x128xbf16, #tpu.memory_space<vmem>>, %arg2: memref<128x128xbf16, #tpu.memory_space<vmem>>, %arg3: memref<1x128xf32, #tpu.memory_space<vmem>>, %arg4: memref<1x128xf32, #tpu.memory_space<vmem>>, %arg5: memref<128x128xf32, #tpu.memory_space<vmem>>) attributes {dimension_semantics = [#tpu.dimension_semantics<parallel>], iteration_bounds = array<i64: 1>, scalar_prefetch = 0 : i64, scratch_operands = 0 : i64, tpu.core_type = #tpu.core_type<tc>, window_params = [{transform_indices = @transform_0, window_bounds = array<i64: 128, 128>}, {pipeline_mode = #tpu.pipeline_mode<synchronous>, transform_indices = @transform_1, window_bounds = array<i64: 128, 128>}, {pipeline_mode = #tpu.pipeline_mode<synchronous>, transform_indices = @transform_2, window_bounds = array<i64: 1, 128>}, {pipeline_mode = #tpu.pipeline_mode<synchronous>, transform_indices = @transform_3, window_bounds = array<i64: 1, 128>}, {transform_indices = @transform_4, window_bounds = array<i64: 128, 128>}]} {
    %c0 = arith.constant 0 : index
    %c0_0 = arith.constant 0 : index
    %0 = vector.load %arg1[%c0, %c0_0] : memref<128x128xbf16, #tpu.memory_space<vmem>>, vector<128x128xbf16>
    %c0_1 = arith.constant 0 : index
    %c0_2 = arith.constant 0 : index
    %1 = vector.load %arg2[%c0_1, %c0_2] : memref<128x128xbf16, #tpu.memory_space<vmem>>, vector<128x128xbf16>
    %cst = arith.constant dense<0.000000e+00> : vector<128x128xf32>
    %2 = tpu.matmul %0, %1, %cst {dimension_numbers = #tpu.dot_dimension_numbers<[1], [0], [0], [1], [0, 0, 1, 1], [], []>} : vector<128x128xbf16>, vector<128x128xbf16>, vector<128x128xf32> -> vector<128x128xf32>
    %c0_3 = arith.constant 0 : index
    %c0_4 = arith.constant 0 : index
    %3 = vector.load %arg3[%c0_3, %c0_4] : memref<1x128xf32, #tpu.memory_space<vmem>>, vector<1x128xf32>
    %4 = vector.broadcast %3 : vector<1x128xf32> to vector<128x128xf32>
    %5 = arith.mulf %2, %4 : vector<128x128xf32>
    %c0_5 = arith.constant 0 : index
    %c0_6 = arith.constant 0 : index
    %6 = vector.load %arg4[%c0_5, %c0_6] : memref<1x128xf32, #tpu.memory_space<vmem>>, vector<1x128xf32>
    %7 = vector.broadcast %6 : vector<1x128xf32> to vector<128x128xf32>
    %8 = arith.addf %5, %7 : vector<128x128xf32>
    %cst_7 = arith.constant 0.000000e+00 : f32
    %9 = vector.broadcast %cst_7 : f32 to vector<128x128xf32>
    %10 = arith.cmpf ogt, %8, %9 : vector<128x128xf32>
    %cst_8 = arith.constant 2.000000e-01 : f32
    %11 = vector.broadcast %cst_8 : f32 to vector<128x128xf32>
    %12 = arith.mulf %11, %8 : vector<128x128xf32>
    %13 = arith.select %10, %8, %12 : vector<128x128xi1>, vector<128x128xf32>
    %c0_9 = arith.constant 0 : index
    %c0_10 = arith.constant 0 : index
    %14 = vector.load %arg5[%c0_9, %c0_10] : memref<128x128xf32, #tpu.memory_space<vmem>>, vector<128x128xf32>
    tpu.vector_store %arg5[%c0_9, %c0_10], %13 {strides = array<i32>} : memref<128x128xf32, #tpu.memory_space<vmem>>, vector<128x128xf32>,
    return
  }
  func.func @transform_0(%arg0: i32) -> (i32, i32) {
    %c0_i32 = arith.constant 0 : i32
    %c0_i32_0 = arith.constant 0 : i32
    return %arg0, %c0_i32 : i32, i32
  }
  func.func @transform_1(%arg0: i32) -> (i32, i32) {
    %c0_i32 = arith.constant 0 : i32
    %c0_i32_0 = arith.constant 0 : i32
    %c0_i32_1 = arith.constant 0 : i32
    return %c0_i32, %c0_i32_0 : i32, i32
  }
  func.func @transform_2(%arg0: i32) -> (i32, i32) {
    %c0_i32 = arith.constant 0 : i32
    %c0_i32_0 = arith.constant 0 : i32
    %c0_i32_1 = arith.constant 0 : i32
    return %c0_i32, %c0_i32_0 : i32, i32
  }
  func.func @transform_3(%arg0: i32) -> (i32, i32) {
    %c0_i32 = arith.constant 0 : i32
    %c0_i32_0 = arith.constant 0 : i32
    %c0_i32_1 = arith.constant 0 : i32
    return %c0_i32, %c0_i32_0 : i32, i32
  }
  func.func @transform_4(%arg0: i32) -> (i32, i32) {
    %c0_i32 = arith.constant 0 : i32
    %c0_i32_0 = arith.constant 0 : i32
    return %arg0, %c0_i32 : i32, i32
  }
}

module attributes {stable_mosaic.version = 11 : i64} {
  func.func @_attn_final_kernel(%arg0: i32, %arg1: memref<512x128xbf16, #tpu.memory_space<vmem>>, %arg2: memref<128x128xbf16, #tpu.memory_space<vmem>>, %arg3: memref<1x128xf32, #tpu.memory_space<vmem>>, %arg4: memref<128x128xbf16, #tpu.memory_space<vmem>>, %arg5: memref<1x128xf32, #tpu.memory_space<vmem>>, %arg6: memref<512x128xf32, #tpu.memory_space<vmem>>) attributes {dimension_semantics = [#tpu.dimension_semantics<parallel>], iteration_bounds = array<i64: 1>, scalar_prefetch = 0 : i64, scratch_operands = 0 : i64, tpu.core_type = #tpu.core_type<tc>, window_params = [{transform_indices = @transform_0, window_bounds = array<i64: 512, 128>}, {pipeline_mode = #tpu.pipeline_mode<synchronous>, transform_indices = @transform_1, window_bounds = array<i64: 128, 128>}, {pipeline_mode = #tpu.pipeline_mode<synchronous>, transform_indices = @transform_2, window_bounds = array<i64: 1, 128>}, {pipeline_mode = #tpu.pipeline_mode<synchronous>, transform_indices = @transform_3, window_bounds = array<i64: 128, 128>}, {pipeline_mode = #tpu.pipeline_mode<synchronous>, transform_indices = @transform_4, window_bounds = array<i64: 1, 128>}, {transform_indices = @transform_5, window_bounds = array<i64: 512, 128>}]} {
    %c0 = arith.constant 0 : index
    %c0_0 = arith.constant 0 : index
    %0 = vector.load %arg1[%c0, %c0_0] : memref<512x128xbf16, #tpu.memory_space<vmem>>, vector<512x128xbf16>
    %c0_1 = arith.constant 0 : index
    %c0_2 = arith.constant 0 : index
    %1 = vector.load %arg2[%c0_1, %c0_2] : memref<128x128xbf16, #tpu.memory_space<vmem>>, vector<128x128xbf16>
    %cst = arith.constant dense<0.000000e+00> : vector<512x128xf32>
    %2 = tpu.matmul %0, %1, %cst {dimension_numbers = #tpu.dot_dimension_numbers<[1], [0], [0], [1], [0, 0, 1, 1], [], []>} : vector<512x128xbf16>, vector<128x128xbf16>, vector<512x128xf32> -> vector<512x128xf32>
    %c0_3 = arith.constant 0 : index
    %c0_4 = arith.constant 0 : index
    %3 = vector.load %arg3[%c0_3, %c0_4] : memref<1x128xf32, #tpu.memory_space<vmem>>, vector<1x128xf32>
    %4 = vector.broadcast %3 : vector<1x128xf32> to vector<512x128xf32>
    %5 = arith.addf %2, %4 : vector<512x128xf32>
    %6 = arith.negf %5 : vector<512x128xf32>
    %7 = math.exp %6 : vector<512x128xf32>
    %cst_5 = arith.constant 1.000000e+00 : f32
    %8 = vector.broadcast %cst_5 : f32 to vector<512x128xf32>
    %9 = arith.addf %8, %7 : vector<512x128xf32>
    %10 = arith.divf %8, %9 : vector<512x128xf32>
    %11 = arith.extf %0 : vector<512x128xbf16> to vector<512x128xf32>
    %12 = arith.mulf %11, %10 : vector<512x128xf32>
    %13 = arith.truncf %12 : vector<512x128xf32> to vector<512x128xbf16>
    %c0_6 = arith.constant 0 : index
    %c0_7 = arith.constant 0 : index
    %14 = vector.load %arg4[%c0_6, %c0_7] : memref<128x128xbf16, #tpu.memory_space<vmem>>, vector<128x128xbf16>
    %cst_8 = arith.constant dense<0.000000e+00> : vector<512x128xf32>
    %15 = tpu.matmul %13, %14, %cst_8 {dimension_numbers = #tpu.dot_dimension_numbers<[1], [0], [0], [1], [0, 0, 1, 1], [], []>} : vector<512x128xbf16>, vector<128x128xbf16>, vector<512x128xf32> -> vector<512x128xf32>
    %c0_9 = arith.constant 0 : index
    %c0_10 = arith.constant 0 : index
    %16 = vector.load %arg5[%c0_9, %c0_10] : memref<1x128xf32, #tpu.memory_space<vmem>>, vector<1x128xf32>
    %17 = vector.broadcast %16 : vector<1x128xf32> to vector<512x128xf32>
    %18 = arith.addf %15, %17 : vector<512x128xf32>
    %c0_11 = arith.constant 0 : index
    %c0_12 = arith.constant 0 : index
    %19 = vector.load %arg6[%c0_11, %c0_12] : memref<512x128xf32, #tpu.memory_space<vmem>>, vector<512x128xf32>
    tpu.vector_store %arg6[%c0_11, %c0_12], %18 {strides = array<i32>} : memref<512x128xf32, #tpu.memory_space<vmem>>, vector<512x128xf32>,
    return
  }
  func.func @transform_0(%arg0: i32) -> (i32, i32) {
    %c0_i32 = arith.constant 0 : i32
    %c0_i32_0 = arith.constant 0 : i32
    return %arg0, %c0_i32 : i32, i32
  }
  func.func @transform_1(%arg0: i32) -> (i32, i32) {
    %c0_i32 = arith.constant 0 : i32
    %c0_i32_0 = arith.constant 0 : i32
    %c0_i32_1 = arith.constant 0 : i32
    return %c0_i32, %c0_i32_0 : i32, i32
  }
  func.func @transform_2(%arg0: i32) -> (i32, i32) {
    %c0_i32 = arith.constant 0 : i32
    %c0_i32_0 = arith.constant 0 : i32
    %c0_i32_1 = arith.constant 0 : i32
    return %c0_i32, %c0_i32_0 : i32, i32
  }
  func.func @transform_3(%arg0: i32) -> (i32, i32) {
    %c0_i32 = arith.constant 0 : i32
    %c0_i32_0 = arith.constant 0 : i32
    %c0_i32_1 = arith.constant 0 : i32
    return %c0_i32, %c0_i32_0 : i32, i32
  }
  func.func @transform_4(%arg0: i32) -> (i32, i32) {
    %c0_i32 = arith.constant 0 : i32
    %c0_i32_0 = arith.constant 0 : i32
    %c0_i32_1 = arith.constant 0 : i32
    return %c0_i32, %c0_i32_0 : i32, i32
  }
  func.func @transform_5(%arg0: i32) -> (i32, i32) {
    %c0_i32 = arith.constant 0 : i32
    %c0_i32_0 = arith.constant 0 : i32
    return %arg0, %c0_i32 : i32, i32
  }
}

</mosaic_0001>

<llo_original>
// kernel: forward.7
$region0: #{forward.7}
  #allocation0 [shape = 'u32[]', space=smem, size = 0x4, offset = 0x4, fixed_abs, tag = 'smem constant byte address 0x4 - core index']
  #allocation1 [shape = 'u32[144,128]{1,0:T(1,128)}', space=vmem, size = 0x12000, scoped, tag = 'internal scratch']
  %s0 = inlined_call_operand.vmem [shape: bf16[512,128], index: 0, kind: input, shape index: {}]
  %s1 = inlined_call_operand.vmem [shape: bf16[128,128], index: 1, kind: input, shape index: {}]
  %s2 = inlined_call_operand.vmem [shape: f32[1,128], index: 2, kind: input, shape index: {}]
  %s3 = inlined_call_operand.vmem [shape: f32[1,128], index: 3, kind: input, shape index: {}]
  %s4 = inlined_call_operand.vmem [shape: f32[512,128], index: 4, kind: output, shape index: {}]
  %s5 = sld [smem:[#allocation0]]
  $region26: #{forward.7} parent=0
    _
  %s7 = ssub.s32 1, %s5
  %s8 = scalar_select 0, %s7, %s5
  // Predicated region
  $region2: #{forward.7} parent=0 // pred_check
    _
  $region3: #{forward.7} parent=0 // pred_check_branch
    %10 = sbr.rel (0) target = $region5
  $region4: #{forward.7} parent=0 // pred_region
    _
  $region5: #{forward.7} parent=0 // pred_fallthru
    _
  // Predicated region
  $region6: #{forward.7} parent=0 // pred_check
    _
  $region7: #{forward.7} parent=0 // pred_check_branch
    %12 = sbr.rel (0) target = $region9
  $region8: #{forward.7} parent=0 // pred_region
    _
  $region9: #{forward.7} parent=0 // pred_fallthru
    _
  // Predicated region
  $region10: #{forward.7} parent=0 // pred_check
    _
  $region11: #{forward.7} parent=0 // pred_check_branch
    %14 = sbr.rel (0) target = $region13
  $region12: #{forward.7} parent=0 // pred_region
    _
  $region13: #{forward.7} parent=0 // pred_fallthru
    _
  // Predicated region
  $region14: #{forward.7} parent=0 // pred_check
    _
  $region15: #{forward.7} parent=0 // pred_check_branch
    %16 = sbr.rel (0) target = $region17
  $region16: #{forward.7} parent=0 // pred_region
    _
  $region17: #{forward.7} parent=0 // pred_fallthru
    _
  %v18 = vld [vmem:[%s0] sm:$0xf]
  %v19 = vld [vmem:[%s0 + $0x4] sm:$0xf]
  %v20 = vld [vmem:[%s0 + $0x8] sm:$0xf]
  %v21 = vld [vmem:[%s0 + $0xc] sm:$0xf]
  %v22 = vld [vmem:[%s0 + $0x10] sm:$0xf]
  %v23 = vld [vmem:[%s0 + $0x14] sm:$0xf]
  %v24 = vld [vmem:[%s0 + $0x18] sm:$0xf]
  %v25 = vld [vmem:[%s0 + $0x1c] sm:$0xf]
  %v26 = vld [vmem:[%s0 + $0x20] sm:$0xf]
  %v27 = vld [vmem:[%s0 + $0x24] sm:$0xf]
  %v28 = vld [vmem:[%s0 + $0x28] sm:$0xf]
  %v29 = vld [vmem:[%s0 + $0x2c] sm:$0xf]
  %v30 = vld [vmem:[%s0 + $0x30] sm:$0xf]
  %v31 = vld [vmem:[%s0 + $0x34] sm:$0xf]
  %v32 = vld [vmem:[%s0 + $0x38] sm:$0xf]
  %v33 = vld [vmem:[%s0 + $0x3c] sm:$0xf]
  %v34 = vld [vmem:[%s0 + $0x40] sm:$0xf]
  %v35 = vld [vmem:[%s0 + $0x44] sm:$0xf]
  %v36 = vld [vmem:[%s0 + $0x48] sm:$0xf]
  %v37 = vld [vmem:[%s0 + $0x4c] sm:$0xf]
  %v38 = vld [vmem:[%s0 + $0x50] sm:$0xf]
  %v39 = vld [vmem:[%s0 + $0x54] sm:$0xf]
  %v40 = vld [vmem:[%s0 + $0x58] sm:$0xf]
  %v41 = vld [vmem:[%s0 + $0x5c] sm:$0xf]
  %v42 = vld [vmem:[%s0 + $0x60] sm:$0xf]
  %v43 = vld [vmem:[%s0 + $0x64] sm:$0xf]
  %v44 = vld [vmem:[%s0 + $0x68] sm:$0xf]
  %v45 = vld [vmem:[%s0 + $0x6c] sm:$0xf]
  %v46 = vld [vmem:[%s0 + $0x70] sm:$0xf]
  %v47 = vld [vmem:[%s0 + $0x74] sm:$0xf]
  %v48 = vld [vmem:[%s0 + $0x78] sm:$0xf]
  %v49 = vld [vmem:[%s0 + $0x7c] sm:$0xf]
  %v50 = vld [vmem:[%s0 + $0x80] sm:$0xf]
  %v51 = vld [vmem:[%s0 + $0x84] sm:$0xf]
  %v52 = vld [vmem:[%s0 + $0x88] sm:$0xf]
  %v53 = vld [vmem:[%s0 + $0x8c] sm:$0xf]
  %v54 = vld [vmem:[%s0 + $0x90] sm:$0xf]
  %v55 = vld [vmem:[%s0 + $0x94] sm:$0xf]
  %v56 = vld [vmem:[%s0 + $0x98] sm:$0xf]
  %v57 = vld [vmem:[%s0 + $0x9c] sm:$0xf]
  %v58 = vld [vmem:[%s0 + $0xa0] sm:$0xf]
  %v59 = vld [vmem:[%s0 + $0xa4] sm:$0xf]
  %v60 = vld [vmem:[%s0 + $0xa8] sm:$0xf]
  %v61 = vld [vmem:[%s0 + $0xac] sm:$0xf]
  %v62 = vld [vmem:[%s0 + $0xb0] sm:$0xf]
  %v63 = vld [vmem:[%s0 + $0xb4] sm:$0xf]
  %v64 = vld [vmem:[%s0 + $0xb8] sm:$0xf]
  %v65 = vld [vmem:[%s0 + $0xbc] sm:$0xf]
  %v66 = vld [vmem:[%s0 + $0xc0] sm:$0xf]
  %v67 = vld [vmem:[%s0 + $0xc4] sm:$0xf]
  %v68 = vld [vmem:[%s0 + $0xc8] sm:$0xf]
  %v69 = vld [vmem:[%s0 + $0xcc] sm:$0xf]
  %v70 = vld [vmem:[%s0 + $0xd0] sm:$0xf]
  %v71 = vld [vmem:[%s0 + $0xd4] sm:$0xf]
  %v72 = vld [vmem:[%s0 + $0xd8] sm:$0xf]
  %v73 = vld [vmem:[%s0 + $0xdc] sm:$0xf]
  %v74 = vld [vmem:[%s0 + $0xe0] sm:$0xf]
  %v75 = vld [vmem:[%s0 + $0xe4] sm:$0xf]
  %v76 = vld [vmem:[%s0 + $0xe8] sm:$0xf]
  %v77 = vld [vmem:[%s0 + $0xec] sm:$0xf]
  %v78 = vld [vmem:[%s0 + $0xf0] sm:$0xf]
  %v79 = vld [vmem:[%s0 + $0xf4] sm:$0xf]
  %v80 = vld [vmem:[%s0 + $0xf8] sm:$0xf]
  %v81 = vld [vmem:[%s0 + $0xfc] sm:$0xf]
  %v82 = vld [vmem:[%s1] sm:$0xf]
  %v83 = vld [vmem:[%s1 + $0x4] sm:$0xf]
  %v84 = vld [vmem:[%s1 + $0x8] sm:$0xf]
  %v85 = vld [vmem:[%s1 + $0xc] sm:$0xf]
  %v86 = vld [vmem:[%s1 + $0x10] sm:$0xf]
  %v87 = vld [vmem:[%s1 + $0x14] sm:$0xf]
  %v88 = vld [vmem:[%s1 + $0x18] sm:$0xf]
  %v89 = vld [vmem:[%s1 + $0x1c] sm:$0xf]
  %v90 = vld [vmem:[%s1 + $0x20] sm:$0xf]
  %v91 = vld [vmem:[%s1 + $0x24] sm:$0xf]
  %v92 = vld [vmem:[%s1 + $0x28] sm:$0xf]
  %v93 = vld [vmem:[%s1 + $0x2c] sm:$0xf]
  %v94 = vld [vmem:[%s1 + $0x30] sm:$0xf]
  %v95 = vld [vmem:[%s1 + $0x34] sm:$0xf]
  %v96 = vld [vmem:[%s1 + $0x38] sm:$0xf]
  %v97 = vld [vmem:[%s1 + $0x3c] sm:$0xf]
  %v162 = vunpack.c.l.b16 %v18
  %v163 = vunpack.c.l.b16 %v19
  %v164 = vunpack.c.l.b16 %v20
  %v165 = vunpack.c.l.b16 %v21
  %v166 = vunpack.c.l.b16 %v22
  %v167 = vunpack.c.l.b16 %v23
  %v168 = vunpack.c.l.b16 %v24
  %v169 = vunpack.c.l.b16 %v25
  %v170 = vunpack.c.l.b16 %v26
  %v171 = vunpack.c.l.b16 %v27
  %v172 = vunpack.c.l.b16 %v28
  %v173 = vunpack.c.l.b16 %v29
  %v174 = vunpack.c.l.b16 %v30
  %v175 = vunpack.c.l.b16 %v31
  %v176 = vunpack.c.l.b16 %v32
  %v177 = vunpack.c.l.b16 %v33
  %v178 = vunpack.c.l.b16 %v34
  %v179 = vunpack.c.l.b16 %v35
  %v180 = vunpack.c.l.b16 %v36
  %v181 = vunpack.c.l.b16 %v37
  %v182 = vunpack.c.l.b16 %v38
  %v183 = vunpack.c.l.b16 %v39
  %v184 = vunpack.c.l.b16 %v40
  %v185 = vunpack.c.l.b16 %v41
  %v186 = vunpack.c.l.b16 %v42
  %v187 = vunpack.c.l.b16 %v43
  %v188 = vunpack.c.l.b16 %v44
  %v189 = vunpack.c.l.b16 %v45
  %v190 = vunpack.c.l.b16 %v46
  %v191 = vunpack.c.l.b16 %v47
  %v192 = vunpack.c.l.b16 %v48
  %v193 = vunpack.c.l.b16 %v49
  %v194 = vunpack.c.l.b16 %v50
  %v195 = vunpack.c.l.b16 %v51
  %v196 = vunpack.c.l.b16 %v52
  %v197 = vunpack.c.l.b16 %v53
  %v198 = vunpack.c.l.b16 %v54
  %v199 = vunpack.c.l.b16 %v55
  %v200 = vunpack.c.l.b16 %v56
  %v201 = vunpack.c.l.b16 %v57
  %v202 = vunpack.c.l.b16 %v58
  %v203 = vunpack.c.l.b16 %v59
  %v204 = vunpack.c.l.b16 %v60
  %v205 = vunpack.c.l.b16 %v61
  %v206 = vunpack.c.l.b16 %v62
  %v207 = vunpack.c.l.b16 %v63
  %v208 = vunpack.c.l.b16 %v64
  %v209 = vunpack.c.l.b16 %v65
  %v210 = vunpack.c.l.b16 %v66
  %v211 = vunpack.c.l.b16 %v67
  %v212 = vunpack.c.l.b16 %v68
  %v213 = vunpack.c.l.b16 %v69
  %v214 = vunpack.c.l.b16 %v70
  %v215 = vunpack.c.l.b16 %v71
  %v216 = vunpack.c.l.b16 %v72
  %v217 = vunpack.c.l.b16 %v73
  %v218 = vunpack.c.l.b16 %v74
  %v219 = vunpack.c.l.b16 %v75
  %v220 = vunpack.c.l.b16 %v76
  %v221 = vunpack.c.l.b16 %v77
  %v222 = vunpack.c.l.b16 %v78
  %v223 = vunpack.c.l.b16 %v79
  %v224 = vunpack.c.l.b16 %v80
  %v225 = vunpack.c.l.b16 %v81
  %v226 = vpack.c.b16 %v163, %v162
  %v227 = vpack.c.b16 %v165, %v164
  %v228 = vpack.c.b16 %v167, %v166
  %v229 = vpack.c.b16 %v169, %v168
  %v230 = vpack.c.b16 %v171, %v170
  %v231 = vpack.c.b16 %v173, %v172
  %v232 = vpack.c.b16 %v175, %v174
  %v233 = vpack.c.b16 %v177, %v176
  %v234 = vpack.c.b16 %v179, %v178
  %v235 = vpack.c.b16 %v181, %v180
  %v236 = vpack.c.b16 %v183, %v182
  %v237 = vpack.c.b16 %v185, %v184
  %v238 = vpack.c.b16 %v187, %v186
  %v239 = vpack.c.b16 %v189, %v188
  %v240 = vpack.c.b16 %v191, %v190
  %v241 = vpack.c.b16 %v193, %v192
  %v242 = vpack.c.b16 %v195, %v194
  %v243 = vpack.c.b16 %v197, %v196
  %v244 = vpack.c.b16 %v199, %v198
  %v245 = vpack.c.b16 %v201, %v200
  %v246 = vpack.c.b16 %v203, %v202
  %v247 = vpack.c.b16 %v205, %v204
  %v248 = vpack.c.b16 %v207, %v206
  %v249 = vpack.c.b16 %v209, %v208
  %v250 = vpack.c.b16 %v211, %v210
  %v251 = vpack.c.b16 %v213, %v212
  %v252 = vpack.c.b16 %v215, %v214
  %v253 = vpack.c.b16 %v217, %v216
  %v254 = vpack.c.b16 %v219, %v218
  %v255 = vpack.c.b16 %v221, %v220
  %v256 = vpack.c.b16 %v223, %v222
  %v257 = vpack.c.b16 %v225, %v224
  %v306 = vunpack.c.l.b16 %v82
  %v307 = vunpack.c.l.b16 %v83
  %v308 = vunpack.c.l.b16 %v84
  %v309 = vunpack.c.l.b16 %v85
  %v310 = vunpack.c.l.b16 %v86
  %v311 = vunpack.c.l.b16 %v87
  %v312 = vunpack.c.l.b16 %v88
  %v313 = vunpack.c.l.b16 %v89
  %v314 = vunpack.c.l.b16 %v90
  %v315 = vunpack.c.l.b16 %v91
  %v316 = vunpack.c.l.b16 %v92
  %v317 = vunpack.c.l.b16 %v93
  %v318 = vunpack.c.l.b16 %v94
  %v319 = vunpack.c.l.b16 %v95
  %v320 = vunpack.c.l.b16 %v96
  %v321 = vunpack.c.l.b16 %v97
  %v322 = vpack.c.b16 %v307, %v306
  %v323 = vpack.c.b16 %v309, %v308
  %v324 = vpack.c.b16 %v311, %v310
  %v325 = vpack.c.b16 %v313, %v312
  %v326 = vpack.c.b16 %v315, %v314
  %v327 = vpack.c.b16 %v317, %v316
  %v328 = vpack.c.b16 %v319, %v318
  %v329 = vpack.c.b16 %v321, %v320
  %338 = vmatprep.subr.bf16.mxu0 0
  %339 = vmatpush1.bf16.msra.mxu0 %v322
  %340 = vmatprep.subr.bf16.mxu0 0
  %341 = vmatpush1.bf16.msra.mxu0 %v323
  %342 = vmatprep.subr.bf16.mxu0 0
  %343 = vmatpush1.bf16.msra.mxu0 %v324
  %344 = vmatprep.subr.bf16.mxu0 0
  %345 = vmatpush1.bf16.msra.mxu0 %v325
  %346 = vmatprep.subr.bf16.mxu0 0
  %347 = vmatpush1.bf16.msra.mxu0 %v326
  %348 = vmatprep.subr.bf16.mxu0 0
  %349 = vmatpush1.bf16.msra.mxu0 %v327
  %350 = vmatprep.subr.bf16.mxu0 0
  %351 = vmatpush1.bf16.msra.mxu0 %v328
  %352 = vmatprep.subr.bf16.mxu0 0
  %353 = vmatpush1.bf16.msra.mxu0 %v329
  %354 = vmatprep.subr.bf16.mxu0 0
  %355 = vmatpush1.bf16.msra.mxu0 0
  %356 = vmatprep.subr.bf16.mxu0 0
  %357 = vmatpush1.bf16.msra.mxu0 0
  %358 = vmatprep.subr.bf16.mxu0 0
  %359 = vmatpush1.bf16.msra.mxu0 0
  %360 = vmatprep.subr.bf16.mxu0 0
  %361 = vmatpush1.bf16.msra.mxu0 0
  %362 = vmatprep.subr.bf16.mxu0 0
  %363 = vmatpush1.bf16.msra.mxu0 0
  %364 = vmatprep.subr.bf16.mxu0 0
  %365 = vmatpush1.bf16.msra.mxu0 0
  %366 = vmatprep.subr.bf16.mxu0 0
  %367 = vmatpush1.bf16.msra.mxu0 0
  %368 = vmatprep.subr.bf16.mxu0 0
  %369 = vmatpush1.bf16.msra.mxu0 0
  %370 = vmatprep.mubr.bf16.mxu0 0
  %371 = vmatmul.mubr.bf16.gmra.mrb[0].mxu0 %v226
  %v372 = vpop.f32.mrb[0].mxu0
  %v373 = vadd.f32 0.0, %v372
  %v374 = vpop.f32.mrb[0].mxu0
  %v375 = vpop.f32.mrb[0].mxu0
  %v376 = vadd.f32 0.0, %v375
  %v377 = vpop.f32.mrb[0].mxu0
  %378 = vmatprep.mubr.bf16.mxu0 0
  %379 = vmatmul.mubr.bf16.gmra.mrb[0].mxu0 %v227
  %v380 = vpop.f32.mrb[0].mxu0
  %v381 = vadd.f32 0.0, %v380
  %v382 = vpop.f32.mrb[0].mxu0
  %v383 = vpop.f32.mrb[0].mxu0
  %v384 = vadd.f32 0.0, %v383
  %v385 = vpop.f32.mrb[0].mxu0
  %386 = vmatprep.mubr.bf16.mxu0 0
  %387 = vmatmul.mubr.bf16.gmra.mrb[0].mxu0 %v228
  %v388 = vpop.f32.mrb[0].mxu0
  %v389 = vadd.f32 0.0, %v388
  %v390 = vpop.f32.mrb[0].mxu0
  %v391 = vpop.f32.mrb[0].mxu0
  %v392 = vadd.f32 0.0, %v391
  %v393 = vpop.f32.mrb[0].mxu0
  %394 = vmatprep.mubr.bf16.mxu0 0
  %395 = vmatmul.mubr.bf16.gmra.mrb[0].mxu0 %v229
  %v396 = vpop.f32.mrb[0].mxu0
  %v397 = vadd.f32 0.0, %v396
  %v398 = vpop.f32.mrb[0].mxu0
  %v399 = vpop.f32.mrb[0].mxu0
  %v400 = vadd.f32 0.0, %v399
  %v401 = vpop.f32.mrb[0].mxu0
  %402 = vmatprep.mubr.bf16.mxu0 0
  %403 = vmatmul.mubr.bf16.gmra.mrb[0].mxu0 %v230
  %v404 = vpop.f32.mrb[0].mxu0
  %v405 = vadd.f32 0.0, %v404
  %v406 = vpop.f32.mrb[0].mxu0
  %v407 = vpop.f32.mrb[0].mxu0
  %v408 = vadd.f32 0.0, %v407
  %v409 = vpop.f32.mrb[0].mxu0
  %410 = vmatprep.mubr.bf16.mxu0 0
  %411 = vmatmul.mubr.bf16.gmra.mrb[0].mxu0 %v231
  %v412 = vpop.f32.mrb[0].mxu0
  %v413 = vadd.f32 0.0, %v412
  %v414 = vpop.f32.mrb[0].mxu0
  %v415 = vpop.f32.mrb[0].mxu0
  %v416 = vadd.f32 0.0, %v415
  %v417 = vpop.f32.mrb[0].mxu0
  %418 = vmatprep.mubr.bf16.mxu0 0
  %419 = vmatmul.mubr.bf16.gmra.mrb[0].mxu0 %v232
  %v420 = vpop.f32.mrb[0].mxu0
  %v421 = vadd.f32 0.0, %v420
  %v422 = vpop.f32.mrb[0].mxu0
  %v423 = vpop.f32.mrb[0].mxu0
  %v424 = vadd.f32 0.0, %v423
  %v425 = vpop.f32.mrb[0].mxu0
  %426 = vmatprep.mubr.bf16.mxu0 0
  %427 = vmatmul.mubr.bf16.gmra.mrb[0].mxu0 %v233
  %v428 = vpop.f32.mrb[0].mxu0
  %v429 = vadd.f32 0.0, %v428
  %v430 = vpop.f32.mrb[0].mxu0
  %v431 = vpop.f32.mrb[0].mxu0
  %v432 = vadd.f32 0.0, %v431
  %v433 = vpop.f32.mrb[0].mxu0
  %434 = vmatprep.mubr.bf16.mxu0 0
  %435 = vmatmul.mubr.bf16.gmra.mrb[0].mxu0 %v234
  %v436 = vpop.f32.mrb[0].mxu0
  %v437 = vadd.f32 0.0, %v436
  %v438 = vpop.f32.mrb[0].mxu0
  %v439 = vpop.f32.mrb[0].mxu0
  %v440 = vadd.f32 0.0, %v439
  %v441 = vpop.f32.mrb[0].mxu0
  %442 = vmatprep.mubr.bf16.mxu0 0
  %443 = vmatmul.mubr.bf16.gmra.mrb[0].mxu0 %v235
  %v444 = vpop.f32.mrb[0].mxu0
  %v445 = vadd.f32 0.0, %v444
  %v446 = vpop.f32.mrb[0].mxu0
  %v447 = vpop.f32.mrb[0].mxu0
  %v448 = vadd.f32 0.0, %v447
  %v449 = vpop.f32.mrb[0].mxu0
  %450 = vmatprep.mubr.bf16.mxu0 0
  %451 = vmatmul.mubr.bf16.gmra.mrb[0].mxu0 %v236
  %v452 = vpop.f32.mrb[0].mxu0
  %v453 = vadd.f32 0.0, %v452
  %v454 = vpop.f32.mrb[0].mxu0
  %v455 = vpop.f32.mrb[0].mxu0
  %v456 = vadd.f32 0.0, %v455
  %v457 = vpop.f32.mrb[0].mxu0
  %458 = vmatprep.mubr.bf16.mxu0 0
  %459 = vmatmul.mubr.bf16.gmra.mrb[0].mxu0 %v237
  %v460 = vpop.f32.mrb[0].mxu0
  %v461 = vadd.f32 0.0, %v460
  %v462 = vpop.f32.mrb[0].mxu0
  %v463 = vpop.f32.mrb[0].mxu0
  %v464 = vadd.f32 0.0, %v463
  %v465 = vpop.f32.mrb[0].mxu0
  %466 = vmatprep.mubr.bf16.mxu0 0
  %467 = vmatmul.mubr.bf16.gmra.mrb[0].mxu0 %v238
  %v468 = vpop.f32.mrb[0].mxu0
  %v469 = vadd.f32 0.0, %v468
  %v470 = vpop.f32.mrb[0].mxu0
  %v471 = vpop.f32.mrb[0].mxu0
  %v472 = vadd.f32 0.0, %v471
  %v473 = vpop.f32.mrb[0].mxu0
  %474 = vmatprep.mubr.bf16.mxu0 0
  %475 = vmatmul.mubr.bf16.gmra.mrb[0].mxu0 %v239
  %v476 = vpop.f32.mrb[0].mxu0
  %v477 = vadd.f32 0.0, %v476
  %v478 = vpop.f32.mrb[0].mxu0
  %v479 = vpop.f32.mrb[0].mxu0
  %v480 = vadd.f32 0.0, %v479
  %v481 = vpop.f32.mrb[0].mxu0
  %482 = vmatprep.mubr.bf16.mxu0 0
  %483 = vmatmul.mubr.bf16.gmra.mrb[0].mxu0 %v240
  %v484 = vpop.f32.mrb[0].mxu0
  %v485 = vadd.f32 0.0, %v484
  %v486 = vpop.f32.mrb[0].mxu0
  %v487 = vpop.f32.mrb[0].mxu0
  %v488 = vadd.f32 0.0, %v487
  %v489 = vpop.f32.mrb[0].mxu0
  %490 = vmatprep.mubr.bf16.mxu0 0
  %491 = vmatmul.mubr.bf16.gmra.mrb[0].mxu0 %v241
  %v492 = vpop.f32.mrb[0].mxu0
  %v493 = vadd.f32 0.0, %v492
  %v494 = vpop.f32.mrb[0].mxu0
  %v495 = vpop.f32.mrb[0].mxu0
  %v496 = vadd.f32 0.0, %v495
  %v497 = vpop.f32.mrb[0].mxu0
  %498 = vmatprep.mubr.bf16.mxu0 0
  %499 = vmatmul.mubr.bf16.gmra.mrb[0].mxu0 %v242
  %v500 = vpop.f32.mrb[0].mxu0
  %v501 = vadd.f32 0.0, %v500
  %v502 = vpop.f32.mrb[0].mxu0
  %v503 = vpop.f32.mrb[0].mxu0
  %v504 = vadd.f32 0.0, %v503
  %v505 = vpop.f32.mrb[0].mxu0
  %506 = vmatprep.mubr.bf16.mxu0 0
  %507 = vmatmul.mubr.bf16.gmra.mrb[0].mxu0 %v243
  %v508 = vpop.f32.mrb[0].mxu0
  %v509 = vadd.f32 0.0, %v508
  %v510 = vpop.f32.mrb[0].mxu0
  %v511 = vpop.f32.mrb[0].mxu0
  %v512 = vadd.f32 0.0, %v511
  %v513 = vpop.f32.mrb[0].mxu0
  %514 = vmatprep.mubr.bf16.mxu0 0
  %515 = vmatmul.mubr.bf16.gmra.mrb[0].mxu0 %v244
  %v516 = vpop.f32.mrb[0].mxu0
  %v517 = vadd.f32 0.0, %v516
  %v518 = vpop.f32.mrb[0].mxu0
  %v519 = vpop.f32.mrb[0].mxu0
  %v520 = vadd.f32 0.0, %v519
  %v521 = vpop.f32.mrb[0].mxu0
  %522 = vmatprep.mubr.bf16.mxu0 0
  %523 = vmatmul.mubr.bf16.gmra.mrb[0].mxu0 %v245
  %v524 = vpop.f32.mrb[0].mxu0
  %v525 = vadd.f32 0.0, %v524
  %v526 = vpop.f32.mrb[0].mxu0
  %v527 = vpop.f32.mrb[0].mxu0
  %v528 = vadd.f32 0.0, %v527
  %v529 = vpop.f32.mrb[0].mxu0
  %530 = vmatprep.mubr.bf16.mxu0 0
  %531 = vmatmul.mubr.bf16.gmra.mrb[0].mxu0 %v246
  %v532 = vpop.f32.mrb[0].mxu0
  %v533 = vadd.f32 0.0, %v532
  %v534 = vpop.f32.mrb[0].mxu0
  %v535 = vpop.f32.mrb[0].mxu0
  %v536 = vadd.f32 0.0, %v535
  %v537 = vpop.f32.mrb[0].mxu0
  %538 = vmatprep.mubr.bf16.mxu0 0
  %539 = vmatmul.mubr.bf16.gmra.mrb[0].mxu0 %v247
  %v540 = vpop.f32.mrb[0].mxu0
  %v541 = vadd.f32 0.0, %v540
  %v542 = vpop.f32.mrb[0].mxu0
  %v543 = vpop.f32.mrb[0].mxu0
  %v544 = vadd.f32 0.0, %v543
  %v545 = vpop.f32.mrb[0].mxu0
  %546 = vmatprep.mubr.bf16.mxu0 0
  %547 = vmatmul.mubr.bf16.gmra.mrb[0].mxu0 %v248
  %v548 = vpop.f32.mrb[0].mxu0
  %v549 = vadd.f32 0.0, %v548
  %v550 = vpop.f32.mrb[0].mxu0
  %v551 = vpop.f32.mrb[0].mxu0
  %v552 = vadd.f32 0.0, %v551
  %v553 = vpop.f32.mrb[0].mxu0
  %554 = vmatprep.mubr.bf16.mxu0 0
  %555 = vmatmul.mubr.bf16.gmra.mrb[0].mxu0 %v249
  %v556 = vpop.f32.mrb[0].mxu0
  %v557 = vadd.f32 0.0, %v556
  %v558 = vpop.f32.mrb[0].mxu0
  %v559 = vpop.f32.mrb[0].mxu0
  %v560 = vadd.f32 0.0, %v559
  %v561 = vpop.f32.mrb[0].mxu0
  %562 = vmatprep.mubr.bf16.mxu0 0
  %563 = vmatmul.mubr.bf16.gmra.mrb[0].mxu0 %v250
  %v564 = vpop.f32.mrb[0].mxu0
  %v565 = vadd.f32 0.0, %v564
  %v566 = vpop.f32.mrb[0].mxu0
  %v567 = vpop.f32.mrb[0].mxu0
  %v568 = vadd.f32 0.0, %v567
  %v569 = vpop.f32.mrb[0].mxu0
  %570 = vmatprep.mubr.bf16.mxu0 0
  %571 = vmatmul.mubr.bf16.gmra.mrb[0].mxu0 %v251
  %v572 = vpop.f32.mrb[0].mxu0
  %v573 = vadd.f32 0.0, %v572
  %v574 = vpop.f32.mrb[0].mxu0
  %v575 = vpop.f32.mrb[0].mxu0
  %v576 = vadd.f32 0.0, %v575
  %v577 = vpop.f32.mrb[0].mxu0
  %578 = vmatprep.mubr.bf16.mxu0 0
  %579 = vmatmul.mubr.bf16.gmra.mrb[0].mxu0 %v252
  %v580 = vpop.f32.mrb[0].mxu0
  %v581 = vadd.f32 0.0, %v580
  %v582 = vpop.f32.mrb[0].mxu0
  %v583 = vpop.f32.mrb[0].mxu0
  %v584 = vadd.f32 0.0, %v583
  %v585 = vpop.f32.mrb[0].mxu0
  %586 = vmatprep.mubr.bf16.mxu0 0
  %587 = vmatmul.mubr.bf16.gmra.mrb[0].mxu0 %v253
  %v588 = vpop.f32.mrb[0].mxu0
  %v589 = vadd.f32 0.0, %v588
  %v590 = vpop.f32.mrb[0].mxu0
  %v591 = vpop.f32.mrb[0].mxu0
  %v592 = vadd.f32 0.0, %v591
  %v593 = vpop.f32.mrb[0].mxu0
  %594 = vmatprep.mubr.bf16.mxu0 0
  %595 = vmatmul.mubr.bf16.gmra.mrb[0].mxu0 %v254
  %v596 = vpop.f32.mrb[0].mxu0
  %v597 = vadd.f32 0.0, %v596
  %v598 = vpop.f32.mrb[0].mxu0
  %v599 = vpop.f32.mrb[0].mxu0
  %v600 = vadd.f32 0.0, %v599
  %v601 = vpop.f32.mrb[0].mxu0
  %602 = vmatprep.mubr.bf16.mxu0 0
  %603 = vmatmul.mubr.bf16.gmra.mrb[0].mxu0 %v255
  %v604 = vpop.f32.mrb[0].mxu0
  %v605 = vadd.f32 0.0, %v604
  %v606 = vpop.f32.mrb[0].mxu0
  %v607 = vpop.f32.mrb[0].mxu0
  %v608 = vadd.f32 0.0, %v607
  %v609 = vpop.f32.mrb[0].mxu0
  %610 = vmatprep.mubr.bf16.mxu0 0
  %611 = vmatmul.mubr.bf16.gmra.mrb[0].mxu0 %v256
  %v612 = vpop.f32.mrb[0].mxu0
  %v613 = vadd.f32 0.0, %v612
  %v614 = vpop.f32.mrb[0].mxu0
  %v615 = vpop.f32.mrb[0].mxu0
  %v616 = vadd.f32 0.0, %v615
  %v617 = vpop.f32.mrb[0].mxu0
  %618 = vmatprep.mubr.bf16.mxu0 0
  %619 = vmatmul.mubr.bf16.gmra.mrb[0].mxu0 %v257
  %v620 = vpop.f32.mrb[0].mxu0
  %v621 = vadd.f32 0.0, %v620
  %v622 = vpop.f32.mrb[0].mxu0
  %v623 = vpop.f32.mrb[0].mxu0
  %v624 = vadd.f32 0.0, %v623
  %v625 = vpop.f32.mrb[0].mxu0
  %626 = vdwg.mxu0
  %v627 = vld [vmem:[%s2] sm:$0x1]
  %v629 = vlaneseq
  %v630 = vshrl.u32 %v629, 7
  %v631 = vsub.s32 0, %v630
  %v632 = vrot.slane %v627, %v631
  %v634 = vmul.f32 %v373, %v632
  %v635 = vmul.f32 %v376, %v632
  %v636 = vmul.f32 %v381, %v632
  %v637 = vmul.f32 %v384, %v632
  %v638 = vmul.f32 %v389, %v632
  %v639 = vmul.f32 %v392, %v632
  %v640 = vmul.f32 %v397, %v632
  %v641 = vmul.f32 %v400, %v632
  %v642 = vmul.f32 %v405, %v632
  %v643 = vmul.f32 %v408, %v632
  %v644 = vmul.f32 %v413, %v632
  %v645 = vmul.f32 %v416, %v632
  %v646 = vmul.f32 %v421, %v632
  %v647 = vmul.f32 %v424, %v632
  %v648 = vmul.f32 %v429, %v632
  %v649 = vmul.f32 %v432, %v632
  %v650 = vmul.f32 %v437, %v632
  %v651 = vmul.f32 %v440, %v632
  %v652 = vmul.f32 %v445, %v632
  %v653 = vmul.f32 %v448, %v632
  %v654 = vmul.f32 %v453, %v632
  %v655 = vmul.f32 %v456, %v632
  %v656 = vmul.f32 %v461, %v632
  %v657 = vmul.f32 %v464, %v632
  %v658 = vmul.f32 %v469, %v632
  %v659 = vmul.f32 %v472, %v632
  %v660 = vmul.f32 %v477, %v632
  %v661 = vmul.f32 %v480, %v632
  %v662 = vmul.f32 %v485, %v632
  %v663 = vmul.f32 %v488, %v632
  %v664 = vmul.f32 %v493, %v632
  %v665 = vmul.f32 %v496, %v632
  %v666 = vmul.f32 %v501, %v632
  %v667 = vmul.f32 %v504, %v632
  %v668 = vmul.f32 %v509, %v632
  %v669 = vmul.f32 %v512, %v632
  %v670 = vmul.f32 %v517, %v632
  %v671 = vmul.f32 %v520, %v632
  %v672 = vmul.f32 %v525, %v632
  %v673 = vmul.f32 %v528, %v632
  %v674 = vmul.f32 %v533, %v632
  %v675 = vmul.f32 %v536, %v632
  %v676 = vmul.f32 %v541, %v632
  %v677 = vmul.f32 %v544, %v632
  %v678 = vmul.f32 %v549, %v632
  %v679 = vmul.f32 %v552, %v632
  %v680 = vmul.f32 %v557, %v632
  %v681 = vmul.f32 %v560, %v632
  %v682 = vmul.f32 %v565, %v632
  %v683 = vmul.f32 %v568, %v632
  %v684 = vmul.f32 %v573, %v632
  %v685 = vmul.f32 %v576, %v632
  %v686 = vmul.f32 %v581, %v632
  %v687 = vmul.f32 %v584, %v632
  %v688 = vmul.f32 %v589, %v632
  %v689 = vmul.f32 %v592, %v632
  %v690 = vmul.f32 %v597, %v632
  %v691 = vmul.f32 %v600, %v632
  %v692 = vmul.f32 %v605, %v632
  %v693 = vmul.f32 %v608, %v632
  %v694 = vmul.f32 %v613, %v632
  %v695 = vmul.f32 %v616, %v632
  %v696 = vmul.f32 %v621, %v632
  %v697 = vmul.f32 %v624, %v632
  %v698 = vld [vmem:[%s3] sm:$0x1]
  %v700 = vlaneseq
  %v701 = vshrl.u32 %v700, 7
  %v702 = vsub.s32 0, %v701
  %v703 = vrot.slane %v698, %v702
  %v705 = vadd.f32 %v634, %v703
  %v706 = vadd.f32 %v635, %v703
  %v707 = vadd.f32 %v636, %v703
  %v708 = vadd.f32 %v637, %v703
  %v709 = vadd.f32 %v638, %v703
  %v710 = vadd.f32 %v639, %v703
  %v711 = vadd.f32 %v640, %v703
  %v712 = vadd.f32 %v641, %v703
  %v713 = vadd.f32 %v642, %v703
  %v714 = vadd.f32 %v643, %v703
  %v715 = vadd.f32 %v644, %v703
  %v716 = vadd.f32 %v645, %v703
  %v717 = vadd.f32 %v646, %v703
  %v718 = vadd.f32 %v647, %v703
  %v719 = vadd.f32 %v648, %v703
  %v720 = vadd.f32 %v649, %v703
  %v721 = vadd.f32 %v650, %v703
  %v722 = vadd.f32 %v651, %v703
  %v723 = vadd.f32 %v652, %v703
  %v724 = vadd.f32 %v653, %v703
  %v725 = vadd.f32 %v654, %v703
  %v726 = vadd.f32 %v655, %v703
  %v727 = vadd.f32 %v656, %v703
  %v728 = vadd.f32 %v657, %v703
  %v729 = vadd.f32 %v658, %v703
  %v730 = vadd.f32 %v659, %v703
  %v731 = vadd.f32 %v660, %v703
  %v732 = vadd.f32 %v661, %v703
  %v733 = vadd.f32 %v662, %v703
  %v734 = vadd.f32 %v663, %v703
  %v735 = vadd.f32 %v664, %v703
  %v736 = vadd.f32 %v665, %v703
  %v737 = vadd.f32 %v666, %v703
  %v738 = vadd.f32 %v667, %v703
  %v739 = vadd.f32 %v668, %v703
  %v740 = vadd.f32 %v669, %v703
  %v741 = vadd.f32 %v670, %v703
  %v742 = vadd.f32 %v671, %v703
  %v743 = vadd.f32 %v672, %v703
  %v744 = vadd.f32 %v673, %v703
  %v745 = vadd.f32 %v674, %v703
  %v746 = vadd.f32 %v675, %v703
  %v747 = vadd.f32 %v676, %v703
  %v748 = vadd.f32 %v677, %v703
  %v749 = vadd.f32 %v678, %v703
  %v750 = vadd.f32 %v679, %v703
  %v751 = vadd.f32 %v680, %v703
  %v752 = vadd.f32 %v681, %v703
  %v753 = vadd.f32 %v682, %v703
  %v754 = vadd.f32 %v683, %v703
  %v755 = vadd.f32 %v684, %v703
  %v756 = vadd.f32 %v685, %v703
  %v757 = vadd.f32 %v686, %v703
  %v758 = vadd.f32 %v687, %v703
  %v759 = vadd.f32 %v688, %v703
  %v760 = vadd.f32 %v689, %v703
  %v761 = vadd.f32 %v690, %v703
  %v762 = vadd.f32 %v691, %v703
  %v763 = vadd.f32 %v692, %v703
  %v764 = vadd.f32 %v693, %v703
  %v765 = vadd.f32 %v694, %v703
  %v766 = vadd.f32 %v695, %v703
  %v767 = vadd.f32 %v696, %v703
  %v768 = vadd.f32 %v697, %v703
  %vm769 = vcmp.gt.f32.partialorder %v705, 0.0
  %vm770 = vcmp.gt.f32.partialorder %v706, 0.0
  %vm771 = vcmp.gt.f32.partialorder %v707, 0.0
  %vm772 = vcmp.gt.f32.partialorder %v708, 0.0
  %vm773 = vcmp.gt.f32.partialorder %v709, 0.0
  %vm774 = vcmp.gt.f32.partialorder %v710, 0.0
  %vm775 = vcmp.gt.f32.partialorder %v711, 0.0
  %vm776 = vcmp.gt.f32.partialorder %v712, 0.0
  %vm777 = vcmp.gt.f32.partialorder %v713, 0.0
  %vm778 = vcmp.gt.f32.partialorder %v714, 0.0
  %vm779 = vcmp.gt.f32.partialorder %v715, 0.0
  %vm780 = vcmp.gt.f32.partialorder %v716, 0.0
  %vm781 = vcmp.gt.f32.partialorder %v717, 0.0
  %vm782 = vcmp.gt.f32.partialorder %v718, 0.0
  %vm783 = vcmp.gt.f32.partialorder %v719, 0.0
  %vm784 = vcmp.gt.f32.partialorder %v720, 0.0
  %vm785 = vcmp.gt.f32.partialorder %v721, 0.0
  %vm786 = vcmp.gt.f32.partialorder %v722, 0.0
  %vm787 = vcmp.gt.f32.partialorder %v723, 0.0
  %vm788 = vcmp.gt.f32.partialorder %v724, 0.0
  %vm789 = vcmp.gt.f32.partialorder %v725, 0.0
  %vm790 = vcmp.gt.f32.partialorder %v726, 0.0
  %vm791 = vcmp.gt.f32.partialorder %v727, 0.0
  %vm792 = vcmp.gt.f32.partialorder %v728, 0.0
  %vm793 = vcmp.gt.f32.partialorder %v729, 0.0
  %vm794 = vcmp.gt.f32.partialorder %v730, 0.0
  %vm795 = vcmp.gt.f32.partialorder %v731, 0.0
  %vm796 = vcmp.gt.f32.partialorder %v732, 0.0
  %vm797 = vcmp.gt.f32.partialorder %v733, 0.0
  %vm798 = vcmp.gt.f32.partialorder %v734, 0.0
  %vm799 = vcmp.gt.f32.partialorder %v735, 0.0
  %vm800 = vcmp.gt.f32.partialorder %v736, 0.0
  %vm801 = vcmp.gt.f32.partialorder %v737, 0.0
  %vm802 = vcmp.gt.f32.partialorder %v738, 0.0
  %vm803 = vcmp.gt.f32.partialorder %v739, 0.0
  %vm804 = vcmp.gt.f32.partialorder %v740, 0.0
  %vm805 = vcmp.gt.f32.partialorder %v741, 0.0
  %vm806 = vcmp.gt.f32.partialorder %v742, 0.0
  %vm807 = vcmp.gt.f32.partialorder %v743, 0.0
  %vm808 = vcmp.gt.f32.partialorder %v744, 0.0
  %vm809 = vcmp.gt.f32.partialorder %v745, 0.0
  %vm810 = vcmp.gt.f32.partialorder %v746, 0.0
  %vm811 = vcmp.gt.f32.partialorder %v747, 0.0
  %vm812 = vcmp.gt.f32.partialorder %v748, 0.0
  %vm813 = vcmp.gt.f32.partialorder %v749, 0.0
  %vm814 = vcmp.gt.f32.partialorder %v750, 0.0
  %vm815 = vcmp.gt.f32.partialorder %v751, 0.0
  %vm816 = vcmp.gt.f32.partialorder %v752, 0.0
  %vm817 = vcmp.gt.f32.partialorder %v753, 0.0
  %vm818 = vcmp.gt.f32.partialorder %v754, 0.0
  %vm819 = vcmp.gt.f32.partialorder %v755, 0.0
  %vm820 = vcmp.gt.f32.partialorder %v756, 0.0
  %vm821 = vcmp.gt.f32.partialorder %v757, 0.0
  %vm822 = vcmp.gt.f32.partialorder %v758, 0.0
  %vm823 = vcmp.gt.f32.partialorder %v759, 0.0
  %vm824 = vcmp.gt.f32.partialorder %v760, 0.0
  %vm825 = vcmp.gt.f32.partialorder %v761, 0.0
  %vm826 = vcmp.gt.f32.partialorder %v762, 0.0
  %vm827 = vcmp.gt.f32.partialorder %v763, 0.0
  %vm828 = vcmp.gt.f32.partialorder %v764, 0.0
  %vm829 = vcmp.gt.f32.partialorder %v765, 0.0
  %vm830 = vcmp.gt.f32.partialorder %v766, 0.0
  %vm831 = vcmp.gt.f32.partialorder %v767, 0.0
  %vm832 = vcmp.gt.f32.partialorder %v768, 0.0
  %v833 = vmul.f32 %v705, 0.2
  %v834 = vmul.f32 %v706, 0.2
  %v835 = vmul.f32 %v707, 0.2
  %v836 = vmul.f32 %v708, 0.2
  %v837 = vmul.f32 %v709, 0.2
  %v838 = vmul.f32 %v710, 0.2
  %v839 = vmul.f32 %v711, 0.2
  %v840 = vmul.f32 %v712, 0.2
  %v841 = vmul.f32 %v713, 0.2
  %v842 = vmul.f32 %v714, 0.2
  %v843 = vmul.f32 %v715, 0.2
  %v844 = vmul.f32 %v716, 0.2
  %v845 = vmul.f32 %v717, 0.2
  %v846 = vmul.f32 %v718, 0.2
  %v847 = vmul.f32 %v719, 0.2
  %v848 = vmul.f32 %v720, 0.2
  %v849 = vmul.f32 %v721, 0.2
  %v850 = vmul.f32 %v722, 0.2
  %v851 = vmul.f32 %v723, 0.2
  %v852 = vmul.f32 %v724, 0.2
  %v853 = vmul.f32 %v725, 0.2
  %v854 = vmul.f32 %v726, 0.2
  %v855 = vmul.f32 %v727, 0.2
  %v856 = vmul.f32 %v728, 0.2
  %v857 = vmul.f32 %v729, 0.2
  %v858 = vmul.f32 %v730, 0.2
  %v859 = vmul.f32 %v731, 0.2
  %v860 = vmul.f32 %v732, 0.2
  %v861 = vmul.f32 %v733, 0.2
  %v862 = vmul.f32 %v734, 0.2
  %v863 = vmul.f32 %v735, 0.2
  %v864 = vmul.f32 %v736, 0.2
  %v865 = vmul.f32 %v737, 0.2
  %v866 = vmul.f32 %v738, 0.2
  %v867 = vmul.f32 %v739, 0.2
  %v868 = vmul.f32 %v740, 0.2
  %v869 = vmul.f32 %v741, 0.2
  %v870 = vmul.f32 %v742, 0.2
  %v871 = vmul.f32 %v743, 0.2
  %v872 = vmul.f32 %v744, 0.2
  %v873 = vmul.f32 %v745, 0.2
  %v874 = vmul.f32 %v746, 0.2
  %v875 = vmul.f32 %v747, 0.2
  %v876 = vmul.f32 %v748, 0.2
  %v877 = vmul.f32 %v749, 0.2
  %v878 = vmul.f32 %v750, 0.2
  %v879 = vmul.f32 %v751, 0.2
  %v880 = vmul.f32 %v752, 0.2
  %v881 = vmul.f32 %v753, 0.2
  %v882 = vmul.f32 %v754, 0.2
  %v883 = vmul.f32 %v755, 0.2
  %v884 = vmul.f32 %v756, 0.2
  %v885 = vmul.f32 %v757, 0.2
  %v886 = vmul.f32 %v758, 0.2
  %v887 = vmul.f32 %v759, 0.2
  %v888 = vmul.f32 %v760, 0.2
  %v889 = vmul.f32 %v761, 0.2
  %v890 = vmul.f32 %v762, 0.2
  %v891 = vmul.f32 %v763, 0.2
  %v892 = vmul.f32 %v764, 0.2
  %v893 = vmul.f32 %v765, 0.2
  %v894 = vmul.f32 %v766, 0.2
  %v895 = vmul.f32 %v767, 0.2
  %v896 = vmul.f32 %v768, 0.2
  %v897 = vsel %vm769, %v705, %v833
  %v898 = vsel %vm770, %v706, %v834
  %v899 = vsel %vm771, %v707, %v835
  %v900 = vsel %vm772, %v708, %v836
  %v901 = vsel %vm773, %v709, %v837
  %v902 = vsel %vm774, %v710, %v838
  %v903 = vsel %vm775, %v711, %v839
  %v904 = vsel %vm776, %v712, %v840
  %v905 = vsel %vm777, %v713, %v841
  %v906 = vsel %vm778, %v714, %v842
  %v907 = vsel %vm779, %v715, %v843
  %v908 = vsel %vm780, %v716, %v844
  %v909 = vsel %vm781, %v717, %v845
  %v910 = vsel %vm782, %v718, %v846
  %v911 = vsel %vm783, %v719, %v847
  %v912 = vsel %vm784, %v720, %v848
  %v913 = vsel %vm785, %v721, %v849
  %v914 = vsel %vm786, %v722, %v850
  %v915 = vsel %vm787, %v723, %v851
  %v916 = vsel %vm788, %v724, %v852
  %v917 = vsel %vm789, %v725, %v853
  %v918 = vsel %vm790, %v726, %v854
  %v919 = vsel %vm791, %v727, %v855
  %v920 = vsel %vm792, %v728, %v856
  %v921 = vsel %vm793, %v729, %v857
  %v922 = vsel %vm794, %v730, %v858
  %v923 = vsel %vm795, %v731, %v859
  %v924 = vsel %vm796, %v732, %v860
  %v925 = vsel %vm797, %v733, %v861
  %v926 = vsel %vm798, %v734, %v862
  %v927 = vsel %vm799, %v735, %v863
  %v928 = vsel %vm800, %v736, %v864
  %v929 = vsel %vm801, %v737, %v865
  %v930 = vsel %vm802, %v738, %v866
  %v931 = vsel %vm803, %v739, %v867
  %v932 = vsel %vm804, %v740, %v868
  %v933 = vsel %vm805, %v741, %v869
  %v934 = vsel %vm806, %v742, %v870
  %v935 = vsel %vm807, %v743, %v871
  %v936 = vsel %vm808, %v744, %v872
  %v937 = vsel %vm809, %v745, %v873
  %v938 = vsel %vm810, %v746, %v874
  %v939 = vsel %vm811, %v747, %v875
  %v940 = vsel %vm812, %v748, %v876
  %v941 = vsel %vm813, %v749, %v877
  %v942 = vsel %vm814, %v750, %v878
  %v943 = vsel %vm815, %v751, %v879
  %v944 = vsel %vm816, %v752, %v880
  %v945 = vsel %vm817, %v753, %v881
  %v946 = vsel %vm818, %v754, %v882
  %v947 = vsel %vm819, %v755, %v883
  %v948 = vsel %vm820, %v756, %v884
  %v949 = vsel %vm821, %v757, %v885
  %v950 = vsel %vm822, %v758, %v886
  %v951 = vsel %vm823, %v759, %v887
  %v952 = vsel %vm824, %v760, %v888
  %v953 = vsel %vm825, %v761, %v889
  %v954 = vsel %vm826, %v762, %v890
  %v955 = vsel %vm827, %v763, %v891
  %v956 = vsel %vm828, %v764, %v892
  %v957 = vsel %vm829, %v765, %v893
  %v958 = vsel %vm830, %v766, %v894
  %v959 = vsel %vm831, %v767, %v895
  %v960 = vsel %vm832, %v768, %v896
  %961 = vst [vmem:[%s4] sm:$0xff] %v897
  %962 = vst [vmem:[%s4 + $0x8] sm:$0xff] %v898
  %963 = vst [vmem:[%s4 + $0x10] sm:$0xff] %v899
  %964 = vst [vmem:[%s4 + $0x18] sm:$0xff] %v900
  %965 = vst [vmem:[%s4 + $0x20] sm:$0xff] %v901
  %966 = vst [vmem:[%s4 + $0x28] sm:$0xff] %v902
  %967 = vst [vmem:[%s4 + $0x30] sm:$0xff] %v903
  %968 = vst [vmem:[%s4 + $0x38] sm:$0xff] %v904
  %969 = vst [vmem:[%s4 + $0x40] sm:$0xff] %v905
  %970 = vst [vmem:[%s4 + $0x48] sm:$0xff] %v906
  %971 = vst [vmem:[%s4 + $0x50] sm:$0xff] %v907
  %972 = vst [vmem:[%s4 + $0x58] sm:$0xff] %v908
  %973 = vst [vmem:[%s4 + $0x60] sm:$0xff] %v909
  %974 = vst [vmem:[%s4 + $0x68] sm:$0xff] %v910
  %975 = vst [vmem:[%s4 + $0x70] sm:$0xff] %v911
  %976 = vst [vmem:[%s4 + $0x78] sm:$0xff] %v912
  %977 = vst [vmem:[%s4 + $0x80] sm:$0xff] %v913
  %978 = vst [vmem:[%s4 + $0x88] sm:$0xff] %v914
  %979 = vst [vmem:[%s4 + $0x90] sm:$0xff] %v915
  %980 = vst [vmem:[%s4 + $0x98] sm:$0xff] %v916
  %981 = vst [vmem:[%s4 + $0xa0] sm:$0xff] %v917
  %982 = vst [vmem:[%s4 + $0xa8] sm:$0xff] %v918
  %983 = vst [vmem:[%s4 + $0xb0] sm:$0xff] %v919
  %984 = vst [vmem:[%s4 + $0xb8] sm:$0xff] %v920
  %985 = vst [vmem:[%s4 + $0xc0] sm:$0xff] %v921
  %986 = vst [vmem:[%s4 + $0xc8] sm:$0xff] %v922
  %987 = vst [vmem:[%s4 + $0xd0] sm:$0xff] %v923
  %988 = vst [vmem:[%s4 + $0xd8] sm:$0xff] %v924
  %989 = vst [vmem:[%s4 + $0xe0] sm:$0xff] %v925
  %990 = vst [vmem:[%s4 + $0xe8] sm:$0xff] %v926
  %991 = vst [vmem:[%s4 + $0xf0] sm:$0xff] %v927
  %992 = vst [vmem:[%s4 + $0xf8] sm:$0xff] %v928
  %993 = vst [vmem:[%s4 + $0x100] sm:$0xff] %v929
  %994 = vst [vmem:[%s4 + $0x108] sm:$0xff] %v930
  %995 = vst [vmem:[%s4 + $0x110] sm:$0xff] %v931
  %996 = vst [vmem:[%s4 + $0x118] sm:$0xff] %v932
  %997 = vst [vmem:[%s4 + $0x120] sm:$0xff] %v933
  %998 = vst [vmem:[%s4 + $0x128] sm:$0xff] %v934
  %999 = vst [vmem:[%s4 + $0x130] sm:$0xff] %v935
  %1000 = vst [vmem:[%s4 + $0x138] sm:$0xff] %v936
  %1001 = vst [vmem:[%s4 + $0x140] sm:$0xff] %v937
  %1002 = vst [vmem:[%s4 + $0x148] sm:$0xff] %v938
  %1003 = vst [vmem:[%s4 + $0x150] sm:$0xff] %v939
  %1004 = vst [vmem:[%s4 + $0x158] sm:$0xff] %v940
  %1005 = vst [vmem:[%s4 + $0x160] sm:$0xff] %v941
  %1006 = vst [vmem:[%s4 + $0x168] sm:$0xff] %v942
  %1007 = vst [vmem:[%s4 + $0x170] sm:$0xff] %v943
  %1008 = vst [vmem:[%s4 + $0x178] sm:$0xff] %v944
  %1009 = vst [vmem:[%s4 + $0x180] sm:$0xff] %v945
  %1010 = vst [vmem:[%s4 + $0x188] sm:$0xff] %v946
  %1011 = vst [vmem:[%s4 + $0x190] sm:$0xff] %v947
  %1012 = vst [vmem:[%s4 + $0x198] sm:$0xff] %v948
  %1013 = vst [vmem:[%s4 + $0x1a0] sm:$0xff] %v949
  %1014 = vst [vmem:[%s4 + $0x1a8] sm:$0xff] %v950
  %1015 = vst [vmem:[%s4 + $0x1b0] sm:$0xff] %v951
  %1016 = vst [vmem:[%s4 + $0x1b8] sm:$0xff] %v952
  %1017 = vst [vmem:[%s4 + $0x1c0] sm:$0xff] %v953
  %1018 = vst [vmem:[%s4 + $0x1c8] sm:$0xff] %v954
  %1019 = vst [vmem:[%s4 + $0x1d0] sm:$0xff] %v955
  %1020 = vst [vmem:[%s4 + $0x1d8] sm:$0xff] %v956
  %1021 = vst [vmem:[%s4 + $0x1e0] sm:$0xff] %v957
  %1022 = vst [vmem:[%s4 + $0x1e8] sm:$0xff] %v958
  %1023 = vst [vmem:[%s4 + $0x1f0] sm:$0xff] %v959
  %1024 = vst [vmem:[%s4 + $0x1f8] sm:$0xff] %v960
  // Predicated region
  $region18: #{forward.7} parent=0 // pred_check
    _
  $region19: #{forward.7} parent=0 // pred_check_branch
    %1026 = sbr.rel (0) target = $region21
  $region20: #{forward.7} parent=0 // pred_region
    _
  $region21: #{forward.7} parent=0 // pred_fallthru
    _
  // Predicated region
  $region22: #{forward.7} parent=0 // pred_check
    _
  $region23: #{forward.7} parent=0 // pred_check_branch
    %1028 = sbr.rel (0) target = $region25
  $region24: #{forward.7} parent=0 // pred_region
    _
  $region25: #{forward.7} parent=0 // pred_fallthru
    _

// kernel: forward.8
$region0: #{forward.8}
  #allocation0 [shape = 'u32[]', space=smem, size = 0x4, offset = 0x4, fixed_abs, tag = 'smem constant byte address 0x4 - core index']
  #allocation1 [shape = 'u32[144,128]{1,0:T(1,128)}', space=vmem, size = 0x12000, scoped, tag = 'internal scratch']
  %s0 = inlined_call_operand.vmem [shape: bf16[128,256], index: 0, kind: input, shape index: {}]
  %s1 = inlined_call_operand.vmem [shape: bf16[256,128], index: 1, kind: input, shape index: {}]
  %s2 = inlined_call_operand.vmem [shape: f32[1,128], index: 2, kind: input, shape index: {}]
  %s3 = inlined_call_operand.vmem [shape: f32[1,128], index: 3, kind: input, shape index: {}]
  %s4 = inlined_call_operand.vmem [shape: f32[128,128], index: 4, kind: output, shape index: {}]
  %s5 = sld [smem:[#allocation0]]
  $region26: #{forward.8} parent=0
    _
  %s7 = ssub.s32 1, %s5
  %s8 = scalar_select 0, %s7, %s5
  // Predicated region
  $region2: #{forward.8} parent=0 // pred_check
    _
  $region3: #{forward.8} parent=0 // pred_check_branch
    %10 = sbr.rel (0) target = $region5
  $region4: #{forward.8} parent=0 // pred_region
    _
  $region5: #{forward.8} parent=0 // pred_fallthru
    _
  // Predicated region
  $region6: #{forward.8} parent=0 // pred_check
    _
  $region7: #{forward.8} parent=0 // pred_check_branch
    %12 = sbr.rel (0) target = $region9
  $region8: #{forward.8} parent=0 // pred_region
    _
  $region9: #{forward.8} parent=0 // pred_fallthru
    _
  // Predicated region
  $region10: #{forward.8} parent=0 // pred_check
    _
  $region11: #{forward.8} parent=0 // pred_check_branch
    %14 = sbr.rel (0) target = $region13
  $region12: #{forward.8} parent=0 // pred_region
    _
  $region13: #{forward.8} parent=0 // pred_fallthru
    _
  // Predicated region
  $region14: #{forward.8} parent=0 // pred_check
    _
  $region15: #{forward.8} parent=0 // pred_check_branch
    %16 = sbr.rel (0) target = $region17
  $region16: #{forward.8} parent=0 // pred_region
    _
  $region17: #{forward.8} parent=0 // pred_fallthru
    _
  %v18 = vld [vmem:[%s0] sm:$0xff]
  %v19 = vld [vmem:[%s0 + $0x8] sm:$0xff]
  %v20 = vld [vmem:[%s0 + $0x10] sm:$0xff]
  %v21 = vld [vmem:[%s0 + $0x18] sm:$0xff]
  %v22 = vld [vmem:[%s0 + $0x20] sm:$0xff]
  %v23 = vld [vmem:[%s0 + $0x28] sm:$0xff]
  %v24 = vld [vmem:[%s0 + $0x30] sm:$0xff]
  %v25 = vld [vmem:[%s0 + $0x38] sm:$0xff]
  %v26 = vld [vmem:[%s0 + $0x40] sm:$0xff]
  %v27 = vld [vmem:[%s0 + $0x48] sm:$0xff]
  %v28 = vld [vmem:[%s0 + $0x50] sm:$0xff]
  %v29 = vld [vmem:[%s0 + $0x58] sm:$0xff]
  %v30 = vld [vmem:[%s0 + $0x60] sm:$0xff]
  %v31 = vld [vmem:[%s0 + $0x68] sm:$0xff]
  %v32 = vld [vmem:[%s0 + $0x70] sm:$0xff]
  %v33 = vld [vmem:[%s0 + $0x78] sm:$0xff]
  %v34 = vld [vmem:[%s1] sm:$0xf]
  %v35 = vld [vmem:[%s1 + $0x4] sm:$0xf]
  %v36 = vld [vmem:[%s1 + $0x8] sm:$0xf]
  %v37 = vld [vmem:[%s1 + $0xc] sm:$0xf]
  %v38 = vld [vmem:[%s1 + $0x10] sm:$0xf]
  %v39 = vld [vmem:[%s1 + $0x14] sm:$0xf]
  %v40 = vld [vmem:[%s1 + $0x18] sm:$0xf]
  %v41 = vld [vmem:[%s1 + $0x1c] sm:$0xf]
  %v42 = vld [vmem:[%s1 + $0x20] sm:$0xf]
  %v43 = vld [vmem:[%s1 + $0x24] sm:$0xf]
  %v44 = vld [vmem:[%s1 + $0x28] sm:$0xf]
  %v45 = vld [vmem:[%s1 + $0x2c] sm:$0xf]
  %v46 = vld [vmem:[%s1 + $0x30] sm:$0xf]
  %v47 = vld [vmem:[%s1 + $0x34] sm:$0xf]
  %v48 = vld [vmem:[%s1 + $0x38] sm:$0xf]
  %v49 = vld [vmem:[%s1 + $0x3c] sm:$0xf]
  %v50 = vld [vmem:[%s1 + $0x40] sm:$0xf]
  %v51 = vld [vmem:[%s1 + $0x44] sm:$0xf]
  %v52 = vld [vmem:[%s1 + $0x48] sm:$0xf]
  %v53 = vld [vmem:[%s1 + $0x4c] sm:$0xf]
  %v54 = vld [vmem:[%s1 + $0x50] sm:$0xf]
  %v55 = vld [vmem:[%s1 + $0x54] sm:$0xf]
  %v56 = vld [vmem:[%s1 + $0x58] sm:$0xf]
  %v57 = vld [vmem:[%s1 + $0x5c] sm:$0xf]
  %v58 = vld [vmem:[%s1 + $0x60] sm:$0xf]
  %v59 = vld [vmem:[%s1 + $0x64] sm:$0xf]
  %v60 = vld [vmem:[%s1 + $0x68] sm:$0xf]
  %v61 = vld [vmem:[%s1 + $0x6c] sm:$0xf]
  %v62 = vld [vmem:[%s1 + $0x70] sm:$0xf]
  %v63 = vld [vmem:[%s1 + $0x74] sm:$0xf]
  %v64 = vld [vmem:[%s1 + $0x78] sm:$0xf]
  %v65 = vld [vmem:[%s1 + $0x7c] sm:$0xf]
  %v82 = vunpack.c.l.b16 %v18
  %v83 = vunpack.c.h.b16 %v18
  %v84 = vunpack.c.l.b16 %v19
  %v85 = vunpack.c.h.b16 %v19
  %v86 = vunpack.c.l.b16 %v20
  %v87 = vunpack.c.h.b16 %v20
  %v88 = vunpack.c.l.b16 %v21
  %v89 = vunpack.c.h.b16 %v21
  %v90 = vunpack.c.l.b16 %v22
  %v91 = vunpack.c.h.b16 %v22
  %v92 = vunpack.c.l.b16 %v23
  %v93 = vunpack.c.h.b16 %v23
  %v94 = vunpack.c.l.b16 %v24
  %v95 = vunpack.c.h.b16 %v24
  %v96 = vunpack.c.l.b16 %v25
  %v97 = vunpack.c.h.b16 %v25
  %v98 = vunpack.c.l.b16 %v26
  %v99 = vunpack.c.h.b16 %v26
  %v100 = vunpack.c.l.b16 %v27
  %v101 = vunpack.c.h.b16 %v27
  %v102 = vunpack.c.l.b16 %v28
  %v103 = vunpack.c.h.b16 %v28
  %v104 = vunpack.c.l.b16 %v29
  %v105 = vunpack.c.h.b16 %v29
  %v106 = vunpack.c.l.b16 %v30
  %v107 = vunpack.c.h.b16 %v30
  %v108 = vunpack.c.l.b16 %v31
  %v109 = vunpack.c.h.b16 %v31
  %v110 = vunpack.c.l.b16 %v32
  %v111 = vunpack.c.h.b16 %v32
  %v112 = vunpack.c.l.b16 %v33
  %v113 = vunpack.c.h.b16 %v33
  %v114 = vpack.c.b16 %v84, %v82
  %v115 = vpack.c.b16 %v85, %v83
  %v116 = vpack.c.b16 %v88, %v86
  %v117 = vpack.c.b16 %v89, %v87
  %v118 = vpack.c.b16 %v92, %v90
  %v119 = vpack.c.b16 %v93, %v91
  %v120 = vpack.c.b16 %v96, %v94
  %v121 = vpack.c.b16 %v97, %v95
  %v122 = vpack.c.b16 %v100, %v98
  %v123 = vpack.c.b16 %v101, %v99
  %v124 = vpack.c.b16 %v104, %v102
  %v125 = vpack.c.b16 %v105, %v103
  %v126 = vpack.c.b16 %v108, %v106
  %v127 = vpack.c.b16 %v109, %v107
  %v128 = vpack.c.b16 %v112, %v110
  %v129 = vpack.c.b16 %v113, %v111
  %v178 = vunpack.c.l.b16 %v34
  %v179 = vunpack.c.l.b16 %v35
  %v180 = vunpack.c.l.b16 %v36
  %v181 = vunpack.c.l.b16 %v37
  %v182 = vunpack.c.l.b16 %v38
  %v183 = vunpack.c.l.b16 %v39
  %v184 = vunpack.c.l.b16 %v40
  %v185 = vunpack.c.l.b16 %v41
  %v186 = vunpack.c.l.b16 %v42
  %v187 = vunpack.c.l.b16 %v43
  %v188 = vunpack.c.l.b16 %v44
  %v189 = vunpack.c.l.b16 %v45
  %v190 = vunpack.c.l.b16 %v46
  %v191 = vunpack.c.l.b16 %v47
  %v192 = vunpack.c.l.b16 %v48
  %v193 = vunpack.c.l.b16 %v49
  %v194 = vunpack.c.l.b16 %v50
  %v195 = vunpack.c.l.b16 %v51
  %v196 = vunpack.c.l.b16 %v52
  %v197 = vunpack.c.l.b16 %v53
  %v198 = vunpack.c.l.b16 %v54
  %v199 = vunpack.c.l.b16 %v55
  %v200 = vunpack.c.l.b16 %v56
  %v201 = vunpack.c.l.b16 %v57
  %v202 = vunpack.c.l.b16 %v58
  %v203 = vunpack.c.l.b16 %v59
  %v204 = vunpack.c.l.b16 %v60
  %v205 = vunpack.c.l.b16 %v61
  %v206 = vunpack.c.l.b16 %v62
  %v207 = vunpack.c.l.b16 %v63
  %v208 = vunpack.c.l.b16 %v64
  %v209 = vunpack.c.l.b16 %v65
  %v210 = vpack.c.b16 %v179, %v178
  %v211 = vpack.c.b16 %v181, %v180
  %v212 = vpack.c.b16 %v183, %v182
  %v213 = vpack.c.b16 %v185, %v184
  %v214 = vpack.c.b16 %v187, %v186
  %v215 = vpack.c.b16 %v189, %v188
  %v216 = vpack.c.b16 %v191, %v190
  %v217 = vpack.c.b16 %v193, %v192
  %v218 = vpack.c.b16 %v195, %v194
  %v219 = vpack.c.b16 %v197, %v196
  %v220 = vpack.c.b16 %v199, %v198
  %v221 = vpack.c.b16 %v201, %v200
  %v222 = vpack.c.b16 %v203, %v202
  %v223 = vpack.c.b16 %v205, %v204
  %v224 = vpack.c.b16 %v207, %v206
  %v225 = vpack.c.b16 %v209, %v208
  %242 = vmatprep.subr.bf16.mxu0 0
  %243 = vmatpush1.bf16.msra.mxu0 %v210
  %244 = vmatprep.subr.bf16.mxu0 0
  %245 = vmatpush1.bf16.msra.mxu0 %v211
  %246 = vmatprep.subr.bf16.mxu0 0
  %247 = vmatpush1.bf16.msra.mxu0 %v212
  %248 = vmatprep.subr.bf16.mxu0 0
  %249 = vmatpush1.bf16.msra.mxu0 %v213
  %250 = vmatprep.subr.bf16.mxu0 0
  %251 = vmatpush1.bf16.msra.mxu0 %v214
  %252 = vmatprep.subr.bf16.mxu0 0
  %253 = vmatpush1.bf16.msra.mxu0 %v215
  %254 = vmatprep.subr.bf16.mxu0 0
  %255 = vmatpush1.bf16.msra.mxu0 %v216
  %256 = vmatprep.subr.bf16.mxu0 0
  %257 = vmatpush1.bf16.msra.mxu0 %v217
  %258 = vmatprep.subr.bf16.mxu0 0
  %259 = vmatpush1.bf16.msra.mxu0 %v218
  %260 = vmatprep.subr.bf16.mxu0 0
  %261 = vmatpush1.bf16.msra.mxu0 %v219
  %262 = vmatprep.subr.bf16.mxu0 0
  %263 = vmatpush1.bf16.msra.mxu0 %v220
  %264 = vmatprep.subr.bf16.mxu0 0
  %265 = vmatpush1.bf16.msra.mxu0 %v221
  %266 = vmatprep.subr.bf16.mxu0 0
  %267 = vmatpush1.bf16.msra.mxu0 %v222
  %268 = vmatprep.subr.bf16.mxu0 0
  %269 = vmatpush1.bf16.msra.mxu0 %v223
  %270 = vmatprep.subr.bf16.mxu0 0
  %271 = vmatpush1.bf16.msra.mxu0 %v224
  %272 = vmatprep.subr.bf16.mxu0 0
  %273 = vmatpush1.bf16.msra.mxu0 %v225
  %274 = vmatprep.mubr.bf16.mxu0 %v115
  %275 = vmatmul.mubr.bf16.gmra.mrb[0].mxu0 %v114
  %v276 = vpop.f32.mrb[0].mxu0
  %v277 = vadd.f32 0.0, %v276
  %v278 = vpop.f32.mrb[0].mxu0
  %v279 = vpop.f32.mrb[0].mxu0
  %v280 = vadd.f32 0.0, %v279
  %v281 = vpop.f32.mrb[0].mxu0
  %282 = vmatprep.mubr.bf16.mxu0 %v117
  %283 = vmatmul.mubr.bf16.gmra.mrb[0].mxu0 %v116
  %v284 = vpop.f32.mrb[0].mxu0
  %v285 = vadd.f32 0.0, %v284
  %v286 = vpop.f32.mrb[0].mxu0
  %v287 = vpop.f32.mrb[0].mxu0
  %v288 = vadd.f32 0.0, %v287
  %v289 = vpop.f32.mrb[0].mxu0
  %290 = vmatprep.mubr.bf16.mxu0 %v119
  %291 = vmatmul.mubr.bf16.gmra.mrb[0].mxu0 %v118
  %v292 = vpop.f32.mrb[0].mxu0
  %v293 = vadd.f32 0.0, %v292
  %v294 = vpop.f32.mrb[0].mxu0
  %v295 = vpop.f32.mrb[0].mxu0
  %v296 = vadd.f32 0.0, %v295
  %v297 = vpop.f32.mrb[0].mxu0
  %298 = vmatprep.mubr.bf16.mxu0 %v121
  %299 = vmatmul.mubr.bf16.gmra.mrb[0].mxu0 %v120
  %v300 = vpop.f32.mrb[0].mxu0
  %v301 = vadd.f32 0.0, %v300
  %v302 = vpop.f32.mrb[0].mxu0
  %v303 = vpop.f32.mrb[0].mxu0
  %v304 = vadd.f32 0.0, %v303
  %v305 = vpop.f32.mrb[0].mxu0
  %306 = vmatprep.mubr.bf16.mxu0 %v123
  %307 = vmatmul.mubr.bf16.gmra.mrb[0].mxu0 %v122
  %v308 = vpop.f32.mrb[0].mxu0
  %v309 = vadd.f32 0.0, %v308
  %v310 = vpop.f32.mrb[0].mxu0
  %v311 = vpop.f32.mrb[0].mxu0
  %v312 = vadd.f32 0.0, %v311
  %v313 = vpop.f32.mrb[0].mxu0
  %314 = vmatprep.mubr.bf16.mxu0 %v125
  %315 = vmatmul.mubr.bf16.gmra.mrb[0].mxu0 %v124
  %v316 = vpop.f32.mrb[0].mxu0
  %v317 = vadd.f32 0.0, %v316
  %v318 = vpop.f32.mrb[0].mxu0
  %v319 = vpop.f32.mrb[0].mxu0
  %v320 = vadd.f32 0.0, %v319
  %v321 = vpop.f32.mrb[0].mxu0
  %322 = vmatprep.mubr.bf16.mxu0 %v127
  %323 = vmatmul.mubr.bf16.gmra.mrb[0].mxu0 %v126
  %v324 = vpop.f32.mrb[0].mxu0
  %v325 = vadd.f32 0.0, %v324
  %v326 = vpop.f32.mrb[0].mxu0
  %v327 = vpop.f32.mrb[0].mxu0
  %v328 = vadd.f32 0.0, %v327
  %v329 = vpop.f32.mrb[0].mxu0
  %330 = vmatprep.mubr.bf16.mxu0 %v129
  %331 = vmatmul.mubr.bf16.gmra.mrb[0].mxu0 %v128
  %v332 = vpop.f32.mrb[0].mxu0
  %v333 = vadd.f32 0.0, %v332
  %v334 = vpop.f32.mrb[0].mxu0
  %v335 = vpop.f32.mrb[0].mxu0
  %v336 = vadd.f32 0.0, %v335
  %v337 = vpop.f32.mrb[0].mxu0
  %338 = vdwg.mxu0
  %v339 = vld [vmem:[%s2] sm:$0x1]
  %v341 = vlaneseq
  %v342 = vshrl.u32 %v341, 7
  %v343 = vsub.s32 0, %v342
  %v344 = vrot.slane %v339, %v343
  %v346 = vmul.f32 %v277, %v344
  %v347 = vmul.f32 %v280, %v344
  %v348 = vmul.f32 %v285, %v344
  %v349 = vmul.f32 %v288, %v344
  %v350 = vmul.f32 %v293, %v344
  %v351 = vmul.f32 %v296, %v344
  %v352 = vmul.f32 %v301, %v344
  %v353 = vmul.f32 %v304, %v344
  %v354 = vmul.f32 %v309, %v344
  %v355 = vmul.f32 %v312, %v344
  %v356 = vmul.f32 %v317, %v344
  %v357 = vmul.f32 %v320, %v344
  %v358 = vmul.f32 %v325, %v344
  %v359 = vmul.f32 %v328, %v344
  %v360 = vmul.f32 %v333, %v344
  %v361 = vmul.f32 %v336, %v344
  %v362 = vld [vmem:[%s3] sm:$0x1]
  %v364 = vlaneseq
  %v365 = vshrl.u32 %v364, 7
  %v366 = vsub.s32 0, %v365
  %v367 = vrot.slane %v362, %v366
  %v369 = vadd.f32 %v346, %v367
  %v370 = vadd.f32 %v347, %v367
  %v371 = vadd.f32 %v348, %v367
  %v372 = vadd.f32 %v349, %v367
  %v373 = vadd.f32 %v350, %v367
  %v374 = vadd.f32 %v351, %v367
  %v375 = vadd.f32 %v352, %v367
  %v376 = vadd.f32 %v353, %v367
  %v377 = vadd.f32 %v354, %v367
  %v378 = vadd.f32 %v355, %v367
  %v379 = vadd.f32 %v356, %v367
  %v380 = vadd.f32 %v357, %v367
  %v381 = vadd.f32 %v358, %v367
  %v382 = vadd.f32 %v359, %v367
  %v383 = vadd.f32 %v360, %v367
  %v384 = vadd.f32 %v361, %v367
  %vm385 = vcmp.gt.f32.partialorder %v369, 0.0
  %vm386 = vcmp.gt.f32.partialorder %v370, 0.0
  %vm387 = vcmp.gt.f32.partialorder %v371, 0.0
  %vm388 = vcmp.gt.f32.partialorder %v372, 0.0
  %vm389 = vcmp.gt.f32.partialorder %v373, 0.0
  %vm390 = vcmp.gt.f32.partialorder %v374, 0.0
  %vm391 = vcmp.gt.f32.partialorder %v375, 0.0
  %vm392 = vcmp.gt.f32.partialorder %v376, 0.0
  %vm393 = vcmp.gt.f32.partialorder %v377, 0.0
  %vm394 = vcmp.gt.f32.partialorder %v378, 0.0
  %vm395 = vcmp.gt.f32.partialorder %v379, 0.0
  %vm396 = vcmp.gt.f32.partialorder %v380, 0.0
  %vm397 = vcmp.gt.f32.partialorder %v381, 0.0
  %vm398 = vcmp.gt.f32.partialorder %v382, 0.0
  %vm399 = vcmp.gt.f32.partialorder %v383, 0.0
  %vm400 = vcmp.gt.f32.partialorder %v384, 0.0
  %v401 = vmul.f32 %v369, 0.2
  %v402 = vmul.f32 %v370, 0.2
  %v403 = vmul.f32 %v371, 0.2
  %v404 = vmul.f32 %v372, 0.2
  %v405 = vmul.f32 %v373, 0.2
  %v406 = vmul.f32 %v374, 0.2
  %v407 = vmul.f32 %v375, 0.2
  %v408 = vmul.f32 %v376, 0.2
  %v409 = vmul.f32 %v377, 0.2
  %v410 = vmul.f32 %v378, 0.2
  %v411 = vmul.f32 %v379, 0.2
  %v412 = vmul.f32 %v380, 0.2
  %v413 = vmul.f32 %v381, 0.2
  %v414 = vmul.f32 %v382, 0.2
  %v415 = vmul.f32 %v383, 0.2
  %v416 = vmul.f32 %v384, 0.2
  %v417 = vsel %vm385, %v369, %v401
  %v418 = vsel %vm386, %v370, %v402
  %v419 = vsel %vm387, %v371, %v403
  %v420 = vsel %vm388, %v372, %v404
  %v421 = vsel %vm389, %v373, %v405
  %v422 = vsel %vm390, %v374, %v406
  %v423 = vsel %vm391, %v375, %v407
  %v424 = vsel %vm392, %v376, %v408
  %v425 = vsel %vm393, %v377, %v409
  %v426 = vsel %vm394, %v378, %v410
  %v427 = vsel %vm395, %v379, %v411
  %v428 = vsel %vm396, %v380, %v412
  %v429 = vsel %vm397, %v381, %v413
  %v430 = vsel %vm398, %v382, %v414
  %v431 = vsel %vm399, %v383, %v415
  %v432 = vsel %vm400, %v384, %v416
  %433 = vst [vmem:[%s4] sm:$0xff] %v417
  %434 = vst [vmem:[%s4 + $0x8] sm:$0xff] %v418
  %435 = vst [vmem:[%s4 + $0x10] sm:$0xff] %v419
  %436 = vst [vmem:[%s4 + $0x18] sm:$0xff] %v420
  %437 = vst [vmem:[%s4 + $0x20] sm:$0xff] %v421
  %438 = vst [vmem:[%s4 + $0x28] sm:$0xff] %v422
  %439 = vst [vmem:[%s4 + $0x30] sm:$0xff] %v423
  %440 = vst [vmem:[%s4 + $0x38] sm:$0xff] %v424
  %441 = vst [vmem:[%s4 + $0x40] sm:$0xff] %v425
  %442 = vst [vmem:[%s4 + $0x48] sm:$0xff] %v426
  %443 = vst [vmem:[%s4 + $0x50] sm:$0xff] %v427
  %444 = vst [vmem:[%s4 + $0x58] sm:$0xff] %v428
  %445 = vst [vmem:[%s4 + $0x60] sm:$0xff] %v429
  %446 = vst [vmem:[%s4 + $0x68] sm:$0xff] %v430
  %447 = vst [vmem:[%s4 + $0x70] sm:$0xff] %v431
  %448 = vst [vmem:[%s4 + $0x78] sm:$0xff] %v432
  // Predicated region
  $region18: #{forward.8} parent=0 // pred_check
    _
  $region19: #{forward.8} parent=0 // pred_check_branch
    %450 = sbr.rel (0) target = $region21
  $region20: #{forward.8} parent=0 // pred_region
    _
  $region21: #{forward.8} parent=0 // pred_fallthru
    _
  // Predicated region
  $region22: #{forward.8} parent=0 // pred_check
    _
  $region23: #{forward.8} parent=0 // pred_check_branch
    %452 = sbr.rel (0) target = $region25
  $region24: #{forward.8} parent=0 // pred_region
    _
  $region25: #{forward.8} parent=0 // pred_fallthru
    _

// kernel: forward.9
$region0: #{forward.9}
  #allocation0 [shape = 'u32[]', space=smem, size = 0x4, offset = 0x4, fixed_abs, tag = 'smem constant byte address 0x4 - core index']
  #allocation1 [shape = 'u32[144,128]{1,0:T(1,128)}', space=vmem, size = 0x12000, scoped, tag = 'internal scratch']
  %s0 = inlined_call_operand.vmem [shape: bf16[128,256], index: 0, kind: input, shape index: {}]
  %s1 = inlined_call_operand.vmem [shape: bf16[256,128], index: 1, kind: input, shape index: {}]
  %s2 = inlined_call_operand.vmem [shape: f32[1,128], index: 2, kind: input, shape index: {}]
  %s3 = inlined_call_operand.vmem [shape: f32[128,128], index: 3, kind: output, shape index: {}]
  %s4 = sld [smem:[#allocation0]]
  $region22: #{forward.9} parent=0
    _
  %s6 = ssub.s32 1, %s4
  %s7 = scalar_select 0, %s6, %s4
  // Predicated region
  $region2: #{forward.9} parent=0 // pred_check
    _
  $region3: #{forward.9} parent=0 // pred_check_branch
    %9 = sbr.rel (0) target = $region5
  $region4: #{forward.9} parent=0 // pred_region
    _
  $region5: #{forward.9} parent=0 // pred_fallthru
    _
  // Predicated region
  $region6: #{forward.9} parent=0 // pred_check
    _
  $region7: #{forward.9} parent=0 // pred_check_branch
    %11 = sbr.rel (0) target = $region9
  $region8: #{forward.9} parent=0 // pred_region
    _
  $region9: #{forward.9} parent=0 // pred_fallthru
    _
  // Predicated region
  $region10: #{forward.9} parent=0 // pred_check
    _
  $region11: #{forward.9} parent=0 // pred_check_branch
    %13 = sbr.rel (0) target = $region13
  $region12: #{forward.9} parent=0 // pred_region
    _
  $region13: #{forward.9} parent=0 // pred_fallthru
    _
  %v15 = vld [vmem:[%s0] sm:$0xff]
  %v16 = vld [vmem:[%s0 + $0x8] sm:$0xff]
  %v17 = vld [vmem:[%s0 + $0x10] sm:$0xff]
  %v18 = vld [vmem:[%s0 + $0x18] sm:$0xff]
  %v19 = vld [vmem:[%s0 + $0x20] sm:$0xff]
  %v20 = vld [vmem:[%s0 + $0x28] sm:$0xff]
  %v21 = vld [vmem:[%s0 + $0x30] sm:$0xff]
  %v22 = vld [vmem:[%s0 + $0x38] sm:$0xff]
  %v23 = vld [vmem:[%s0 + $0x40] sm:$0xff]
  %v24 = vld [vmem:[%s0 + $0x48] sm:$0xff]
  %v25 = vld [vmem:[%s0 + $0x50] sm:$0xff]
  %v26 = vld [vmem:[%s0 + $0x58] sm:$0xff]
  %v27 = vld [vmem:[%s0 + $0x60] sm:$0xff]
  %v28 = vld [vmem:[%s0 + $0x68] sm:$0xff]
  %v29 = vld [vmem:[%s0 + $0x70] sm:$0xff]
  %v30 = vld [vmem:[%s0 + $0x78] sm:$0xff]
  %v31 = vld [vmem:[%s1] sm:$0xf]
  %v32 = vld [vmem:[%s1 + $0x4] sm:$0xf]
  %v33 = vld [vmem:[%s1 + $0x8] sm:$0xf]
  %v34 = vld [vmem:[%s1 + $0xc] sm:$0xf]
  %v35 = vld [vmem:[%s1 + $0x10] sm:$0xf]
  %v36 = vld [vmem:[%s1 + $0x14] sm:$0xf]
  %v37 = vld [vmem:[%s1 + $0x18] sm:$0xf]
  %v38 = vld [vmem:[%s1 + $0x1c] sm:$0xf]
  %v39 = vld [vmem:[%s1 + $0x20] sm:$0xf]
  %v40 = vld [vmem:[%s1 + $0x24] sm:$0xf]
  %v41 = vld [vmem:[%s1 + $0x28] sm:$0xf]
  %v42 = vld [vmem:[%s1 + $0x2c] sm:$0xf]
  %v43 = vld [vmem:[%s1 + $0x30] sm:$0xf]
  %v44 = vld [vmem:[%s1 + $0x34] sm:$0xf]
  %v45 = vld [vmem:[%s1 + $0x38] sm:$0xf]
  %v46 = vld [vmem:[%s1 + $0x3c] sm:$0xf]
  %v47 = vld [vmem:[%s1 + $0x40] sm:$0xf]
  %v48 = vld [vmem:[%s1 + $0x44] sm:$0xf]
  %v49 = vld [vmem:[%s1 + $0x48] sm:$0xf]
  %v50 = vld [vmem:[%s1 + $0x4c] sm:$0xf]
  %v51 = vld [vmem:[%s1 + $0x50] sm:$0xf]
  %v52 = vld [vmem:[%s1 + $0x54] sm:$0xf]
  %v53 = vld [vmem:[%s1 + $0x58] sm:$0xf]
  %v54 = vld [vmem:[%s1 + $0x5c] sm:$0xf]
  %v55 = vld [vmem:[%s1 + $0x60] sm:$0xf]
  %v56 = vld [vmem:[%s1 + $0x64] sm:$0xf]
  %v57 = vld [vmem:[%s1 + $0x68] sm:$0xf]
  %v58 = vld [vmem:[%s1 + $0x6c] sm:$0xf]
  %v59 = vld [vmem:[%s1 + $0x70] sm:$0xf]
  %v60 = vld [vmem:[%s1 + $0x74] sm:$0xf]
  %v61 = vld [vmem:[%s1 + $0x78] sm:$0xf]
  %v62 = vld [vmem:[%s1 + $0x7c] sm:$0xf]
  %v63 = vld [vmem:[%s2] sm:$0x1]
  %v65 = vlaneseq
  %v66 = vshrl.u32 %v65, 7
  %v67 = vsub.s32 0, %v66
  %v68 = vrot.slane %v63, %v67
  %v86 = vunpack.c.l.b16 %v15
  %v87 = vunpack.c.h.b16 %v15
  %v88 = vunpack.c.l.b16 %v16
  %v89 = vunpack.c.h.b16 %v16
  %v90 = vunpack.c.l.b16 %v17
  %v91 = vunpack.c.h.b16 %v17
  %v92 = vunpack.c.l.b16 %v18
  %v93 = vunpack.c.h.b16 %v18
  %v94 = vunpack.c.l.b16 %v19
  %v95 = vunpack.c.h.b16 %v19
  %v96 = vunpack.c.l.b16 %v20
  %v97 = vunpack.c.h.b16 %v20
  %v98 = vunpack.c.l.b16 %v21
  %v99 = vunpack.c.h.b16 %v21
  %v100 = vunpack.c.l.b16 %v22
  %v101 = vunpack.c.h.b16 %v22
  %v102 = vunpack.c.l.b16 %v23
  %v103 = vunpack.c.h.b16 %v23
  %v104 = vunpack.c.l.b16 %v24
  %v105 = vunpack.c.h.b16 %v24
  %v106 = vunpack.c.l.b16 %v25
  %v107 = vunpack.c.h.b16 %v25
  %v108 = vunpack.c.l.b16 %v26
  %v109 = vunpack.c.h.b16 %v26
  %v110 = vunpack.c.l.b16 %v27
  %v111 = vunpack.c.h.b16 %v27
  %v112 = vunpack.c.l.b16 %v28
  %v113 = vunpack.c.h.b16 %v28
  %v114 = vunpack.c.l.b16 %v29
  %v115 = vunpack.c.h.b16 %v29
  %v116 = vunpack.c.l.b16 %v30
  %v117 = vunpack.c.h.b16 %v30
  %v118 = vpack.c.b16 %v88, %v86
  %v119 = vpack.c.b16 %v89, %v87
  %v120 = vpack.c.b16 %v92, %v90
  %v121 = vpack.c.b16 %v93, %v91
  %v122 = vpack.c.b16 %v96, %v94
  %v123 = vpack.c.b16 %v97, %v95
  %v124 = vpack.c.b16 %v100, %v98
  %v125 = vpack.c.b16 %v101, %v99
  %v126 = vpack.c.b16 %v104, %v102
  %v127 = vpack.c.b16 %v105, %v103
  %v128 = vpack.c.b16 %v108, %v106
  %v129 = vpack.c.b16 %v109, %v107
  %v130 = vpack.c.b16 %v112, %v110
  %v131 = vpack.c.b16 %v113, %v111
  %v132 = vpack.c.b16 %v116, %v114
  %v133 = vpack.c.b16 %v117, %v115
  %v182 = vunpack.c.l.b16 %v31
  %v183 = vunpack.c.l.b16 %v32
  %v184 = vunpack.c.l.b16 %v33
  %v185 = vunpack.c.l.b16 %v34
  %v186 = vunpack.c.l.b16 %v35
  %v187 = vunpack.c.l.b16 %v36
  %v188 = vunpack.c.l.b16 %v37
  %v189 = vunpack.c.l.b16 %v38
  %v190 = vunpack.c.l.b16 %v39
  %v191 = vunpack.c.l.b16 %v40
  %v192 = vunpack.c.l.b16 %v41
  %v193 = vunpack.c.l.b16 %v42
  %v194 = vunpack.c.l.b16 %v43
  %v195 = vunpack.c.l.b16 %v44
  %v196 = vunpack.c.l.b16 %v45
  %v197 = vunpack.c.l.b16 %v46
  %v198 = vunpack.c.l.b16 %v47
  %v199 = vunpack.c.l.b16 %v48
  %v200 = vunpack.c.l.b16 %v49
  %v201 = vunpack.c.l.b16 %v50
  %v202 = vunpack.c.l.b16 %v51
  %v203 = vunpack.c.l.b16 %v52
  %v204 = vunpack.c.l.b16 %v53
  %v205 = vunpack.c.l.b16 %v54
  %v206 = vunpack.c.l.b16 %v55
  %v207 = vunpack.c.l.b16 %v56
  %v208 = vunpack.c.l.b16 %v57
  %v209 = vunpack.c.l.b16 %v58
  %v210 = vunpack.c.l.b16 %v59
  %v211 = vunpack.c.l.b16 %v60
  %v212 = vunpack.c.l.b16 %v61
  %v213 = vunpack.c.l.b16 %v62
  %v214 = vpack.c.b16 %v183, %v182
  %v215 = vpack.c.b16 %v185, %v184
  %v216 = vpack.c.b16 %v187, %v186
  %v217 = vpack.c.b16 %v189, %v188
  %v218 = vpack.c.b16 %v191, %v190
  %v219 = vpack.c.b16 %v193, %v192
  %v220 = vpack.c.b16 %v195, %v194
  %v221 = vpack.c.b16 %v197, %v196
  %v222 = vpack.c.b16 %v199, %v198
  %v223 = vpack.c.b16 %v201, %v200
  %v224 = vpack.c.b16 %v203, %v202
  %v225 = vpack.c.b16 %v205, %v204
  %v226 = vpack.c.b16 %v207, %v206
  %v227 = vpack.c.b16 %v209, %v208
  %v228 = vpack.c.b16 %v211, %v210
  %v229 = vpack.c.b16 %v213, %v212
  %246 = vmatprep.subr.bf16.mxu0 0
  %247 = vmatpush1.bf16.msra.mxu0 %v214
  %248 = vmatprep.subr.bf16.mxu0 0
  %249 = vmatpush1.bf16.msra.mxu0 %v215
  %250 = vmatprep.subr.bf16.mxu0 0
  %251 = vmatpush1.bf16.msra.mxu0 %v216
  %252 = vmatprep.subr.bf16.mxu0 0
  %253 = vmatpush1.bf16.msra.mxu0 %v217
  %254 = vmatprep.subr.bf16.mxu0 0
  %255 = vmatpush1.bf16.msra.mxu0 %v218
  %256 = vmatprep.subr.bf16.mxu0 0
  %257 = vmatpush1.bf16.msra.mxu0 %v219
  %258 = vmatprep.subr.bf16.mxu0 0
  %259 = vmatpush1.bf16.msra.mxu0 %v220
  %260 = vmatprep.subr.bf16.mxu0 0
  %261 = vmatpush1.bf16.msra.mxu0 %v221
  %262 = vmatprep.subr.bf16.mxu0 0
  %263 = vmatpush1.bf16.msra.mxu0 %v222
  %264 = vmatprep.subr.bf16.mxu0 0
  %265 = vmatpush1.bf16.msra.mxu0 %v223
  %266 = vmatprep.subr.bf16.mxu0 0
  %267 = vmatpush1.bf16.msra.mxu0 %v224
  %268 = vmatprep.subr.bf16.mxu0 0
  %269 = vmatpush1.bf16.msra.mxu0 %v225
  %270 = vmatprep.subr.bf16.mxu0 0
  %271 = vmatpush1.bf16.msra.mxu0 %v226
  %272 = vmatprep.subr.bf16.mxu0 0
  %273 = vmatpush1.bf16.msra.mxu0 %v227
  %274 = vmatprep.subr.bf16.mxu0 0
  %275 = vmatpush1.bf16.msra.mxu0 %v228
  %276 = vmatprep.subr.bf16.mxu0 0
  %277 = vmatpush1.bf16.msra.mxu0 %v229
  %278 = vmatprep.mubr.bf16.mxu0 %v119
  %279 = vmatmul.mubr.bf16.gmra.mrb[0].mxu0 %v118
  %v280 = vpop.f32.mrb[0].mxu0
  %v281 = vadd.f32 %v68, %v280
  %v282 = vpop.f32.mrb[0].mxu0
  %v283 = vpop.f32.mrb[0].mxu0
  %v284 = vadd.f32 %v68, %v283
  %v285 = vpop.f32.mrb[0].mxu0
  %286 = vmatprep.mubr.bf16.mxu0 %v121
  %287 = vmatmul.mubr.bf16.gmra.mrb[0].mxu0 %v120
  %v288 = vpop.f32.mrb[0].mxu0
  %v289 = vadd.f32 %v68, %v288
  %v290 = vpop.f32.mrb[0].mxu0
  %v291 = vpop.f32.mrb[0].mxu0
  %v292 = vadd.f32 %v68, %v291
  %v293 = vpop.f32.mrb[0].mxu0
  %294 = vmatprep.mubr.bf16.mxu0 %v123
  %295 = vmatmul.mubr.bf16.gmra.mrb[0].mxu0 %v122
  %v296 = vpop.f32.mrb[0].mxu0
  %v297 = vadd.f32 %v68, %v296
  %v298 = vpop.f32.mrb[0].mxu0
  %v299 = vpop.f32.mrb[0].mxu0
  %v300 = vadd.f32 %v68, %v299
  %v301 = vpop.f32.mrb[0].mxu0
  %302 = vmatprep.mubr.bf16.mxu0 %v125
  %303 = vmatmul.mubr.bf16.gmra.mrb[0].mxu0 %v124
  %v304 = vpop.f32.mrb[0].mxu0
  %v305 = vadd.f32 %v68, %v304
  %v306 = vpop.f32.mrb[0].mxu0
  %v307 = vpop.f32.mrb[0].mxu0
  %v308 = vadd.f32 %v68, %v307
  %v309 = vpop.f32.mrb[0].mxu0
  %310 = vmatprep.mubr.bf16.mxu0 %v127
  %311 = vmatmul.mubr.bf16.gmra.mrb[0].mxu0 %v126
  %v312 = vpop.f32.mrb[0].mxu0
  %v313 = vadd.f32 %v68, %v312
  %v314 = vpop.f32.mrb[0].mxu0
  %v315 = vpop.f32.mrb[0].mxu0
  %v316 = vadd.f32 %v68, %v315
  %v317 = vpop.f32.mrb[0].mxu0
  %318 = vmatprep.mubr.bf16.mxu0 %v129
  %319 = vmatmul.mubr.bf16.gmra.mrb[0].mxu0 %v128
  %v320 = vpop.f32.mrb[0].mxu0
  %v321 = vadd.f32 %v68, %v320
  %v322 = vpop.f32.mrb[0].mxu0
  %v323 = vpop.f32.mrb[0].mxu0
  %v324 = vadd.f32 %v68, %v323
  %v325 = vpop.f32.mrb[0].mxu0
  %326 = vmatprep.mubr.bf16.mxu0 %v131
  %327 = vmatmul.mubr.bf16.gmra.mrb[0].mxu0 %v130
  %v328 = vpop.f32.mrb[0].mxu0
  %v329 = vadd.f32 %v68, %v328
  %v330 = vpop.f32.mrb[0].mxu0
  %v331 = vpop.f32.mrb[0].mxu0
  %v332 = vadd.f32 %v68, %v331
  %v333 = vpop.f32.mrb[0].mxu0
  %334 = vmatprep.mubr.bf16.mxu0 %v133
  %335 = vmatmul.mubr.bf16.gmra.mrb[0].mxu0 %v132
  %v336 = vpop.f32.mrb[0].mxu0
  %v337 = vadd.f32 %v68, %v336
  %v338 = vpop.f32.mrb[0].mxu0
  %v339 = vpop.f32.mrb[0].mxu0
  %v340 = vadd.f32 %v68, %v339
  %v341 = vpop.f32.mrb[0].mxu0
  %342 = vdwg.mxu0
  %343 = vst [vmem:[%s3] sm:$0xff] %v281
  %344 = vst [vmem:[%s3 + $0x8] sm:$0xff] %v284
  %345 = vst [vmem:[%s3 + $0x10] sm:$0xff] %v289
  %346 = vst [vmem:[%s3 + $0x18] sm:$0xff] %v292
  %347 = vst [vmem:[%s3 + $0x20] sm:$0xff] %v297
  %348 = vst [vmem:[%s3 + $0x28] sm:$0xff] %v300
  %349 = vst [vmem:[%s3 + $0x30] sm:$0xff] %v305
  %350 = vst [vmem:[%s3 + $0x38] sm:$0xff] %v308
  %351 = vst [vmem:[%s3 + $0x40] sm:$0xff] %v313
  %352 = vst [vmem:[%s3 + $0x48] sm:$0xff] %v316
  %353 = vst [vmem:[%s3 + $0x50] sm:$0xff] %v321
  %354 = vst [vmem:[%s3 + $0x58] sm:$0xff] %v324
  %355 = vst [vmem:[%s3 + $0x60] sm:$0xff] %v329
  %356 = vst [vmem:[%s3 + $0x68] sm:$0xff] %v332
  %357 = vst [vmem:[%s3 + $0x70] sm:$0xff] %v337
  %358 = vst [vmem:[%s3 + $0x78] sm:$0xff] %v340
  // Predicated region
  $region14: #{forward.9} parent=0 // pred_check
    _
  $region15: #{forward.9} parent=0 // pred_check_branch
    %360 = sbr.rel (0) target = $region17
  $region16: #{forward.9} parent=0 // pred_region
    _
  $region17: #{forward.9} parent=0 // pred_fallthru
    _
  // Predicated region
  $region18: #{forward.9} parent=0 // pred_check
    _
  $region19: #{forward.9} parent=0 // pred_check_branch
    %362 = sbr.rel (0) target = $region21
  $region20: #{forward.9} parent=0 // pred_region
    _
  $region21: #{forward.9} parent=0 // pred_fallthru
    _

// kernel: forward.10
$region0: #{forward.10}
  #allocation0 [shape = 'u32[]', space=smem, size = 0x4, offset = 0x4, fixed_abs, tag = 'smem constant byte address 0x4 - core index']
  #allocation1 [shape = 'u32[144,128]{1,0:T(1,128)}', space=vmem, size = 0x12000, scoped, tag = 'internal scratch']
  #allocation2 [shape = 'f32[42,16]{1,0:T(8,128)}', space=vmem, size = 0x6000, scoped, tag = 'scratch operand']
  #allocation3 [shape = 'f32[32,16]{1,0:T(8,128)}', space=vmem, size = 0x4000, scoped, tag = 'scratch operand']
  %s0 = inlined_call_operand.vmem [shape: f32[4,32,64], index: 0, kind: input, shape index: {}]
  %s1 = inlined_call_operand.vmem [shape: f32[9,16,64], index: 1, kind: input, shape index: {}]
  %s2 = inlined_call_operand.vmem [shape: f32[9,32,1], index: 2, kind: input, shape index: {}]
  %s3 = inlined_call_operand.vmem [shape: f32[32,16], index: 3, kind: output, shape index: {}]
  %s4 = sld [smem:[#allocation0]]
  $region49: #{forward.10} parent=0
    _
  %s6 = ssub.s32 1, %s4
  %s7 = scalar_select 0, %s6, %s4
  loop: start=0, step=1, limit=6
  $region2: #{forward.10} parent=0 // loop_pre_header
    _
  $region3: #{forward.10} parent=0 // loop_header
    %s9 = sphi 0, %s13
    %p10 = scmp.ge.s32.totalorder %s9, 6
    %s19 = sphi 0, %s21
    %s22 = sphi 0, %s19
    %s23 = sphi 0, %s22
    %s39 = sphi 0, %s23
    %s43 = sphi 0, %s43
    %s45 = sphi 0, %s43
    %s46 = sphi 0, %s45
    %s60 = sphi 0, %s46
    %s64 = sphi 0, %s64
    %s66 = sphi 0, %s64
    %s67 = sphi 0, %s66
    %s81 = sphi 0, %s67
    %s85 = sphi 0, %s85
    %s87 = sphi 0, %s85
    %s88 = sphi 0, %s87
    %s102 = sphi 0, %s88
  $region4: #{forward.10} parent=0 // loop_header_branch
    %12 = sbr.rel (%p10) target = $region8
  $region5: #{forward.10} parent=0 // loop_body
    %s14 = ssub.s32 %s9, 1
    %s15 = ssub.s32 %s9, 2
    %s16 = sadd.s32 %s9, 1
    %s17 = ssub.s32 %s9, %s16
    %p18 = scmp.eq.s32.totalorder %s17, 0
    %s20 = sadd.s32 %s19, 1
    %s21 = scalar_select %p18, %s19, %s20
    %p24 = pneg %p18
    %p25 = scmp.eq.s32.totalorder %s9, 3
    %p26 = por %p24, %p25
    %p27 = scmp.ne.s32.totalorder %s19, %s22
    %p28 = scmp.eq.s32.totalorder %s9, 0
    %p29 = por %p27, %p28
    %p30 = scmp.ne.s32.totalorder %s19, %s22
    %p31 = scmp.eq.s32.totalorder %s14, 3
    %p32 = por %p30, %p31
    %p33 = scmp.ne.s32.totalorder %s22, %s23
    %p34 = scmp.eq.s32.totalorder %s14, 0
    %p35 = por %p33, %p34
    %p36 = scmp.ne.s32.totalorder %s22, %s23
    %p37 = scmp.eq.s32.totalorder %s15, 3
    %p38 = por %p36, %p37
    %p40 = scmp.ne.s32.totalorder %s23, %s39
    %p41 = scmp.eq.s32.totalorder %s15, 0
    %p42 = por %p40, %p41
    %s44 = sadd.s32 %s43, 1
    %p47 = scmp.eq.s32.totalorder %s9, 3
    %p48 = scmp.ne.s32.totalorder %s43, %s45
    %p49 = scmp.eq.s32.totalorder %s9, 0
    %p50 = por %p48, %p49
    %p51 = scmp.ne.s32.totalorder %s43, %s45
    %p52 = scmp.eq.s32.totalorder %s14, 3
    %p53 = por %p51, %p52
    %p54 = scmp.ne.s32.totalorder %s45, %s46
    %p55 = scmp.eq.s32.totalorder %s14, 0
    %p56 = por %p54, %p55
    %p57 = scmp.ne.s32.totalorder %s45, %s46
    %p58 = scmp.eq.s32.totalorder %s15, 3
    %p59 = por %p57, %p58
    %p61 = scmp.ne.s32.totalorder %s46, %s60
    %p62 = scmp.eq.s32.totalorder %s15, 0
    %p63 = por %p61, %p62
    %s65 = sadd.s32 %s64, 1
    %p68 = scmp.eq.s32.totalorder %s9, 3
    %p69 = scmp.ne.s32.totalorder %s64, %s66
    %p70 = scmp.eq.s32.totalorder %s9, 0
    %p71 = por %p69, %p70
    %p72 = scmp.ne.s32.totalorder %s64, %s66
    %p73 = scmp.eq.s32.totalorder %s14, 3
    %p74 = por %p72, %p73
    %p75 = scmp.ne.s32.totalorder %s66, %s67
    %p76 = scmp.eq.s32.totalorder %s14, 0
    %p77 = por %p75, %p76
    %p78 = scmp.ne.s32.totalorder %s66, %s67
    %p79 = scmp.eq.s32.totalorder %s15, 3
    %p80 = por %p78, %p79
    %p82 = scmp.ne.s32.totalorder %s67, %s81
    %p83 = scmp.eq.s32.totalorder %s15, 0
    %p84 = por %p82, %p83
    %s86 = sadd.s32 %s85, 1
    %p89 = scmp.eq.s32.totalorder %s9, 3
    %p90 = scmp.ne.s32.totalorder %s85, %s87
    %p91 = scmp.eq.s32.totalorder %s9, 0
    %p92 = por %p90, %p91
    %p93 = scmp.ne.s32.totalorder %s85, %s87
    %p94 = scmp.eq.s32.totalorder %s14, 3
    %p95 = por %p93, %p94
    %p96 = scmp.ne.s32.totalorder %s87, %s88
    %p97 = scmp.eq.s32.totalorder %s14, 0
    %p98 = por %p96, %p97
    %p99 = scmp.ne.s32.totalorder %s87, %s88
    %p100 = scmp.eq.s32.totalorder %s15, 3
    %p101 = por %p99, %p100
    %p103 = scmp.ne.s32.totalorder %s88, %s102
    %p104 = scmp.eq.s32.totalorder %s15, 0
    %p105 = por %p103, %p104
    %p106 = scmp.le.s32.totalorder 1, %s9
    %p107 = scmp.lt.s32.totalorder %s9, 5
    %p108 = pnand %p106, %p107
    %p109 = pneg %p108
    // Predicated region
    $region9: #{forward.10} parent=5 // pred_check
      _
    $region10: #{forward.10} parent=5 // pred_check_branch
      %111 = sbr.rel (%p108) target = $region12
    $region11: #{forward.10} parent=5 // pred_region
      %s112 = ssub.s32 %s9, 1
      // Predicated region
      $region13: #{forward.10} parent=11 // pred_check
        %p113 = pneg %p56
      $region14: #{forward.10} parent=11 // pred_check_branch
        %115 = sbr.rel (%p113) target = $region16
      $region15: #{forward.10} parent=11 // pred_region
        _
      $region16: #{forward.10} parent=11 // pred_fallthru
        _
      // Predicated region
      $region17: #{forward.10} parent=11 // pred_check
        %p116 = pneg %p77
      $region18: #{forward.10} parent=11 // pred_check_branch
        %118 = sbr.rel (%p116) target = $region20
      $region19: #{forward.10} parent=11 // pred_region
        _
      $region20: #{forward.10} parent=11 // pred_fallthru
        _
    $region12: #{forward.10} parent=5 // pred_fallthru
      _
    %p119 = scmp.lt.s32.totalorder %s9, 4
    // Predicated region
    $region21: #{forward.10} parent=5 // pred_check
      %p120 = pneg %p119
    $region22: #{forward.10} parent=5 // pred_check_branch
      %122 = sbr.rel (%p120) target = $region24
    $region23: #{forward.10} parent=5 // pred_region
      // Predicated region
      $region25: #{forward.10} parent=23 // pred_check
        %p123 = pneg %p29
      $region26: #{forward.10} parent=23 // pred_check_branch
        %125 = sbr.rel (%p123) target = $region28
      $region27: #{forward.10} parent=23 // pred_region
        %p126 = scmp.lt.s32.totalorder %s9, 3
        %s127 = scalar_select %p126, %s9, 3
        %s128 = smul.addr %s127, 4
        %s129 = smul.addr %s128, 8
        %s130 = scalar_lea.vmem %s0, %s129
      $region28: #{forward.10} parent=23 // pred_fallthru
        _
    $region24: #{forward.10} parent=5 // pred_fallthru
      _
    %p131 = scmp.le.s32.totalorder 1, %s9
    %p132 = scmp.lt.s32.totalorder %s9, 5
    %p133 = pnand %p131, %p132
    %p134 = pneg %p133
    // Predicated region
    $region29: #{forward.10} parent=5 // pred_check
      _
    $region30: #{forward.10} parent=5 // pred_check_branch
      %136 = sbr.rel (%p133) target = $region32
    $region31: #{forward.10} parent=5 // pred_region
      %s137 = ssub.s32 %s9, 1
      %p138 = scmp.lt.s32.totalorder %s14, 3
      %s139 = scalar_select %p138, %s14, 3
      %s140 = smul.addr %s139, 4
      %s141 = smul.addr %s140, 8
      %s142 = scalar_lea.vmem %s0, %s141
      %p143 = pneg %p35
      %p144 = pneg %p32
      %p145 = pneg %p56
      %p146 = pneg %p53
      %p147 = pneg %p77
      %p148 = pneg %p74
      %p149 = pneg %p98
      %p150 = pneg %p95
      %p151 = scmp.lt.s32.totalorder %s14, 3
      %s152 = scalar_select %p151, %s14, 3
      %s153 = smul.addr %s152, 4
      %s154 = smul.addr %s153, 8
      %s155 = scalar_lea.vmem %s0, %s154
      %p156 = scmp.eq.s32.totalorder %s14, 0
      // Predicated region
      $region33: #{forward.10} parent=31 // pred_check
        %p157 = pneg %p156
      $region34: #{forward.10} parent=31 // pred_check_branch
        %159 = sbr.rel (%p157) target = $region36
      $region35: #{forward.10} parent=31 // pred_region
        %vm160 = vcmask 130048
        %161 = vst.msk [vmem:[#allocation2] sm:$0xff] %vm160, 0.0
        %162 = vst.msk [vmem:[#allocation2 + $0x8] sm:$0xff] %vm160, 0.0
        %163 = vst.msk [vmem:[#allocation2 + $0x10] sm:$0xff] %vm160, 0.0
        %164 = vst.msk [vmem:[#allocation2 + $0x18] sm:$0xff] %vm160, 0.0
        %165 = vst.msk [vmem:[#allocation2 + $0x20] sm:$0xff] %vm160, 0.0
        %vm166 = vcmask 123904
        %167 = vst.msk [vmem:[#allocation2 + $0x28] sm:$0x3] %vm166, 0.0
        %168 = vst.msk [vmem:[#allocation3] sm:$0xff] %vm160, 0.0
        %169 = vst.msk [vmem:[#allocation3 + $0x8] sm:$0xff] %vm160, 0.0
        %170 = vst.msk [vmem:[#allocation3 + $0x10] sm:$0xff] %vm160, 0.0
        %171 = vst.msk [vmem:[#allocation3 + $0x18] sm:$0xff] %vm160, 0.0
      $region36: #{forward.10} parent=31 // pred_fallthru
        _
      %v172 = vld [vmem:[%s155] sm:$0xff]
      %v173 = vld [vmem:[%s155 + $0x8] sm:$0xff]
      %v174 = vld [vmem:[%s155 + $0x10] sm:$0xff]
      %v175 = vld [vmem:[%s155 + $0x18] sm:$0xff]
      %v176 = vld [vmem:[#allocation2] sm:$0xff]
      %v177 = vld [vmem:[#allocation2 + $0x8] sm:$0xff]
      %v178 = vld [vmem:[#allocation2 + $0x10] sm:$0xff]
      %v179 = vld [vmem:[#allocation2 + $0x18] sm:$0xff]
      %v180 = vld [vmem:[%s2] sm:$0xff]
      %v181 = vld [vmem:[%s2 + $0x8] sm:$0xff]
      %v182 = vld [vmem:[%s2 + $0x10] sm:$0xff]
      %v183 = vld [vmem:[%s2 + $0x18] sm:$0xff]
      %185 = vset.pattern.permute.xlu0 0
      %186 = vperm.xlu0 %185, %v180
      %v187 = vpop.permute.xlu0 %186
      %190 = vset.pattern.permute.xlu0 0
      %191 = vperm.xlu0 %190, %v181
      %v192 = vpop.permute.xlu0 %191
      %195 = vset.pattern.permute.xlu0 0
      %196 = vperm.xlu0 %195, %v182
      %v197 = vpop.permute.xlu0 %196
      %200 = vset.pattern.permute.xlu0 0
      %201 = vperm.xlu0 %200, %v183
      %v202 = vpop.permute.xlu0 %201
      %v204 = vmul.f32 %v176, %v187
      %v205 = vmul.f32 %v177, %v192
      %v206 = vmul.f32 %v178, %v197
      %v207 = vmul.f32 %v179, %v202
      %v208 = vld [vmem:[%s1] sm:$0xff]
      %v209 = vld [vmem:[%s1 + $0x8] sm:$0xff]
      %vm210 = vcmask 130048
      %v212 = vsel %vm210, %v204, 0
      %v215 = vsel %vm210, %v205, 0
      %v218 = vsel %vm210, %v206, 0
      %v221 = vsel %vm210, %v207, 0
      %223 = vmatprep.subr.mxu0 0.0
      %224 = vmatpush1.msra.mxu0 %v208
      %225 = vmatprep.subr.mxu0 0.0
      %226 = vmatpush1.msra.mxu0 %v209
      %227 = vmatprep.subr.mxu0 0.0
      %228 = vmatpush1.msra.mxu0 0.0
      %229 = vmatprep.subr.mxu0 0.0
      %230 = vmatpush1.msra.mxu0 0.0
      %231 = vmatprep.subr.mxu0 0.0
      %232 = vmatpush1.msra.mxu0 0.0
      %233 = vmatprep.subr.mxu0 0.0
      %234 = vmatpush1.msra.mxu0 0.0
      %235 = vmatprep.subr.mxu0 0.0
      %236 = vmatpush1.msra.mxu0 0.0
      %237 = vmatprep.subr.mxu0 0.0
      %238 = vmatpush1.msra.mxu0 0.0
      %239 = vmatprep.subr.mxu0 0.0
      %240 = vmatpush1.msra.mxu0 0.0
      %241 = vmatprep.subr.mxu0 0.0
      %242 = vmatpush1.msra.mxu0 0.0
      %243 = vmatprep.subr.mxu0 0.0
      %244 = vmatpush1.msra.mxu0 0.0
      %245 = vmatprep.subr.mxu0 0.0
      %246 = vmatpush1.msra.mxu0 0.0
      %247 = vmatprep.subr.mxu0 0.0
      %248 = vmatpush1.msra.mxu0 0.0
      %249 = vmatprep.subr.mxu0 0.0
      %250 = vmatpush1.msra.mxu0 0.0
      %251 = vmatprep.subr.mxu0 0.0
      %252 = vmatpush1.msra.mxu0 0.0
      %253 = vmatprep.subr.mxu0 0.0
      %254 = vmatpush1.msra.mxu0 0.0
      %255 = vmatprep.subr.mxu0 0.0
      %256 = vmatpush1.msra.mxu0 0.0
      %257 = vmatprep.subr.mxu0 0.0
      %258 = vmatpush1.msra.mxu0 0.0
      %259 = vmatprep.subr.mxu0 0.0
      %260 = vmatpush1.msra.mxu0 0.0
      %261 = vmatprep.subr.mxu0 0.0
      %262 = vmatpush1.msra.mxu0 0.0
      %263 = vmatprep.subr.mxu0 0.0
      %264 = vmatpush1.msra.mxu0 0.0
      %265 = vmatprep.subr.mxu0 0.0
      %266 = vmatpush1.msra.mxu0 0.0
      %267 = vmatprep.subr.mxu0 0.0
      %268 = vmatpush1.msra.mxu0 0.0
      %269 = vmatprep.subr.mxu0 0.0
      %270 = vmatpush1.msra.mxu0 0.0
      %271 = vmatprep.subr.mxu0 0.0
      %272 = vmatpush1.msra.mxu0 0.0
      %273 = vmatprep.subr.mxu0 0.0
      %274 = vmatpush1.msra.mxu0 0.0
      %275 = vmatprep.subr.mxu0 0.0
      %276 = vmatpush1.msra.mxu0 0.0
      %277 = vmatprep.subr.mxu0 0.0
      %278 = vmatpush1.msra.mxu0 0.0
      %279 = vmatprep.subr.mxu0 0.0
      %280 = vmatpush1.msra.mxu0 0.0
      %281 = vmatprep.subr.mxu0 0.0
      %282 = vmatpush1.msra.mxu0 0.0
      %283 = vmatprep.subr.mxu0 0.0
      %284 = vmatpush1.msra.mxu0 0.0
      %285 = vmatprep.subr.mxu0 0.0
      %286 = vmatpush1.msra.mxu0 0.0
      %287 = vmatprep.mubr.f32.mxu0 0.0
      %288 = vmatmul.mubr.f32.gmra.mrb[0].mxu0 %v212
      %v289 = vpop.f32.mrb[0].mxu0
      %v290 = vadd.f32 0.0, %v289
      %v291 = vpop.f32.mrb[0].mxu0
      %292 = vmatprep.mubr.f32.mxu0 0.0
      %293 = vmatmul.mubr.f32.gmra.mrb[0].mxu0 %v215
      %v294 = vpop.f32.mrb[0].mxu0
      %v295 = vadd.f32 0.0, %v294
      %v296 = vpop.f32.mrb[0].mxu0
      %297 = vmatprep.mubr.f32.mxu0 0.0
      %298 = vmatmul.mubr.f32.gmra.mrb[0].mxu0 %v218
      %v299 = vpop.f32.mrb[0].mxu0
      %v300 = vadd.f32 0.0, %v299
      %v301 = vpop.f32.mrb[0].mxu0
      %302 = vmatprep.mubr.f32.mxu0 0.0
      %303 = vmatmul.mubr.f32.gmra.mrb[0].mxu0 %v221
      %v304 = vpop.f32.mrb[0].mxu0
      %v305 = vadd.f32 0.0, %v304
      %v306 = vpop.f32.mrb[0].mxu0
      %307 = vdwg.mxu0
      %v308 = vadd.f32 %v172, %v290
      %v309 = vadd.f32 %v173, %v295
      %v310 = vadd.f32 %v174, %v300
      %v311 = vadd.f32 %v175, %v305
      %v312 = vld [vmem:[#allocation2 + $0x1] sm:$0xff]
      %v313 = vld [vmem:[#allocation2 + $0x9] sm:$0xff]
      %v314 = vld [vmem:[#allocation2 + $0x11] sm:$0xff]
      %v315 = vld [vmem:[#allocation2 + $0x19] sm:$0xff]
      %s316 = scalar_lea.vmem %s2, 32
      %v317 = vld [vmem:[%s316] sm:$0xff]
      %v318 = vld [vmem:[%s316 + $0x8] sm:$0xff]
      %v319 = vld [vmem:[%s316 + $0x10] sm:$0xff]
      %v320 = vld [vmem:[%s316 + $0x18] sm:$0xff]
      %322 = vset.pattern.permute.xlu0 0
      %323 = vperm.xlu0 %322, %v317
      %v324 = vpop.permute.xlu0 %323
      %327 = vset.pattern.permute.xlu0 0
      %328 = vperm.xlu0 %327, %v318
      %v329 = vpop.permute.xlu0 %328
      %332 = vset.pattern.permute.xlu0 0
      %333 = vperm.xlu0 %332, %v319
      %v334 = vpop.permute.xlu0 %333
      %337 = vset.pattern.permute.xlu0 0
      %338 = vperm.xlu0 %337, %v320
      %v339 = vpop.permute.xlu0 %338
      %v341 = vmul.f32 %v312, %v324
      %v342 = vmul.f32 %v313, %v329
      %v343 = vmul.f32 %v314, %v334
      %v344 = vmul.f32 %v315, %v339
      %s345 = scalar_lea.vmem %s1, 16
      %v346 = vld [vmem:[%s345] sm:$0xff]
      %v347 = vld [vmem:[%s345 + $0x8] sm:$0xff]
      %v349 = vsel %vm210, %v341, 0
      %v352 = vsel %vm210, %v342, 0
      %v355 = vsel %vm210, %v343, 0
      %v358 = vsel %vm210, %v344, 0
      %360 = vmatprep.subr.mxu0 0.0
      %361 = vmatpush1.msra.mxu0 %v346
      %362 = vmatprep.subr.mxu0 0.0
      %363 = vmatpush1.msra.mxu0 %v347
      %364 = vmatprep.subr.mxu0 0.0
      %365 = vmatpush1.msra.mxu0 0.0
      %366 = vmatprep.subr.mxu0 0.0
      %367 = vmatpush1.msra.mxu0 0.0
      %368 = vmatprep.subr.mxu0 0.0
      %369 = vmatpush1.msra.mxu0 0.0
      %370 = vmatprep.subr.mxu0 0.0
      %371 = vmatpush1.msra.mxu0 0.0
      %372 = vmatprep.subr.mxu0 0.0
      %373 = vmatpush1.msra.mxu0 0.0
      %374 = vmatprep.subr.mxu0 0.0
      %375 = vmatpush1.msra.mxu0 0.0
      %376 = vmatprep.subr.mxu0 0.0
      %377 = vmatpush1.msra.mxu0 0.0
      %378 = vmatprep.subr.mxu0 0.0
      %379 = vmatpush1.msra.mxu0 0.0
      %380 = vmatprep.subr.mxu0 0.0
      %381 = vmatpush1.msra.mxu0 0.0
      %382 = vmatprep.subr.mxu0 0.0
      %383 = vmatpush1.msra.mxu0 0.0
      %384 = vmatprep.subr.mxu0 0.0
      %385 = vmatpush1.msra.mxu0 0.0
      %386 = vmatprep.subr.mxu0 0.0
      %387 = vmatpush1.msra.mxu0 0.0
      %388 = vmatprep.subr.mxu0 0.0
      %389 = vmatpush1.msra.mxu0 0.0
      %390 = vmatprep.subr.mxu0 0.0
      %391 = vmatpush1.msra.mxu0 0.0
      %392 = vmatprep.subr.mxu0 0.0
      %393 = vmatpush1.msra.mxu0 0.0
      %394 = vmatprep.subr.mxu0 0.0
      %395 = vmatpush1.msra.mxu0 0.0
      %396 = vmatprep.subr.mxu0 0.0
      %397 = vmatpush1.msra.mxu0 0.0
      %398 = vmatprep.subr.mxu0 0.0
      %399 = vmatpush1.msra.mxu0 0.0
      %400 = vmatprep.subr.mxu0 0.0
      %401 = vmatpush1.msra.mxu0 0.0
      %402 = vmatprep.subr.mxu0 0.0
      %403 = vmatpush1.msra.mxu0 0.0
      %404 = vmatprep.subr.mxu0 0.0
      %405 = vmatpush1.msra.mxu0 0.0
      %406 = vmatprep.subr.mxu0 0.0
      %407 = vmatpush1.msra.mxu0 0.0
      %408 = vmatprep.subr.mxu0 0.0
      %409 = vmatpush1.msra.mxu0 0.0
      %410 = vmatprep.subr.mxu0 0.0
      %411 = vmatpush1.msra.mxu0 0.0
      %412 = vmatprep.subr.mxu0 0.0
      %413 = vmatpush1.msra.mxu0 0.0
      %414 = vmatprep.subr.mxu0 0.0
      %415 = vmatpush1.msra.mxu0 0.0
      %416 = vmatprep.subr.mxu0 0.0
      %417 = vmatpush1.msra.mxu0 0.0
      %418 = vmatprep.subr.mxu0 0.0
      %419 = vmatpush1.msra.mxu0 0.0
      %420 = vmatprep.subr.mxu0 0.0
      %421 = vmatpush1.msra.mxu0 0.0
      %422 = vmatprep.subr.mxu0 0.0
      %423 = vmatpush1.msra.mxu0 0.0
      %424 = vmatprep.mubr.f32.mxu0 0.0
      %425 = vmatmul.mubr.f32.gmra.mrb[0].mxu0 %v349
      %v426 = vpop.f32.mrb[0].mxu0
      %v427 = vadd.f32 0.0, %v426
      %v428 = vpop.f32.mrb[0].mxu0
      %429 = vmatprep.mubr.f32.mxu0 0.0
      %430 = vmatmul.mubr.f32.gmra.mrb[0].mxu0 %v352
      %v431 = vpop.f32.mrb[0].mxu0
      %v432 = vadd.f32 0.0, %v431
      %v433 = vpop.f32.mrb[0].mxu0
      %434 = vmatprep.mubr.f32.mxu0 0.0
      %435 = vmatmul.mubr.f32.gmra.mrb[0].mxu0 %v355
      %v436 = vpop.f32.mrb[0].mxu0
      %v437 = vadd.f32 0.0, %v436
      %v438 = vpop.f32.mrb[0].mxu0
      %439 = vmatprep.mubr.f32.mxu0 0.0
      %440 = vmatmul.mubr.f32.gmra.mrb[0].mxu0 %v358
      %v441 = vpop.f32.mrb[0].mxu0
      %v442 = vadd.f32 0.0, %v441
      %v443 = vpop.f32.mrb[0].mxu0
      %444 = vdwg.mxu0
      %v445 = vadd.f32 %v308, %v427
      %v446 = vadd.f32 %v309, %v432
      %v447 = vadd.f32 %v310, %v437
      %v448 = vadd.f32 %v311, %v442
      %v449 = vld [vmem:[#allocation2 + $0x2] sm:$0xff]
      %v450 = vld [vmem:[#allocation2 + $0xa] sm:$0xff]
      %v451 = vld [vmem:[#allocation2 + $0x12] sm:$0xff]
      %v452 = vld [vmem:[#allocation2 + $0x1a] sm:$0xff]
      %s453 = scalar_lea.vmem %s2, 64
      %v454 = vld [vmem:[%s453] sm:$0xff]
      %v455 = vld [vmem:[%s453 + $0x8] sm:$0xff]
      %v456 = vld [vmem:[%s453 + $0x10] sm:$0xff]
      %v457 = vld [vmem:[%s453 + $0x18] sm:$0xff]
      %459 = vset.pattern.permute.xlu0 0
      %460 = vperm.xlu0 %459, %v454
      %v461 = vpop.permute.xlu0 %460
      %464 = vset.pattern.permute.xlu0 0
      %465 = vperm.xlu0 %464, %v455
      %v466 = vpop.permute.xlu0 %465
      %469 = vset.pattern.permute.xlu0 0
      %470 = vperm.xlu0 %469, %v456
      %v471 = vpop.permute.xlu0 %470
      %474 = vset.pattern.permute.xlu0 0
      %475 = vperm.xlu0 %474, %v457
      %v476 = vpop.permute.xlu0 %475
      %v478 = vmul.f32 %v449, %v461
      %v479 = vmul.f32 %v450, %v466
      %v480 = vmul.f32 %v451, %v471
      %v481 = vmul.f32 %v452, %v476
      %s482 = scalar_lea.vmem %s1, 32
      %v483 = vld [vmem:[%s482] sm:$0xff]
      %v484 = vld [vmem:[%s482 + $0x8] sm:$0xff]
      %v486 = vsel %vm210, %v478, 0
      %v489 = vsel %vm210, %v479, 0
      %v492 = vsel %vm210, %v480, 0
      %v495 = vsel %vm210, %v481, 0
      %497 = vmatprep.subr.mxu0 0.0
      %498 = vmatpush1.msra.mxu0 %v483
      %499 = vmatprep.subr.mxu0 0.0
      %500 = vmatpush1.msra.mxu0 %v484
      %501 = vmatprep.subr.mxu0 0.0
      %502 = vmatpush1.msra.mxu0 0.0
      %503 = vmatprep.subr.mxu0 0.0
      %504 = vmatpush1.msra.mxu0 0.0
      %505 = vmatprep.subr.mxu0 0.0
      %506 = vmatpush1.msra.mxu0 0.0
      %507 = vmatprep.subr.mxu0 0.0
      %508 = vmatpush1.msra.mxu0 0.0
      %509 = vmatprep.subr.mxu0 0.0
      %510 = vmatpush1.msra.mxu0 0.0
      %511 = vmatprep.subr.mxu0 0.0
      %512 = vmatpush1.msra.mxu0 0.0
      %513 = vmatprep.subr.mxu0 0.0
      %514 = vmatpush1.msra.mxu0 0.0
      %515 = vmatprep.subr.mxu0 0.0
      %516 = vmatpush1.msra.mxu0 0.0
      %517 = vmatprep.subr.mxu0 0.0
      %518 = vmatpush1.msra.mxu0 0.0
      %519 = vmatprep.subr.mxu0 0.0
      %520 = vmatpush1.msra.mxu0 0.0
      %521 = vmatprep.subr.mxu0 0.0
      %522 = vmatpush1.msra.mxu0 0.0
      %523 = vmatprep.subr.mxu0 0.0
      %524 = vmatpush1.msra.mxu0 0.0
      %525 = vmatprep.subr.mxu0 0.0
      %526 = vmatpush1.msra.mxu0 0.0
      %527 = vmatprep.subr.mxu0 0.0
      %528 = vmatpush1.msra.mxu0 0.0
      %529 = vmatprep.subr.mxu0 0.0
      %530 = vmatpush1.msra.mxu0 0.0
      %531 = vmatprep.subr.mxu0 0.0
      %532 = vmatpush1.msra.mxu0 0.0
      %533 = vmatprep.subr.mxu0 0.0
      %534 = vmatpush1.msra.mxu0 0.0
      %535 = vmatprep.subr.mxu0 0.0
      %536 = vmatpush1.msra.mxu0 0.0
      %537 = vmatprep.subr.mxu0 0.0
      %538 = vmatpush1.msra.mxu0 0.0
      %539 = vmatprep.subr.mxu0 0.0
      %540 = vmatpush1.msra.mxu0 0.0
      %541 = vmatprep.subr.mxu0 0.0
      %542 = vmatpush1.msra.mxu0 0.0
      %543 = vmatprep.subr.mxu0 0.0
      %544 = vmatpush1.msra.mxu0 0.0
      %545 = vmatprep.subr.mxu0 0.0
      %546 = vmatpush1.msra.mxu0 0.0
      %547 = vmatprep.subr.mxu0 0.0
      %548 = vmatpush1.msra.mxu0 0.0
      %549 = vmatprep.subr.mxu0 0.0
      %550 = vmatpush1.msra.mxu0 0.0
      %551 = vmatprep.subr.mxu0 0.0
      %552 = vmatpush1.msra.mxu0 0.0
      %553 = vmatprep.subr.mxu0 0.0
      %554 = vmatpush1.msra.mxu0 0.0
      %555 = vmatprep.subr.mxu0 0.0
      %556 = vmatpush1.msra.mxu0 0.0
      %557 = vmatprep.subr.mxu0 0.0
      %558 = vmatpush1.msra.mxu0 0.0
      %559 = vmatprep.subr.mxu0 0.0
      %560 = vmatpush1.msra.mxu0 0.0
      %561 = vmatprep.mubr.f32.mxu0 0.0
      %562 = vmatmul.mubr.f32.gmra.mrb[0].mxu0 %v486
      %v563 = vpop.f32.mrb[0].mxu0
      %v564 = vadd.f32 0.0, %v563
      %v565 = vpop.f32.mrb[0].mxu0
      %566 = vmatprep.mubr.f32.mxu0 0.0
      %567 = vmatmul.mubr.f32.gmra.mrb[0].mxu0 %v489
      %v568 = vpop.f32.mrb[0].mxu0
      %v569 = vadd.f32 0.0, %v568
      %v570 = vpop.f32.mrb[0].mxu0
      %571 = vmatprep.mubr.f32.mxu0 0.0
      %572 = vmatmul.mubr.f32.gmra.mrb[0].mxu0 %v492
      %v573 = vpop.f32.mrb[0].mxu0
      %v574 = vadd.f32 0.0, %v573
      %v575 = vpop.f32.mrb[0].mxu0
      %576 = vmatprep.mubr.f32.mxu0 0.0
      %577 = vmatmul.mubr.f32.gmra.mrb[0].mxu0 %v495
      %v578 = vpop.f32.mrb[0].mxu0
      %v579 = vadd.f32 0.0, %v578
      %v580 = vpop.f32.mrb[0].mxu0
      %581 = vdwg.mxu0
      %v582 = vadd.f32 %v445, %v564
      %v583 = vadd.f32 %v446, %v569
      %v584 = vadd.f32 %v447, %v574
      %v585 = vadd.f32 %v448, %v579
      %v586 = vld [vmem:[#allocation2 + $0x4] sm:$0xff]
      %v587 = vld [vmem:[#allocation2 + $0xc] sm:$0xff]
      %v588 = vld [vmem:[#allocation2 + $0x14] sm:$0xff]
      %v589 = vld [vmem:[#allocation2 + $0x1c] sm:$0xff]
      %s590 = scalar_lea.vmem %s2, 96
      %v591 = vld [vmem:[%s590] sm:$0xff]
      %v592 = vld [vmem:[%s590 + $0x8] sm:$0xff]
      %v593 = vld [vmem:[%s590 + $0x10] sm:$0xff]
      %v594 = vld [vmem:[%s590 + $0x18] sm:$0xff]
      %596 = vset.pattern.permute.xlu0 0
      %597 = vperm.xlu0 %596, %v591
      %v598 = vpop.permute.xlu0 %597
      %601 = vset.pattern.permute.xlu0 0
      %602 = vperm.xlu0 %601, %v592
      %v603 = vpop.permute.xlu0 %602
      %606 = vset.pattern.permute.xlu0 0
      %607 = vperm.xlu0 %606, %v593
      %v608 = vpop.permute.xlu0 %607
      %611 = vset.pattern.permute.xlu0 0
      %612 = vperm.xlu0 %611, %v594
      %v613 = vpop.permute.xlu0 %612
      %v615 = vmul.f32 %v586, %v598
      %v616 = vmul.f32 %v587, %v603
      %v617 = vmul.f32 %v588, %v608
      %v618 = vmul.f32 %v589, %v613
      %s619 = scalar_lea.vmem %s1, 48
      %v620 = vld [vmem:[%s619] sm:$0xff]
      %v621 = vld [vmem:[%s619 + $0x8] sm:$0xff]
      %v623 = vsel %vm210, %v615, 0
      %v626 = vsel %vm210, %v616, 0
      %v629 = vsel %vm210, %v617, 0
      %v632 = vsel %vm210, %v618, 0
      %634 = vmatprep.subr.mxu0 0.0
      %635 = vmatpush1.msra.mxu0 %v620
      %636 = vmatprep.subr.mxu0 0.0
      %637 = vmatpush1.msra.mxu0 %v621
      %638 = vmatprep.subr.mxu0 0.0
      %639 = vmatpush1.msra.mxu0 0.0
      %640 = vmatprep.subr.mxu0 0.0
      %641 = vmatpush1.msra.mxu0 0.0
      %642 = vmatprep.subr.mxu0 0.0
      %643 = vmatpush1.msra.mxu0 0.0
      %644 = vmatprep.subr.mxu0 0.0
      %645 = vmatpush1.msra.mxu0 0.0
      %646 = vmatprep.subr.mxu0 0.0
      %647 = vmatpush1.msra.mxu0 0.0
      %648 = vmatprep.subr.mxu0 0.0
      %649 = vmatpush1.msra.mxu0 0.0
      %650 = vmatprep.subr.mxu0 0.0
      %651 = vmatpush1.msra.mxu0 0.0
      %652 = vmatprep.subr.mxu0 0.0
      %653 = vmatpush1.msra.mxu0 0.0
      %654 = vmatprep.subr.mxu0 0.0
      %655 = vmatpush1.msra.mxu0 0.0
      %656 = vmatprep.subr.mxu0 0.0
      %657 = vmatpush1.msra.mxu0 0.0
      %658 = vmatprep.subr.mxu0 0.0
      %659 = vmatpush1.msra.mxu0 0.0
      %660 = vmatprep.subr.mxu0 0.0
      %661 = vmatpush1.msra.mxu0 0.0
      %662 = vmatprep.subr.mxu0 0.0
      %663 = vmatpush1.msra.mxu0 0.0
      %664 = vmatprep.subr.mxu0 0.0
      %665 = vmatpush1.msra.mxu0 0.0
      %666 = vmatprep.subr.mxu0 0.0
      %667 = vmatpush1.msra.mxu0 0.0
      %668 = vmatprep.subr.mxu0 0.0
      %669 = vmatpush1.msra.mxu0 0.0
      %670 = vmatprep.subr.mxu0 0.0
      %671 = vmatpush1.msra.mxu0 0.0
      %672 = vmatprep.subr.mxu0 0.0
      %673 = vmatpush1.msra.mxu0 0.0
      %674 = vmatprep.subr.mxu0 0.0
      %675 = vmatpush1.msra.mxu0 0.0
      %676 = vmatprep.subr.mxu0 0.0
      %677 = vmatpush1.msra.mxu0 0.0
      %678 = vmatprep.subr.mxu0 0.0
      %679 = vmatpush1.msra.mxu0 0.0
      %680 = vmatprep.subr.mxu0 0.0
      %681 = vmatpush1.msra.mxu0 0.0
      %682 = vmatprep.subr.mxu0 0.0
      %683 = vmatpush1.msra.mxu0 0.0
      %684 = vmatprep.subr.mxu0 0.0
      %685 = vmatpush1.msra.mxu0 0.0
      %686 = vmatprep.subr.mxu0 0.0
      %687 = vmatpush1.msra.mxu0 0.0
      %688 = vmatprep.subr.mxu0 0.0
      %689 = vmatpush1.msra.mxu0 0.0
      %690 = vmatprep.subr.mxu0 0.0
      %691 = vmatpush1.msra.mxu0 0.0
      %692 = vmatprep.subr.mxu0 0.0
      %693 = vmatpush1.msra.mxu0 0.0
      %694 = vmatprep.subr.mxu0 0.0
      %695 = vmatpush1.msra.mxu0 0.0
      %696 = vmatprep.subr.mxu0 0.0
      %697 = vmatpush1.msra.mxu0 0.0
      %698 = vmatprep.mubr.f32.mxu0 0.0
      %699 = vmatmul.mubr.f32.gmra.mrb[0].mxu0 %v623
      %v700 = vpop.f32.mrb[0].mxu0
      %v701 = vadd.f32 0.0, %v700
      %v702 = vpop.f32.mrb[0].mxu0
      %703 = vmatprep.mubr.f32.mxu0 0.0
      %704 = vmatmul.mubr.f32.gmra.mrb[0].mxu0 %v626
      %v705 = vpop.f32.mrb[0].mxu0
      %v706 = vadd.f32 0.0, %v705
      %v707 = vpop.f32.mrb[0].mxu0
      %708 = vmatprep.mubr.f32.mxu0 0.0
      %709 = vmatmul.mubr.f32.gmra.mrb[0].mxu0 %v629
      %v710 = vpop.f32.mrb[0].mxu0
      %v711 = vadd.f32 0.0, %v710
      %v712 = vpop.f32.mrb[0].mxu0
      %713 = vmatprep.mubr.f32.mxu0 0.0
      %714 = vmatmul.mubr.f32.gmra.mrb[0].mxu0 %v632
      %v715 = vpop.f32.mrb[0].mxu0
      %v716 = vadd.f32 0.0, %v715
      %v717 = vpop.f32.mrb[0].mxu0
      %718 = vdwg.mxu0
      %v719 = vadd.f32 %v582, %v701
      %v720 = vadd.f32 %v583, %v706
      %v721 = vadd.f32 %v584, %v711
      %v722 = vadd.f32 %v585, %v716
      %v723 = vld [vmem:[#allocation2 + $0x5] sm:$0xff]
      %v724 = vld [vmem:[#allocation2 + $0xd] sm:$0xff]
      %v725 = vld [vmem:[#allocation2 + $0x15] sm:$0xff]
      %v726 = vld [vmem:[#allocation2 + $0x1d] sm:$0xff]
      %s727 = scalar_lea.vmem %s2, 128
      %v728 = vld [vmem:[%s727] sm:$0xff]
      %v729 = vld [vmem:[%s727 + $0x8] sm:$0xff]
      %v730 = vld [vmem:[%s727 + $0x10] sm:$0xff]
      %v731 = vld [vmem:[%s727 + $0x18] sm:$0xff]
      %733 = vset.pattern.permute.xlu0 0
      %734 = vperm.xlu0 %733, %v728
      %v735 = vpop.permute.xlu0 %734
      %738 = vset.pattern.permute.xlu0 0
      %739 = vperm.xlu0 %738, %v729
      %v740 = vpop.permute.xlu0 %739
      %743 = vset.pattern.permute.xlu0 0
      %744 = vperm.xlu0 %743, %v730
      %v745 = vpop.permute.xlu0 %744
      %748 = vset.pattern.permute.xlu0 0
      %749 = vperm.xlu0 %748, %v731
      %v750 = vpop.permute.xlu0 %749
      %v752 = vmul.f32 %v723, %v735
      %v753 = vmul.f32 %v724, %v740
      %v754 = vmul.f32 %v725, %v745
      %v755 = vmul.f32 %v726, %v750
      %s756 = scalar_lea.vmem %s1, 64
      %v757 = vld [vmem:[%s756] sm:$0xff]
      %v758 = vld [vmem:[%s756 + $0x8] sm:$0xff]
      %v760 = vsel %vm210, %v752, 0
      %v763 = vsel %vm210, %v753, 0
      %v766 = vsel %vm210, %v754, 0
      %v769 = vsel %vm210, %v755, 0
      %771 = vmatprep.subr.mxu0 0.0
      %772 = vmatpush1.msra.mxu0 %v757
      %773 = vmatprep.subr.mxu0 0.0
      %774 = vmatpush1.msra.mxu0 %v758
      %775 = vmatprep.subr.mxu0 0.0
      %776 = vmatpush1.msra.mxu0 0.0
      %777 = vmatprep.subr.mxu0 0.0
      %778 = vmatpush1.msra.mxu0 0.0
      %779 = vmatprep.subr.mxu0 0.0
      %780 = vmatpush1.msra.mxu0 0.0
      %781 = vmatprep.subr.mxu0 0.0
      %782 = vmatpush1.msra.mxu0 0.0
      %783 = vmatprep.subr.mxu0 0.0
      %784 = vmatpush1.msra.mxu0 0.0
      %785 = vmatprep.subr.mxu0 0.0
      %786 = vmatpush1.msra.mxu0 0.0
      %787 = vmatprep.subr.mxu0 0.0
      %788 = vmatpush1.msra.mxu0 0.0
      %789 = vmatprep.subr.mxu0 0.0
      %790 = vmatpush1.msra.mxu0 0.0
      %791 = vmatprep.subr.mxu0 0.0
      %792 = vmatpush1.msra.mxu0 0.0
      %793 = vmatprep.subr.mxu0 0.0
      %794 = vmatpush1.msra.mxu0 0.0
      %795 = vmatprep.subr.mxu0 0.0
      %796 = vmatpush1.msra.mxu0 0.0
      %797 = vmatprep.subr.mxu0 0.0
      %798 = vmatpush1.msra.mxu0 0.0
      %799 = vmatprep.subr.mxu0 0.0
      %800 = vmatpush1.msra.mxu0 0.0
      %801 = vmatprep.subr.mxu0 0.0
      %802 = vmatpush1.msra.mxu0 0.0
      %803 = vmatprep.subr.mxu0 0.0
      %804 = vmatpush1.msra.mxu0 0.0
      %805 = vmatprep.subr.mxu0 0.0
      %806 = vmatpush1.msra.mxu0 0.0
      %807 = vmatprep.subr.mxu0 0.0
      %808 = vmatpush1.msra.mxu0 0.0
      %809 = vmatprep.subr.mxu0 0.0
      %810 = vmatpush1.msra.mxu0 0.0
      %811 = vmatprep.subr.mxu0 0.0
      %812 = vmatpush1.msra.mxu0 0.0
      %813 = vmatprep.subr.mxu0 0.0
      %814 = vmatpush1.msra.mxu0 0.0
      %815 = vmatprep.subr.mxu0 0.0
      %816 = vmatpush1.msra.mxu0 0.0
      %817 = vmatprep.subr.mxu0 0.0
      %818 = vmatpush1.msra.mxu0 0.0
      %819 = vmatprep.subr.mxu0 0.0
      %820 = vmatpush1.msra.mxu0 0.0
      %821 = vmatprep.subr.mxu0 0.0
      %822 = vmatpush1.msra.mxu0 0.0
      %823 = vmatprep.subr.mxu0 0.0
      %824 = vmatpush1.msra.mxu0 0.0
      %825 = vmatprep.subr.mxu0 0.0
      %826 = vmatpush1.msra.mxu0 0.0
      %827 = vmatprep.subr.mxu0 0.0
      %828 = vmatpush1.msra.mxu0 0.0
      %829 = vmatprep.subr.mxu0 0.0
      %830 = vmatpush1.msra.mxu0 0.0
      %831 = vmatprep.subr.mxu0 0.0
      %832 = vmatpush1.msra.mxu0 0.0
      %833 = vmatprep.subr.mxu0 0.0
      %834 = vmatpush1.msra.mxu0 0.0
      %835 = vmatprep.mubr.f32.mxu0 0.0
      %836 = vmatmul.mubr.f32.gmra.mrb[0].mxu0 %v760
      %v837 = vpop.f32.mrb[0].mxu0
      %v838 = vadd.f32 0.0, %v837
      %v839 = vpop.f32.mrb[0].mxu0
      %840 = vmatprep.mubr.f32.mxu0 0.0
      %841 = vmatmul.mubr.f32.gmra.mrb[0].mxu0 %v763
      %v842 = vpop.f32.mrb[0].mxu0
      %v843 = vadd.f32 0.0, %v842
      %v844 = vpop.f32.mrb[0].mxu0
      %845 = vmatprep.mubr.f32.mxu0 0.0
      %846 = vmatmul.mubr.f32.gmra.mrb[0].mxu0 %v766
      %v847 = vpop.f32.mrb[0].mxu0
      %v848 = vadd.f32 0.0, %v847
      %v849 = vpop.f32.mrb[0].mxu0
      %850 = vmatprep.mubr.f32.mxu0 0.0
      %851 = vmatmul.mubr.f32.gmra.mrb[0].mxu0 %v769
      %v852 = vpop.f32.mrb[0].mxu0
      %v853 = vadd.f32 0.0, %v852
      %v854 = vpop.f32.mrb[0].mxu0
      %855 = vdwg.mxu0
      %v856 = vadd.f32 %v719, %v838
      %v857 = vadd.f32 %v720, %v843
      %v858 = vadd.f32 %v721, %v848
      %v859 = vadd.f32 %v722, %v853
      %v860 = vld [vmem:[#allocation2 + $0x6] sm:$0xff]
      %v861 = vld [vmem:[#allocation2 + $0xe] sm:$0xff]
      %v862 = vld [vmem:[#allocation2 + $0x16] sm:$0xff]
      %v863 = vld [vmem:[#allocation2 + $0x1e] sm:$0xff]
      %s864 = scalar_lea.vmem %s2, 160
      %v865 = vld [vmem:[%s864] sm:$0xff]
      %v866 = vld [vmem:[%s864 + $0x8] sm:$0xff]
      %v867 = vld [vmem:[%s864 + $0x10] sm:$0xff]
      %v868 = vld [vmem:[%s864 + $0x18] sm:$0xff]
      %870 = vset.pattern.permute.xlu0 0
      %871 = vperm.xlu0 %870, %v865
      %v872 = vpop.permute.xlu0 %871
      %875 = vset.pattern.permute.xlu0 0
      %876 = vperm.xlu0 %875, %v866
      %v877 = vpop.permute.xlu0 %876
      %880 = vset.pattern.permute.xlu0 0
      %881 = vperm.xlu0 %880, %v867
      %v882 = vpop.permute.xlu0 %881
      %885 = vset.pattern.permute.xlu0 0
      %886 = vperm.xlu0 %885, %v868
      %v887 = vpop.permute.xlu0 %886
      %v889 = vmul.f32 %v860, %v872
      %v890 = vmul.f32 %v861, %v877
      %v891 = vmul.f32 %v862, %v882
      %v892 = vmul.f32 %v863, %v887
      %s893 = scalar_lea.vmem %s1, 80
      %v894 = vld [vmem:[%s893] sm:$0xff]
      %v895 = vld [vmem:[%s893 + $0x8] sm:$0xff]
      %v897 = vsel %vm210, %v889, 0
      %v900 = vsel %vm210, %v890, 0
      %v903 = vsel %vm210, %v891, 0
      %v906 = vsel %vm210, %v892, 0
      %908 = vmatprep.subr.mxu0 0.0
      %909 = vmatpush1.msra.mxu0 %v894
      %910 = vmatprep.subr.mxu0 0.0
      %911 = vmatpush1.msra.mxu0 %v895
      %912 = vmatprep.subr.mxu0 0.0
      %913 = vmatpush1.msra.mxu0 0.0
      %914 = vmatprep.subr.mxu0 0.0
      %915 = vmatpush1.msra.mxu0 0.0
      %916 = vmatprep.subr.mxu0 0.0
      %917 = vmatpush1.msra.mxu0 0.0
      %918 = vmatprep.subr.mxu0 0.0
      %919 = vmatpush1.msra.mxu0 0.0
      %920 = vmatprep.subr.mxu0 0.0
      %921 = vmatpush1.msra.mxu0 0.0
      %922 = vmatprep.subr.mxu0 0.0
      %923 = vmatpush1.msra.mxu0 0.0
      %924 = vmatprep.subr.mxu0 0.0
      %925 = vmatpush1.msra.mxu0 0.0
      %926 = vmatprep.subr.mxu0 0.0
      %927 = vmatpush1.msra.mxu0 0.0
      %928 = vmatprep.subr.mxu0 0.0
      %929 = vmatpush1.msra.mxu0 0.0
      %930 = vmatprep.subr.mxu0 0.0
      %931 = vmatpush1.msra.mxu0 0.0
      %932 = vmatprep.subr.mxu0 0.0
      %933 = vmatpush1.msra.mxu0 0.0
      %934 = vmatprep.subr.mxu0 0.0
      %935 = vmatpush1.msra.mxu0 0.0
      %936 = vmatprep.subr.mxu0 0.0
      %937 = vmatpush1.msra.mxu0 0.0
      %938 = vmatprep.subr.mxu0 0.0
      %939 = vmatpush1.msra.mxu0 0.0
      %940 = vmatprep.subr.mxu0 0.0
      %941 = vmatpush1.msra.mxu0 0.0
      %942 = vmatprep.subr.mxu0 0.0
      %943 = vmatpush1.msra.mxu0 0.0
      %944 = vmatprep.subr.mxu0 0.0
      %945 = vmatpush1.msra.mxu0 0.0
      %946 = vmatprep.subr.mxu0 0.0
      %947 = vmatpush1.msra.mxu0 0.0
      %948 = vmatprep.subr.mxu0 0.0
      %949 = vmatpush1.msra.mxu0 0.0
      %950 = vmatprep.subr.mxu0 0.0
      %951 = vmatpush1.msra.mxu0 0.0
      %952 = vmatprep.subr.mxu0 0.0
      %953 = vmatpush1.msra.mxu0 0.0
      %954 = vmatprep.subr.mxu0 0.0
      %955 = vmatpush1.msra.mxu0 0.0
      %956 = vmatprep.subr.mxu0 0.0
      %957 = vmatpush1.msra.mxu0 0.0
      %958 = vmatprep.subr.mxu0 0.0
      %959 = vmatpush1.msra.mxu0 0.0
      %960 = vmatprep.subr.mxu0 0.0
      %961 = vmatpush1.msra.mxu0 0.0
      %962 = vmatprep.subr.mxu0 0.0
      %963 = vmatpush1.msra.mxu0 0.0
      %964 = vmatprep.subr.mxu0 0.0
      %965 = vmatpush1.msra.mxu0 0.0
      %966 = vmatprep.subr.mxu0 0.0
      %967 = vmatpush1.msra.mxu0 0.0
      %968 = vmatprep.subr.mxu0 0.0
      %969 = vmatpush1.msra.mxu0 0.0
      %970 = vmatprep.subr.mxu0 0.0
      %971 = vmatpush1.msra.mxu0 0.0
      %972 = vmatprep.mubr.f32.mxu0 0.0
      %973 = vmatmul.mubr.f32.gmra.mrb[0].mxu0 %v897
      %v974 = vpop.f32.mrb[0].mxu0
      %v975 = vadd.f32 0.0, %v974
      %v976 = vpop.f32.mrb[0].mxu0
      %977 = vmatprep.mubr.f32.mxu0 0.0
      %978 = vmatmul.mubr.f32.gmra.mrb[0].mxu0 %v900
      %v979 = vpop.f32.mrb[0].mxu0
      %v980 = vadd.f32 0.0, %v979
      %v981 = vpop.f32.mrb[0].mxu0
      %982 = vmatprep.mubr.f32.mxu0 0.0
      %983 = vmatmul.mubr.f32.gmra.mrb[0].mxu0 %v903
      %v984 = vpop.f32.mrb[0].mxu0
      %v985 = vadd.f32 0.0, %v984
      %v986 = vpop.f32.mrb[0].mxu0
      %987 = vmatprep.mubr.f32.mxu0 0.0
      %988 = vmatmul.mubr.f32.gmra.mrb[0].mxu0 %v906
      %v989 = vpop.f32.mrb[0].mxu0
      %v990 = vadd.f32 0.0, %v989
      %v991 = vpop.f32.mrb[0].mxu0
      %992 = vdwg.mxu0
      %v993 = vadd.f32 %v856, %v975
      %v994 = vadd.f32 %v857, %v980
      %v995 = vadd.f32 %v858, %v985
      %v996 = vadd.f32 %v859, %v990
      %v997 = vld [vmem:[#allocation2 + $0x8] sm:$0xff]
      %v998 = vld [vmem:[#allocation2 + $0x10] sm:$0xff]
      %v999 = vld [vmem:[#allocation2 + $0x18] sm:$0xff]
      %v1000 = vld [vmem:[#allocation2 + $0x20] sm:$0xff]
      %s1001 = scalar_lea.vmem %s2, 192
      %v1002 = vld [vmem:[%s1001] sm:$0xff]
      %v1003 = vld [vmem:[%s1001 + $0x8] sm:$0xff]
      %v1004 = vld [vmem:[%s1001 + $0x10] sm:$0xff]
      %v1005 = vld [vmem:[%s1001 + $0x18] sm:$0xff]
      %1007 = vset.pattern.permute.xlu0 0
      %1008 = vperm.xlu0 %1007, %v1002
      %v1009 = vpop.permute.xlu0 %1008
      %1012 = vset.pattern.permute.xlu0 0
      %1013 = vperm.xlu0 %1012, %v1003
      %v1014 = vpop.permute.xlu0 %1013
      %1017 = vset.pattern.permute.xlu0 0
      %1018 = vperm.xlu0 %1017, %v1004
      %v1019 = vpop.permute.xlu0 %1018
      %1022 = vset.pattern.permute.xlu0 0
      %1023 = vperm.xlu0 %1022, %v1005
      %v1024 = vpop.permute.xlu0 %1023
      %v1026 = vmul.f32 %v997, %v1009
      %v1027 = vmul.f32 %v998, %v1014
      %v1028 = vmul.f32 %v999, %v1019
      %v1029 = vmul.f32 %v1000, %v1024
      %s1030 = scalar_lea.vmem %s1, 96
      %v1031 = vld [vmem:[%s1030] sm:$0xff]
      %v1032 = vld [vmem:[%s1030 + $0x8] sm:$0xff]
      %v1034 = vsel %vm210, %v1026, 0
      %v1037 = vsel %vm210, %v1027, 0
      %v1040 = vsel %vm210, %v1028, 0
      %v1043 = vsel %vm210, %v1029, 0
      %1045 = vmatprep.subr.mxu0 0.0
      %1046 = vmatpush1.msra.mxu0 %v1031
      %1047 = vmatprep.subr.mxu0 0.0
      %1048 = vmatpush1.msra.mxu0 %v1032
      %1049 = vmatprep.subr.mxu0 0.0
      %1050 = vmatpush1.msra.mxu0 0.0
      %1051 = vmatprep.subr.mxu0 0.0
      %1052 = vmatpush1.msra.mxu0 0.0
      %1053 = vmatprep.subr.mxu0 0.0
      %1054 = vmatpush1.msra.mxu0 0.0
      %1055 = vmatprep.subr.mxu0 0.0
      %1056 = vmatpush1.msra.mxu0 0.0
      %1057 = vmatprep.subr.mxu0 0.0
      %1058 = vmatpush1.msra.mxu0 0.0
      %1059 = vmatprep.subr.mxu0 0.0
      %1060 = vmatpush1.msra.mxu0 0.0
      %1061 = vmatprep.subr.mxu0 0.0
      %1062 = vmatpush1.msra.mxu0 0.0
      %1063 = vmatprep.subr.mxu0 0.0
      %1064 = vmatpush1.msra.mxu0 0.0
      %1065 = vmatprep.subr.mxu0 0.0
      %1066 = vmatpush1.msra.mxu0 0.0
      %1067 = vmatprep.subr.mxu0 0.0
      %1068 = vmatpush1.msra.mxu0 0.0
      %1069 = vmatprep.subr.mxu0 0.0
      %1070 = vmatpush1.msra.mxu0 0.0
      %1071 = vmatprep.subr.mxu0 0.0
      %1072 = vmatpush1.msra.mxu0 0.0
      %1073 = vmatprep.subr.mxu0 0.0
      %1074 = vmatpush1.msra.mxu0 0.0
      %1075 = vmatprep.subr.mxu0 0.0
      %1076 = vmatpush1.msra.mxu0 0.0
      %1077 = vmatprep.subr.mxu0 0.0
      %1078 = vmatpush1.msra.mxu0 0.0
      %1079 = vmatprep.subr.mxu0 0.0
      %1080 = vmatpush1.msra.mxu0 0.0
      %1081 = vmatprep.subr.mxu0 0.0
      %1082 = vmatpush1.msra.mxu0 0.0
      %1083 = vmatprep.subr.mxu0 0.0
      %1084 = vmatpush1.msra.mxu0 0.0
      %1085 = vmatprep.subr.mxu0 0.0
      %1086 = vmatpush1.msra.mxu0 0.0
      %1087 = vmatprep.subr.mxu0 0.0
      %1088 = vmatpush1.msra.mxu0 0.0
      %1089 = vmatprep.subr.mxu0 0.0
      %1090 = vmatpush1.msra.mxu0 0.0
      %1091 = vmatprep.subr.mxu0 0.0
      %1092 = vmatpush1.msra.mxu0 0.0
      %1093 = vmatprep.subr.mxu0 0.0
      %1094 = vmatpush1.msra.mxu0 0.0
      %1095 = vmatprep.subr.mxu0 0.0
      %1096 = vmatpush1.msra.mxu0 0.0
      %1097 = vmatprep.subr.mxu0 0.0
      %1098 = vmatpush1.msra.mxu0 0.0
      %1099 = vmatprep.subr.mxu0 0.0
      %1100 = vmatpush1.msra.mxu0 0.0
      %1101 = vmatprep.subr.mxu0 0.0
      %1102 = vmatpush1.msra.mxu0 0.0
      %1103 = vmatprep.subr.mxu0 0.0
      %1104 = vmatpush1.msra.mxu0 0.0
      %1105 = vmatprep.subr.mxu0 0.0
      %1106 = vmatpush1.msra.mxu0 0.0
      %1107 = vmatprep.subr.mxu0 0.0
      %1108 = vmatpush1.msra.mxu0 0.0
      %1109 = vmatprep.mubr.f32.mxu0 0.0
      %1110 = vmatmul.mubr.f32.gmra.mrb[0].mxu0 %v1034
      %v1111 = vpop.f32.mrb[0].mxu0
      %v1112 = vadd.f32 0.0, %v1111
      %v1113 = vpop.f32.mrb[0].mxu0
      %1114 = vmatprep.mubr.f32.mxu0 0.0
      %1115 = vmatmul.mubr.f32.gmra.mrb[0].mxu0 %v1037
      %v1116 = vpop.f32.mrb[0].mxu0
      %v1117 = vadd.f32 0.0, %v1116
      %v1118 = vpop.f32.mrb[0].mxu0
      %1119 = vmatprep.mubr.f32.mxu0 0.0
      %1120 = vmatmul.mubr.f32.gmra.mrb[0].mxu0 %v1040
      %v1121 = vpop.f32.mrb[0].mxu0
      %v1122 = vadd.f32 0.0, %v1121
      %v1123 = vpop.f32.mrb[0].mxu0
      %1124 = vmatprep.mubr.f32.mxu0 0.0
      %1125 = vmatmul.mubr.f32.gmra.mrb[0].mxu0 %v1043
      %v1126 = vpop.f32.mrb[0].mxu0
      %v1127 = vadd.f32 0.0, %v1126
      %v1128 = vpop.f32.mrb[0].mxu0
      %1129 = vdwg.mxu0
      %v1130 = vadd.f32 %v993, %v1112
      %v1131 = vadd.f32 %v994, %v1117
      %v1132 = vadd.f32 %v995, %v1122
      %v1133 = vadd.f32 %v996, %v1127
      %v1134 = vld [vmem:[#allocation2 + $0x9] sm:$0xff]
      %v1135 = vld [vmem:[#allocation2 + $0x11] sm:$0xff]
      %v1136 = vld [vmem:[#allocation2 + $0x19] sm:$0xff]
      %v1137 = vld [vmem:[#allocation2 + $0x21] sm:$0xff]
      %s1138 = scalar_lea.vmem %s2, 224
      %v1139 = vld [vmem:[%s1138] sm:$0xff]
      %v1140 = vld [vmem:[%s1138 + $0x8] sm:$0xff]
      %v1141 = vld [vmem:[%s1138 + $0x10] sm:$0xff]
      %v1142 = vld [vmem:[%s1138 + $0x18] sm:$0xff]
      %1144 = vset.pattern.permute.xlu0 0
      %1145 = vperm.xlu0 %1144, %v1139
      %v1146 = vpop.permute.xlu0 %1145
      %1149 = vset.pattern.permute.xlu0 0
      %1150 = vperm.xlu0 %1149, %v1140
      %v1151 = vpop.permute.xlu0 %1150
      %1154 = vset.pattern.permute.xlu0 0
      %1155 = vperm.xlu0 %1154, %v1141
      %v1156 = vpop.permute.xlu0 %1155
      %1159 = vset.pattern.permute.xlu0 0
      %1160 = vperm.xlu0 %1159, %v1142
      %v1161 = vpop.permute.xlu0 %1160
      %v1163 = vmul.f32 %v1134, %v1146
      %v1164 = vmul.f32 %v1135, %v1151
      %v1165 = vmul.f32 %v1136, %v1156
      %v1166 = vmul.f32 %v1137, %v1161
      %s1167 = scalar_lea.vmem %s1, 112
      %v1168 = vld [vmem:[%s1167] sm:$0xff]
      %v1169 = vld [vmem:[%s1167 + $0x8] sm:$0xff]
      %v1171 = vsel %vm210, %v1163, 0
      %v1174 = vsel %vm210, %v1164, 0
      %v1177 = vsel %vm210, %v1165, 0
      %v1180 = vsel %vm210, %v1166, 0
      %1182 = vmatprep.subr.mxu0 0.0
      %1183 = vmatpush1.msra.mxu0 %v1168
      %1184 = vmatprep.subr.mxu0 0.0
      %1185 = vmatpush1.msra.mxu0 %v1169
      %1186 = vmatprep.subr.mxu0 0.0
      %1187 = vmatpush1.msra.mxu0 0.0
      %1188 = vmatprep.subr.mxu0 0.0
      %1189 = vmatpush1.msra.mxu0 0.0
      %1190 = vmatprep.subr.mxu0 0.0
      %1191 = vmatpush1.msra.mxu0 0.0
      %1192 = vmatprep.subr.mxu0 0.0
      %1193 = vmatpush1.msra.mxu0 0.0
      %1194 = vmatprep.subr.mxu0 0.0
      %1195 = vmatpush1.msra.mxu0 0.0
      %1196 = vmatprep.subr.mxu0 0.0
      %1197 = vmatpush1.msra.mxu0 0.0
      %1198 = vmatprep.subr.mxu0 0.0
      %1199 = vmatpush1.msra.mxu0 0.0
      %1200 = vmatprep.subr.mxu0 0.0
      %1201 = vmatpush1.msra.mxu0 0.0
      %1202 = vmatprep.subr.mxu0 0.0
      %1203 = vmatpush1.msra.mxu0 0.0
      %1204 = vmatprep.subr.mxu0 0.0
      %1205 = vmatpush1.msra.mxu0 0.0
      %1206 = vmatprep.subr.mxu0 0.0
      %1207 = vmatpush1.msra.mxu0 0.0
      %1208 = vmatprep.subr.mxu0 0.0
      %1209 = vmatpush1.msra.mxu0 0.0
      %1210 = vmatprep.subr.mxu0 0.0
      %1211 = vmatpush1.msra.mxu0 0.0
      %1212 = vmatprep.subr.mxu0 0.0
      %1213 = vmatpush1.msra.mxu0 0.0
      %1214 = vmatprep.subr.mxu0 0.0
      %1215 = vmatpush1.msra.mxu0 0.0
      %1216 = vmatprep.subr.mxu0 0.0
      %1217 = vmatpush1.msra.mxu0 0.0
      %1218 = vmatprep.subr.mxu0 0.0
      %1219 = vmatpush1.msra.mxu0 0.0
      %1220 = vmatprep.subr.mxu0 0.0
      %1221 = vmatpush1.msra.mxu0 0.0
      %1222 = vmatprep.subr.mxu0 0.0
      %1223 = vmatpush1.msra.mxu0 0.0
      %1224 = vmatprep.subr.mxu0 0.0
      %1225 = vmatpush1.msra.mxu0 0.0
      %1226 = vmatprep.subr.mxu0 0.0
      %1227 = vmatpush1.msra.mxu0 0.0
      %1228 = vmatprep.subr.mxu0 0.0
      %1229 = vmatpush1.msra.mxu0 0.0
      %1230 = vmatprep.subr.mxu0 0.0
      %1231 = vmatpush1.msra.mxu0 0.0
      %1232 = vmatprep.subr.mxu0 0.0
      %1233 = vmatpush1.msra.mxu0 0.0
      %1234 = vmatprep.subr.mxu0 0.0
      %1235 = vmatpush1.msra.mxu0 0.0
      %1236 = vmatprep.subr.mxu0 0.0
      %1237 = vmatpush1.msra.mxu0 0.0
      %1238 = vmatprep.subr.mxu0 0.0
      %1239 = vmatpush1.msra.mxu0 0.0
      %1240 = vmatprep.subr.mxu0 0.0
      %1241 = vmatpush1.msra.mxu0 0.0
      %1242 = vmatprep.subr.mxu0 0.0
      %1243 = vmatpush1.msra.mxu0 0.0
      %1244 = vmatprep.subr.mxu0 0.0
      %1245 = vmatpush1.msra.mxu0 0.0
      %1246 = vmatprep.mubr.f32.mxu0 0.0
      %1247 = vmatmul.mubr.f32.gmra.mrb[0].mxu0 %v1171
      %v1248 = vpop.f32.mrb[0].mxu0
      %v1249 = vadd.f32 0.0, %v1248
      %v1250 = vpop.f32.mrb[0].mxu0
      %1251 = vmatprep.mubr.f32.mxu0 0.0
      %1252 = vmatmul.mubr.f32.gmra.mrb[0].mxu0 %v1174
      %v1253 = vpop.f32.mrb[0].mxu0
      %v1254 = vadd.f32 0.0, %v1253
      %v1255 = vpop.f32.mrb[0].mxu0
      %1256 = vmatprep.mubr.f32.mxu0 0.0
      %1257 = vmatmul.mubr.f32.gmra.mrb[0].mxu0 %v1177
      %v1258 = vpop.f32.mrb[0].mxu0
      %v1259 = vadd.f32 0.0, %v1258
      %v1260 = vpop.f32.mrb[0].mxu0
      %1261 = vmatprep.mubr.f32.mxu0 0.0
      %1262 = vmatmul.mubr.f32.gmra.mrb[0].mxu0 %v1180
      %v1263 = vpop.f32.mrb[0].mxu0
      %v1264 = vadd.f32 0.0, %v1263
      %v1265 = vpop.f32.mrb[0].mxu0
      %1266 = vdwg.mxu0
      %v1267 = vadd.f32 %v1130, %v1249
      %v1268 = vadd.f32 %v1131, %v1254
      %v1269 = vadd.f32 %v1132, %v1259
      %v1270 = vadd.f32 %v1133, %v1264
      %v1271 = vld [vmem:[#allocation2 + $0xa] sm:$0xff]
      %v1272 = vld [vmem:[#allocation2 + $0x12] sm:$0xff]
      %v1273 = vld [vmem:[#allocation2 + $0x1a] sm:$0xff]
      %v1274 = vld [vmem:[#allocation2 + $0x22] sm:$0xff]
      %s1275 = scalar_lea.vmem %s2, 256
      %v1276 = vld [vmem:[%s1275] sm:$0xff]
      %v1277 = vld [vmem:[%s1275 + $0x8] sm:$0xff]
      %v1278 = vld [vmem:[%s1275 + $0x10] sm:$0xff]
      %v1279 = vld [vmem:[%s1275 + $0x18] sm:$0xff]
      %1281 = vset.pattern.permute.xlu0 0
      %1282 = vperm.xlu0 %1281, %v1276
      %v1283 = vpop.permute.xlu0 %1282
      %1286 = vset.pattern.permute.xlu0 0
      %1287 = vperm.xlu0 %1286, %v1277
      %v1288 = vpop.permute.xlu0 %1287
      %1291 = vset.pattern.permute.xlu0 0
      %1292 = vperm.xlu0 %1291, %v1278
      %v1293 = vpop.permute.xlu0 %1292
      %1296 = vset.pattern.permute.xlu0 0
      %1297 = vperm.xlu0 %1296, %v1279
      %v1298 = vpop.permute.xlu0 %1297
      %v1300 = vmul.f32 %v1271, %v1283
      %v1301 = vmul.f32 %v1272, %v1288
      %v1302 = vmul.f32 %v1273, %v1293
      %v1303 = vmul.f32 %v1274, %v1298
      %s1304 = scalar_lea.vmem %s1, 128
      %v1305 = vld [vmem:[%s1304] sm:$0xff]
      %v1306 = vld [vmem:[%s1304 + $0x8] sm:$0xff]
      %v1308 = vsel %vm210, %v1300, 0
      %v1311 = vsel %vm210, %v1301, 0
      %v1314 = vsel %vm210, %v1302, 0
      %v1317 = vsel %vm210, %v1303, 0
      %1319 = vmatprep.subr.mxu0 0.0
      %1320 = vmatpush1.msra.mxu0 %v1305
      %1321 = vmatprep.subr.mxu0 0.0
      %1322 = vmatpush1.msra.mxu0 %v1306
      %1323 = vmatprep.subr.mxu0 0.0
      %1324 = vmatpush1.msra.mxu0 0.0
      %1325 = vmatprep.subr.mxu0 0.0
      %1326 = vmatpush1.msra.mxu0 0.0
      %1327 = vmatprep.subr.mxu0 0.0
      %1328 = vmatpush1.msra.mxu0 0.0
      %1329 = vmatprep.subr.mxu0 0.0
      %1330 = vmatpush1.msra.mxu0 0.0
      %1331 = vmatprep.subr.mxu0 0.0
      %1332 = vmatpush1.msra.mxu0 0.0
      %1333 = vmatprep.subr.mxu0 0.0
      %1334 = vmatpush1.msra.mxu0 0.0
      %1335 = vmatprep.subr.mxu0 0.0
      %1336 = vmatpush1.msra.mxu0 0.0
      %1337 = vmatprep.subr.mxu0 0.0
      %1338 = vmatpush1.msra.mxu0 0.0
      %1339 = vmatprep.subr.mxu0 0.0
      %1340 = vmatpush1.msra.mxu0 0.0
      %1341 = vmatprep.subr.mxu0 0.0
      %1342 = vmatpush1.msra.mxu0 0.0
      %1343 = vmatprep.subr.mxu0 0.0
      %1344 = vmatpush1.msra.mxu0 0.0
      %1345 = vmatprep.subr.mxu0 0.0
      %1346 = vmatpush1.msra.mxu0 0.0
      %1347 = vmatprep.subr.mxu0 0.0
      %1348 = vmatpush1.msra.mxu0 0.0
      %1349 = vmatprep.subr.mxu0 0.0
      %1350 = vmatpush1.msra.mxu0 0.0
      %1351 = vmatprep.subr.mxu0 0.0
      %1352 = vmatpush1.msra.mxu0 0.0
      %1353 = vmatprep.subr.mxu0 0.0
      %1354 = vmatpush1.msra.mxu0 0.0
      %1355 = vmatprep.subr.mxu0 0.0
      %1356 = vmatpush1.msra.mxu0 0.0
      %1357 = vmatprep.subr.mxu0 0.0
      %1358 = vmatpush1.msra.mxu0 0.0
      %1359 = vmatprep.subr.mxu0 0.0
      %1360 = vmatpush1.msra.mxu0 0.0
      %1361 = vmatprep.subr.mxu0 0.0
      %1362 = vmatpush1.msra.mxu0 0.0
      %1363 = vmatprep.subr.mxu0 0.0
      %1364 = vmatpush1.msra.mxu0 0.0
      %1365 = vmatprep.subr.mxu0 0.0
      %1366 = vmatpush1.msra.mxu0 0.0
      %1367 = vmatprep.subr.mxu0 0.0
      %1368 = vmatpush1.msra.mxu0 0.0
      %1369 = vmatprep.subr.mxu0 0.0
      %1370 = vmatpush1.msra.mxu0 0.0
      %1371 = vmatprep.subr.mxu0 0.0
      %1372 = vmatpush1.msra.mxu0 0.0
      %1373 = vmatprep.subr.mxu0 0.0
      %1374 = vmatpush1.msra.mxu0 0.0
      %1375 = vmatprep.subr.mxu0 0.0
      %1376 = vmatpush1.msra.mxu0 0.0
      %1377 = vmatprep.subr.mxu0 0.0
      %1378 = vmatpush1.msra.mxu0 0.0
      %1379 = vmatprep.subr.mxu0 0.0
      %1380 = vmatpush1.msra.mxu0 0.0
      %1381 = vmatprep.subr.mxu0 0.0
      %1382 = vmatpush1.msra.mxu0 0.0
      %1383 = vmatprep.mubr.f32.mxu0 0.0
      %1384 = vmatmul.mubr.f32.gmra.mrb[0].mxu0 %v1308
      %v1385 = vpop.f32.mrb[0].mxu0
      %v1386 = vadd.f32 0.0, %v1385
      %v1387 = vpop.f32.mrb[0].mxu0
      %1388 = vmatprep.mubr.f32.mxu0 0.0
      %1389 = vmatmul.mubr.f32.gmra.mrb[0].mxu0 %v1311
      %v1390 = vpop.f32.mrb[0].mxu0
      %v1391 = vadd.f32 0.0, %v1390
      %v1392 = vpop.f32.mrb[0].mxu0
      %1393 = vmatprep.mubr.f32.mxu0 0.0
      %1394 = vmatmul.mubr.f32.gmra.mrb[0].mxu0 %v1314
      %v1395 = vpop.f32.mrb[0].mxu0
      %v1396 = vadd.f32 0.0, %v1395
      %v1397 = vpop.f32.mrb[0].mxu0
      %1398 = vmatprep.mubr.f32.mxu0 0.0
      %1399 = vmatmul.mubr.f32.gmra.mrb[0].mxu0 %v1317
      %v1400 = vpop.f32.mrb[0].mxu0
      %v1401 = vadd.f32 0.0, %v1400
      %v1402 = vpop.f32.mrb[0].mxu0
      %1403 = vdwg.mxu0
      %v1404 = vadd.f32 %v1267, %v1386
      %v1405 = vadd.f32 %v1268, %v1391
      %v1406 = vadd.f32 %v1269, %v1396
      %v1407 = vadd.f32 %v1270, %v1401
      %v1408 = vxor.u32 %v1404, 2147483648
      %v1409 = vxor.u32 %v1405, 2147483648
      %v1410 = vxor.u32 %v1406, 2147483648
      %v1411 = vxor.u32 %v1407, 2147483648
      %v1412 = vmul.f32 %v1408, 1.442695
      %v1413 = vpow.pop %v1412
      %v1414 = vmul.f32 %v1409, 1.442695
      %v1415 = vpow.pop %v1414
      %v1416 = vmul.f32 %v1410, 1.442695
      %v1417 = vpow.pop %v1416
      %v1418 = vmul.f32 %v1411, 1.442695
      %v1419 = vpow.pop %v1418
      %v1420 = vadd.f32 %v1413, 1.0
      %v1421 = vadd.f32 %v1415, 1.0
      %v1422 = vadd.f32 %v1417, 1.0
      %v1423 = vadd.f32 %v1419, 1.0
      %v1424 = vrcp.pop %v1420
      %v1425 = vmul.f32 1.0, %v1424
      %v1426 = vrcp.pop %v1421
      %v1427 = vmul.f32 1.0, %v1426
      %v1428 = vrcp.pop %v1422
      %v1429 = vmul.f32 1.0, %v1428
      %v1430 = vrcp.pop %v1423
      %v1431 = vmul.f32 1.0, %v1430
      %v1432 = vtanh.pop %v1404
      %v1433 = vtanh.pop %v1405
      %v1434 = vtanh.pop %v1406
      %v1435 = vtanh.pop %v1407
      %v1436 = vld [vmem:[#allocation3] sm:$0xff]
      %v1437 = vld [vmem:[#allocation3 + $0x8] sm:$0xff]
      %v1438 = vld [vmem:[#allocation3 + $0x10] sm:$0xff]
      %v1439 = vld [vmem:[#allocation3 + $0x18] sm:$0xff]
      %1444 = vrot.lane.b32.xlu0 %v1436, 16
      %v1445 = vpop.permute.xlu0 %1444
      %1446 = vrot.lane.b32.xlu0 %v1437, 16
      %v1447 = vpop.permute.xlu0 %1446
      %1448 = vrot.lane.b32.xlu0 %v1438, 16
      %v1449 = vpop.permute.xlu0 %1448
      %1450 = vrot.lane.b32.xlu0 %v1439, 16
      %v1451 = vpop.permute.xlu0 %1450
      %v1456 = vmul.f32 %v1425, %v1445
      %v1457 = vmul.f32 %v1427, %v1447
      %v1458 = vmul.f32 %v1429, %v1449
      %v1459 = vmul.f32 %v1431, %v1451
      %1464 = vrot.lane.b32.xlu0 %v1432, 96
      %v1465 = vpop.permute.xlu0 %1464
      %1466 = vrot.lane.b32.xlu0 %v1433, 96
      %v1467 = vpop.permute.xlu0 %1466
      %1468 = vrot.lane.b32.xlu0 %v1434, 96
      %v1469 = vpop.permute.xlu0 %1468
      %1470 = vrot.lane.b32.xlu0 %v1435, 96
      %v1471 = vpop.permute.xlu0 %1470
      %v1476 = vmul.f32 %v1425, %v1465
      %v1477 = vmul.f32 %v1427, %v1467
      %v1478 = vmul.f32 %v1429, %v1469
      %v1479 = vmul.f32 %v1431, %v1471
      %1484 = vrot.lane.b32.xlu0 %v1476, 16
      %v1485 = vpop.permute.xlu0 %1484
      %1486 = vrot.lane.b32.xlu0 %v1477, 16
      %v1487 = vpop.permute.xlu0 %1486
      %1488 = vrot.lane.b32.xlu0 %v1478, 16
      %v1489 = vpop.permute.xlu0 %1488
      %1490 = vrot.lane.b32.xlu0 %v1479, 16
      %v1491 = vpop.permute.xlu0 %1490
      %v1496 = vadd.f32 %v1456, %v1485
      %v1497 = vadd.f32 %v1457, %v1487
      %v1498 = vadd.f32 %v1458, %v1489
      %v1499 = vadd.f32 %v1459, %v1491
      %v1500 = vtanh.pop %v1496
      %v1501 = vtanh.pop %v1497
      %v1502 = vtanh.pop %v1498
      %v1503 = vtanh.pop %v1499
      %1508 = vrot.lane.b32.xlu0 %v1500, 32
      %v1509 = vpop.permute.xlu0 %1508
      %1510 = vrot.lane.b32.xlu0 %v1501, 32
      %v1511 = vpop.permute.xlu0 %1510
      %1512 = vrot.lane.b32.xlu0 %v1502, 32
      %v1513 = vpop.permute.xlu0 %1512
      %1514 = vrot.lane.b32.xlu0 %v1503, 32
      %v1515 = vpop.permute.xlu0 %1514
      %v1520 = vmul.f32 %v1425, %v1509
      %v1521 = vmul.f32 %v1427, %v1511
      %v1522 = vmul.f32 %v1429, %v1513
      %v1523 = vmul.f32 %v1431, %v1515
      %1528 = vrot.lane.b32.xlu0 %v1496, 112
      %v1529 = vpop.permute.xlu0 %1528
      %1530 = vrot.lane.b32.xlu0 %v1497, 112
      %v1531 = vpop.permute.xlu0 %1530
      %1532 = vrot.lane.b32.xlu0 %v1498, 112
      %v1533 = vpop.permute.xlu0 %1532
      %1534 = vrot.lane.b32.xlu0 %v1499, 112
      %v1535 = vpop.permute.xlu0 %1534
      %1540 = vst.msk [vmem:[#allocation3] sm:$0xff] %vm210, %v1529
      %1541 = vst.msk [vmem:[#allocation3 + $0x8] sm:$0xff] %vm210, %v1531
      %1542 = vst.msk [vmem:[#allocation3 + $0x10] sm:$0xff] %vm210, %v1533
      %1543 = vst.msk [vmem:[#allocation3 + $0x18] sm:$0xff] %vm210, %v1535
      %1548 = vrot.lane.b32.xlu0 %v1520, 80
      %v1549 = vpop.permute.xlu0 %1548
      %1550 = vrot.lane.b32.xlu0 %v1521, 80
      %v1551 = vpop.permute.xlu0 %1550
      %1552 = vrot.lane.b32.xlu0 %v1522, 80
      %v1553 = vpop.permute.xlu0 %1552
      %1554 = vrot.lane.b32.xlu0 %v1523, 80
      %v1555 = vpop.permute.xlu0 %1554
      %1560 = vst.msk [vmem:[#allocation2 + $0x5] sm:$0xff] %vm210, %v1549
      %1561 = vst.msk [vmem:[#allocation2 + $0xd] sm:$0xff] %vm210, %v1551
      %1562 = vst.msk [vmem:[#allocation2 + $0x15] sm:$0xff] %vm210, %v1553
      %1563 = vst.msk [vmem:[#allocation2 + $0x1d] sm:$0xff] %vm210, %v1555
      %1564 = vst.msk [vmem:[%s3] sm:$0xff] %vm210, %v1549
      %1565 = vst.msk [vmem:[%s3 + $0x8] sm:$0xff] %vm210, %v1551
      %1566 = vst.msk [vmem:[%s3 + $0x10] sm:$0xff] %vm210, %v1553
      %1567 = vst.msk [vmem:[%s3 + $0x18] sm:$0xff] %vm210, %v1555
      // Predicated region
      $region37: #{forward.10} parent=31 // pred_check
        %p1568 = pneg %p95
      $region38: #{forward.10} parent=31 // pred_check_branch
        %1570 = sbr.rel (%p1568) target = $region40
      $region39: #{forward.10} parent=31 // pred_region
        _
      $region40: #{forward.10} parent=31 // pred_fallthru
        _
      // Predicated region
      $region41: #{forward.10} parent=31 // pred_check
        %p1571 = pneg %p95
      $region42: #{forward.10} parent=31 // pred_check_branch
        %1573 = sbr.rel (%p1571) target = $region44
      $region43: #{forward.10} parent=31 // pred_region
        _
      $region44: #{forward.10} parent=31 // pred_fallthru
        _
    $region32: #{forward.10} parent=5 // pred_fallthru
      _
    %p1574 = scmp.le.s32.totalorder 2, %s9
    // Predicated region
    $region45: #{forward.10} parent=5 // pred_check
      %p1575 = pneg %p1574
    $region46: #{forward.10} parent=5 // pred_check_branch
      %1577 = sbr.rel (%p1575) target = $region48
    $region47: #{forward.10} parent=5 // pred_region
      %s1578 = ssub.s32 %s9, 2
    $region48: #{forward.10} parent=5 // pred_fallthru
      _
  $region6: #{forward.10} parent=0 // loop_footer
    %s13 = sadd.s32 1, %s9
  $region7: #{forward.10} parent=0 // loop_footer_branch
    %8 = sbr.rel target = $region3
  $region8: #{forward.10} parent=0 // loop_exit
    _

// kernel: forward.11
$region0: #{forward.11}
  #allocation0 [shape = 'u32[]', space=smem, size = 0x4, offset = 0x4, fixed_abs, tag = 'smem constant byte address 0x4 - core index']
  #allocation1 [shape = 'u32[144,128]{1,0:T(1,128)}', space=vmem, size = 0x12000, scoped, tag = 'internal scratch']
  %s0 = inlined_call_operand.vmem [shape: bf16[32,128], index: 0, kind: input, shape index: {}]
  %s1 = inlined_call_operand.vmem [shape: bf16[128,128], index: 1, kind: input, shape index: {}]
  %s2 = inlined_call_operand.vmem [shape: f32[1,128], index: 2, kind: input, shape index: {}]
  %s3 = inlined_call_operand.vmem [shape: f32[1,128], index: 3, kind: input, shape index: {}]
  %s4 = inlined_call_operand.vmem [shape: f32[32,128], index: 4, kind: output, shape index: {}]
  %s5 = sld [smem:[#allocation0]]
  $region26: #{forward.11} parent=0
    _
  %s7 = ssub.s32 1, %s5
  %s8 = scalar_select 0, %s7, %s5
  // Predicated region
  $region2: #{forward.11} parent=0 // pred_check
    _
  $region3: #{forward.11} parent=0 // pred_check_branch
    %10 = sbr.rel (0) target = $region5
  $region4: #{forward.11} parent=0 // pred_region
    _
  $region5: #{forward.11} parent=0 // pred_fallthru
    _
  // Predicated region
  $region6: #{forward.11} parent=0 // pred_check
    _
  $region7: #{forward.11} parent=0 // pred_check_branch
    %12 = sbr.rel (0) target = $region9
  $region8: #{forward.11} parent=0 // pred_region
    _
  $region9: #{forward.11} parent=0 // pred_fallthru
    _
  // Predicated region
  $region10: #{forward.11} parent=0 // pred_check
    _
  $region11: #{forward.11} parent=0 // pred_check_branch
    %14 = sbr.rel (0) target = $region13
  $region12: #{forward.11} parent=0 // pred_region
    _
  $region13: #{forward.11} parent=0 // pred_fallthru
    _
  // Predicated region
  $region14: #{forward.11} parent=0 // pred_check
    _
  $region15: #{forward.11} parent=0 // pred_check_branch
    %16 = sbr.rel (0) target = $region17
  $region16: #{forward.11} parent=0 // pred_region
    _
  $region17: #{forward.11} parent=0 // pred_fallthru
    _
  %v18 = vld [vmem:[%s0] sm:$0xf]
  %v19 = vld [vmem:[%s0 + $0x4] sm:$0xf]
  %v20 = vld [vmem:[%s0 + $0x8] sm:$0xf]
  %v21 = vld [vmem:[%s0 + $0xc] sm:$0xf]
  %v22 = vld [vmem:[%s1] sm:$0xf]
  %v23 = vld [vmem:[%s1 + $0x4] sm:$0xf]
  %v24 = vld [vmem:[%s1 + $0x8] sm:$0xf]
  %v25 = vld [vmem:[%s1 + $0xc] sm:$0xf]
  %v26 = vld [vmem:[%s1 + $0x10] sm:$0xf]
  %v27 = vld [vmem:[%s1 + $0x14] sm:$0xf]
  %v28 = vld [vmem:[%s1 + $0x18] sm:$0xf]
  %v29 = vld [vmem:[%s1 + $0x1c] sm:$0xf]
  %v30 = vld [vmem:[%s1 + $0x20] sm:$0xf]
  %v31 = vld [vmem:[%s1 + $0x24] sm:$0xf]
  %v32 = vld [vmem:[%s1 + $0x28] sm:$0xf]
  %v33 = vld [vmem:[%s1 + $0x2c] sm:$0xf]
  %v34 = vld [vmem:[%s1 + $0x30] sm:$0xf]
  %v35 = vld [vmem:[%s1 + $0x34] sm:$0xf]
  %v36 = vld [vmem:[%s1 + $0x38] sm:$0xf]
  %v37 = vld [vmem:[%s1 + $0x3c] sm:$0xf]
  %v42 = vunpack.c.l.b16 %v18
  %v43 = vunpack.c.l.b16 %v19
  %v44 = vunpack.c.l.b16 %v20
  %v45 = vunpack.c.l.b16 %v21
  %v46 = vpack.c.b16 %v43, %v42
  %v47 = vpack.c.b16 %v45, %v44
  %v66 = vunpack.c.l.b16 %v22
  %v67 = vunpack.c.l.b16 %v23
  %v68 = vunpack.c.l.b16 %v24
  %v69 = vunpack.c.l.b16 %v25
  %v70 = vunpack.c.l.b16 %v26
  %v71 = vunpack.c.l.b16 %v27
  %v72 = vunpack.c.l.b16 %v28
  %v73 = vunpack.c.l.b16 %v29
  %v74 = vunpack.c.l.b16 %v30
  %v75 = vunpack.c.l.b16 %v31
  %v76 = vunpack.c.l.b16 %v32
  %v77 = vunpack.c.l.b16 %v33
  %v78 = vunpack.c.l.b16 %v34
  %v79 = vunpack.c.l.b16 %v35
  %v80 = vunpack.c.l.b16 %v36
  %v81 = vunpack.c.l.b16 %v37
  %v82 = vpack.c.b16 %v67, %v66
  %v83 = vpack.c.b16 %v69, %v68
  %v84 = vpack.c.b16 %v71, %v70
  %v85 = vpack.c.b16 %v73, %v72
  %v86 = vpack.c.b16 %v75, %v74
  %v87 = vpack.c.b16 %v77, %v76
  %v88 = vpack.c.b16 %v79, %v78
  %v89 = vpack.c.b16 %v81, %v80
  %98 = vmatprep.subr.bf16.mxu0 0
  %99 = vmatpush1.bf16.msra.mxu0 %v82
  %100 = vmatprep.subr.bf16.mxu0 0
  %101 = vmatpush1.bf16.msra.mxu0 %v83
  %102 = vmatprep.subr.bf16.mxu0 0
  %103 = vmatpush1.bf16.msra.mxu0 %v84
  %104 = vmatprep.subr.bf16.mxu0 0
  %105 = vmatpush1.bf16.msra.mxu0 %v85
  %106 = vmatprep.subr.bf16.mxu0 0
  %107 = vmatpush1.bf16.msra.mxu0 %v86
  %108 = vmatprep.subr.bf16.mxu0 0
  %109 = vmatpush1.bf16.msra.mxu0 %v87
  %110 = vmatprep.subr.bf16.mxu0 0
  %111 = vmatpush1.bf16.msra.mxu0 %v88
  %112 = vmatprep.subr.bf16.mxu0 0
  %113 = vmatpush1.bf16.msra.mxu0 %v89
  %114 = vmatprep.subr.bf16.mxu0 0
  %115 = vmatpush1.bf16.msra.mxu0 0
  %116 = vmatprep.subr.bf16.mxu0 0
  %117 = vmatpush1.bf16.msra.mxu0 0
  %118 = vmatprep.subr.bf16.mxu0 0
  %119 = vmatpush1.bf16.msra.mxu0 0
  %120 = vmatprep.subr.bf16.mxu0 0
  %121 = vmatpush1.bf16.msra.mxu0 0
  %122 = vmatprep.subr.bf16.mxu0 0
  %123 = vmatpush1.bf16.msra.mxu0 0
  %124 = vmatprep.subr.bf16.mxu0 0
  %125 = vmatpush1.bf16.msra.mxu0 0
  %126 = vmatprep.subr.bf16.mxu0 0
  %127 = vmatpush1.bf16.msra.mxu0 0
  %128 = vmatprep.subr.bf16.mxu0 0
  %129 = vmatpush1.bf16.msra.mxu0 0
  %130 = vmatprep.mubr.bf16.mxu0 0
  %131 = vmatmul.mubr.bf16.gmra.mrb[0].mxu0 %v46
  %v132 = vpop.f32.mrb[0].mxu0
  %v133 = vadd.f32 0.0, %v132
  %v134 = vpop.f32.mrb[0].mxu0
  %v135 = vpop.f32.mrb[0].mxu0
  %v136 = vadd.f32 0.0, %v135
  %v137 = vpop.f32.mrb[0].mxu0
  %138 = vmatprep.mubr.bf16.mxu0 0
  %139 = vmatmul.mubr.bf16.gmra.mrb[0].mxu0 %v47
  %v140 = vpop.f32.mrb[0].mxu0
  %v141 = vadd.f32 0.0, %v140
  %v142 = vpop.f32.mrb[0].mxu0
  %v143 = vpop.f32.mrb[0].mxu0
  %v144 = vadd.f32 0.0, %v143
  %v145 = vpop.f32.mrb[0].mxu0
  %146 = vdwg.mxu0
  %v147 = vld [vmem:[%s2] sm:$0x1]
  %v149 = vlaneseq
  %v150 = vshrl.u32 %v149, 7
  %v151 = vsub.s32 0, %v150
  %v152 = vrot.slane %v147, %v151
  %v154 = vmul.f32 %v133, %v152
  %v155 = vmul.f32 %v136, %v152
  %v156 = vmul.f32 %v141, %v152
  %v157 = vmul.f32 %v144, %v152
  %v158 = vld [vmem:[%s3] sm:$0x1]
  %v160 = vlaneseq
  %v161 = vshrl.u32 %v160, 7
  %v162 = vsub.s32 0, %v161
  %v163 = vrot.slane %v158, %v162
  %v165 = vadd.f32 %v154, %v163
  %v166 = vadd.f32 %v155, %v163
  %v167 = vadd.f32 %v156, %v163
  %v168 = vadd.f32 %v157, %v163
  %vm169 = vcmp.gt.f32.partialorder %v165, 0.0
  %vm170 = vcmp.gt.f32.partialorder %v166, 0.0
  %vm171 = vcmp.gt.f32.partialorder %v167, 0.0
  %vm172 = vcmp.gt.f32.partialorder %v168, 0.0
  %v173 = vmul.f32 %v165, 0.2
  %v174 = vmul.f32 %v166, 0.2
  %v175 = vmul.f32 %v167, 0.2
  %v176 = vmul.f32 %v168, 0.2
  %v177 = vsel %vm169, %v165, %v173
  %v178 = vsel %vm170, %v166, %v174
  %v179 = vsel %vm171, %v167, %v175
  %v180 = vsel %vm172, %v168, %v176
  %181 = vst [vmem:[%s4] sm:$0xff] %v177
  %182 = vst [vmem:[%s4 + $0x8] sm:$0xff] %v178
  %183 = vst [vmem:[%s4 + $0x10] sm:$0xff] %v179
  %184 = vst [vmem:[%s4 + $0x18] sm:$0xff] %v180
  // Predicated region
  $region18: #{forward.11} parent=0 // pred_check
    _
  $region19: #{forward.11} parent=0 // pred_check_branch
    %186 = sbr.rel (0) target = $region21
  $region20: #{forward.11} parent=0 // pred_region
    _
  $region21: #{forward.11} parent=0 // pred_fallthru
    _
  // Predicated region
  $region22: #{forward.11} parent=0 // pred_check
    _
  $region23: #{forward.11} parent=0 // pred_check_branch
    %188 = sbr.rel (0) target = $region25
  $region24: #{forward.11} parent=0 // pred_region
    _
  $region25: #{forward.11} parent=0 // pred_fallthru
    _

// kernel: forward.12
$region0: #{forward.12}
  #allocation0 [shape = 'u32[]', space=smem, size = 0x4, offset = 0x4, fixed_abs, tag = 'smem constant byte address 0x4 - core index']
  #allocation1 [shape = 'u32[144,128]{1,0:T(1,128)}', space=vmem, size = 0x12000, scoped, tag = 'internal scratch']
  %s0 = inlined_call_operand.vmem [shape: bf16[128,128], index: 0, kind: input, shape index: {}]
  %s1 = inlined_call_operand.vmem [shape: bf16[128,128], index: 1, kind: input, shape index: {}]
  %s2 = inlined_call_operand.vmem [shape: f32[1,128], index: 2, kind: input, shape index: {}]
  %s3 = inlined_call_operand.vmem [shape: f32[1,128], index: 3, kind: input, shape index: {}]
  %s4 = inlined_call_operand.vmem [shape: f32[128,128], index: 4, kind: output, shape index: {}]
  %s5 = sld [smem:[#allocation0]]
  $region26: #{forward.12} parent=0
    _
  %s7 = ssub.s32 1, %s5
  %s8 = scalar_select 0, %s7, %s5
  // Predicated region
  $region2: #{forward.12} parent=0 // pred_check
    _
  $region3: #{forward.12} parent=0 // pred_check_branch
    %10 = sbr.rel (0) target = $region5
  $region4: #{forward.12} parent=0 // pred_region
    _
  $region5: #{forward.12} parent=0 // pred_fallthru
    _
  // Predicated region
  $region6: #{forward.12} parent=0 // pred_check
    _
  $region7: #{forward.12} parent=0 // pred_check_branch
    %12 = sbr.rel (0) target = $region9
  $region8: #{forward.12} parent=0 // pred_region
    _
  $region9: #{forward.12} parent=0 // pred_fallthru
    _
  // Predicated region
  $region10: #{forward.12} parent=0 // pred_check
    _
  $region11: #{forward.12} parent=0 // pred_check_branch
    %14 = sbr.rel (0) target = $region13
  $region12: #{forward.12} parent=0 // pred_region
    _
  $region13: #{forward.12} parent=0 // pred_fallthru
    _
  // Predicated region
  $region14: #{forward.12} parent=0 // pred_check
    _
  $region15: #{forward.12} parent=0 // pred_check_branch
    %16 = sbr.rel (0) target = $region17
  $region16: #{forward.12} parent=0 // pred_region
    _
  $region17: #{forward.12} parent=0 // pred_fallthru
    _
  %v18 = vld [vmem:[%s0] sm:$0xf]
  %v19 = vld [vmem:[%s0 + $0x4] sm:$0xf]
  %v20 = vld [vmem:[%s0 + $0x8] sm:$0xf]
  %v21 = vld [vmem:[%s0 + $0xc] sm:$0xf]
  %v22 = vld [vmem:[%s0 + $0x10] sm:$0xf]
  %v23 = vld [vmem:[%s0 + $0x14] sm:$0xf]
  %v24 = vld [vmem:[%s0 + $0x18] sm:$0xf]
  %v25 = vld [vmem:[%s0 + $0x1c] sm:$0xf]
  %v26 = vld [vmem:[%s0 + $0x20] sm:$0xf]
  %v27 = vld [vmem:[%s0 + $0x24] sm:$0xf]
  %v28 = vld [vmem:[%s0 + $0x28] sm:$0xf]
  %v29 = vld [vmem:[%s0 + $0x2c] sm:$0xf]
  %v30 = vld [vmem:[%s0 + $0x30] sm:$0xf]
  %v31 = vld [vmem:[%s0 + $0x34] sm:$0xf]
  %v32 = vld [vmem:[%s0 + $0x38] sm:$0xf]
  %v33 = vld [vmem:[%s0 + $0x3c] sm:$0xf]
  %v34 = vld [vmem:[%s1] sm:$0xf]
  %v35 = vld [vmem:[%s1 + $0x4] sm:$0xf]
  %v36 = vld [vmem:[%s1 + $0x8] sm:$0xf]
  %v37 = vld [vmem:[%s1 + $0xc] sm:$0xf]
  %v38 = vld [vmem:[%s1 + $0x10] sm:$0xf]
  %v39 = vld [vmem:[%s1 + $0x14] sm:$0xf]
  %v40 = vld [vmem:[%s1 + $0x18] sm:$0xf]
  %v41 = vld [vmem:[%s1 + $0x1c] sm:$0xf]
  %v42 = vld [vmem:[%s1 + $0x20] sm:$0xf]
  %v43 = vld [vmem:[%s1 + $0x24] sm:$0xf]
  %v44 = vld [vmem:[%s1 + $0x28] sm:$0xf]
  %v45 = vld [vmem:[%s1 + $0x2c] sm:$0xf]
  %v46 = vld [vmem:[%s1 + $0x30] sm:$0xf]
  %v47 = vld [vmem:[%s1 + $0x34] sm:$0xf]
  %v48 = vld [vmem:[%s1 + $0x38] sm:$0xf]
  %v49 = vld [vmem:[%s1 + $0x3c] sm:$0xf]
  %v66 = vunpack.c.l.b16 %v18
  %v67 = vunpack.c.l.b16 %v19
  %v68 = vunpack.c.l.b16 %v20
  %v69 = vunpack.c.l.b16 %v21
  %v70 = vunpack.c.l.b16 %v22
  %v71 = vunpack.c.l.b16 %v23
  %v72 = vunpack.c.l.b16 %v24
  %v73 = vunpack.c.l.b16 %v25
  %v74 = vunpack.c.l.b16 %v26
  %v75 = vunpack.c.l.b16 %v27
  %v76 = vunpack.c.l.b16 %v28
  %v77 = vunpack.c.l.b16 %v29
  %v78 = vunpack.c.l.b16 %v30
  %v79 = vunpack.c.l.b16 %v31
  %v80 = vunpack.c.l.b16 %v32
  %v81 = vunpack.c.l.b16 %v33
  %v82 = vpack.c.b16 %v67, %v66
  %v83 = vpack.c.b16 %v69, %v68
  %v84 = vpack.c.b16 %v71, %v70
  %v85 = vpack.c.b16 %v73, %v72
  %v86 = vpack.c.b16 %v75, %v74
  %v87 = vpack.c.b16 %v77, %v76
  %v88 = vpack.c.b16 %v79, %v78
  %v89 = vpack.c.b16 %v81, %v80
  %v114 = vunpack.c.l.b16 %v34
  %v115 = vunpack.c.l.b16 %v35
  %v116 = vunpack.c.l.b16 %v36
  %v117 = vunpack.c.l.b16 %v37
  %v118 = vunpack.c.l.b16 %v38
  %v119 = vunpack.c.l.b16 %v39
  %v120 = vunpack.c.l.b16 %v40
  %v121 = vunpack.c.l.b16 %v41
  %v122 = vunpack.c.l.b16 %v42
  %v123 = vunpack.c.l.b16 %v43
  %v124 = vunpack.c.l.b16 %v44
  %v125 = vunpack.c.l.b16 %v45
  %v126 = vunpack.c.l.b16 %v46
  %v127 = vunpack.c.l.b16 %v47
  %v128 = vunpack.c.l.b16 %v48
  %v129 = vunpack.c.l.b16 %v49
  %v130 = vpack.c.b16 %v115, %v114
  %v131 = vpack.c.b16 %v117, %v116
  %v132 = vpack.c.b16 %v119, %v118
  %v133 = vpack.c.b16 %v121, %v120
  %v134 = vpack.c.b16 %v123, %v122
  %v135 = vpack.c.b16 %v125, %v124
  %v136 = vpack.c.b16 %v127, %v126
  %v137 = vpack.c.b16 %v129, %v128
  %146 = vmatprep.subr.bf16.mxu0 0
  %147 = vmatpush1.bf16.msra.mxu0 %v130
  %148 = vmatprep.subr.bf16.mxu0 0
  %149 = vmatpush1.bf16.msra.mxu0 %v131
  %150 = vmatprep.subr.bf16.mxu0 0
  %151 = vmatpush1.bf16.msra.mxu0 %v132
  %152 = vmatprep.subr.bf16.mxu0 0
  %153 = vmatpush1.bf16.msra.mxu0 %v133
  %154 = vmatprep.subr.bf16.mxu0 0
  %155 = vmatpush1.bf16.msra.mxu0 %v134
  %156 = vmatprep.subr.bf16.mxu0 0
  %157 = vmatpush1.bf16.msra.mxu0 %v135
  %158 = vmatprep.subr.bf16.mxu0 0
  %159 = vmatpush1.bf16.msra.mxu0 %v136
  %160 = vmatprep.subr.bf16.mxu0 0
  %161 = vmatpush1.bf16.msra.mxu0 %v137
  %162 = vmatprep.subr.bf16.mxu0 0
  %163 = vmatpush1.bf16.msra.mxu0 0
  %164 = vmatprep.subr.bf16.mxu0 0
  %165 = vmatpush1.bf16.msra.mxu0 0
  %166 = vmatprep.subr.bf16.mxu0 0
  %167 = vmatpush1.bf16.msra.mxu0 0
  %168 = vmatprep.subr.bf16.mxu0 0
  %169 = vmatpush1.bf16.msra.mxu0 0
  %170 = vmatprep.subr.bf16.mxu0 0
  %171 = vmatpush1.bf16.msra.mxu0 0
  %172 = vmatprep.subr.bf16.mxu0 0
  %173 = vmatpush1.bf16.msra.mxu0 0
  %174 = vmatprep.subr.bf16.mxu0 0
  %175 = vmatpush1.bf16.msra.mxu0 0
  %176 = vmatprep.subr.bf16.mxu0 0
  %177 = vmatpush1.bf16.msra.mxu0 0
  %178 = vmatprep.mubr.bf16.mxu0 0
  %179 = vmatmul.mubr.bf16.gmra.mrb[0].mxu0 %v82
  %v180 = vpop.f32.mrb[0].mxu0
  %v181 = vadd.f32 0.0, %v180
  %v182 = vpop.f32.mrb[0].mxu0
  %v183 = vpop.f32.mrb[0].mxu0
  %v184 = vadd.f32 0.0, %v183
  %v185 = vpop.f32.mrb[0].mxu0
  %186 = vmatprep.mubr.bf16.mxu0 0
  %187 = vmatmul.mubr.bf16.gmra.mrb[0].mxu0 %v83
  %v188 = vpop.f32.mrb[0].mxu0
  %v189 = vadd.f32 0.0, %v188
  %v190 = vpop.f32.mrb[0].mxu0
  %v191 = vpop.f32.mrb[0].mxu0
  %v192 = vadd.f32 0.0, %v191
  %v193 = vpop.f32.mrb[0].mxu0
  %194 = vmatprep.mubr.bf16.mxu0 0
  %195 = vmatmul.mubr.bf16.gmra.mrb[0].mxu0 %v84
  %v196 = vpop.f32.mrb[0].mxu0
  %v197 = vadd.f32 0.0, %v196
  %v198 = vpop.f32.mrb[0].mxu0
  %v199 = vpop.f32.mrb[0].mxu0
  %v200 = vadd.f32 0.0, %v199
  %v201 = vpop.f32.mrb[0].mxu0
  %202 = vmatprep.mubr.bf16.mxu0 0
  %203 = vmatmul.mubr.bf16.gmra.mrb[0].mxu0 %v85
  %v204 = vpop.f32.mrb[0].mxu0
  %v205 = vadd.f32 0.0, %v204
  %v206 = vpop.f32.mrb[0].mxu0
  %v207 = vpop.f32.mrb[0].mxu0
  %v208 = vadd.f32 0.0, %v207
  %v209 = vpop.f32.mrb[0].mxu0
  %210 = vmatprep.mubr.bf16.mxu0 0
  %211 = vmatmul.mubr.bf16.gmra.mrb[0].mxu0 %v86
  %v212 = vpop.f32.mrb[0].mxu0
  %v213 = vadd.f32 0.0, %v212
  %v214 = vpop.f32.mrb[0].mxu0
  %v215 = vpop.f32.mrb[0].mxu0
  %v216 = vadd.f32 0.0, %v215
  %v217 = vpop.f32.mrb[0].mxu0
  %218 = vmatprep.mubr.bf16.mxu0 0
  %219 = vmatmul.mubr.bf16.gmra.mrb[0].mxu0 %v87
  %v220 = vpop.f32.mrb[0].mxu0
  %v221 = vadd.f32 0.0, %v220
  %v222 = vpop.f32.mrb[0].mxu0
  %v223 = vpop.f32.mrb[0].mxu0
  %v224 = vadd.f32 0.0, %v223
  %v225 = vpop.f32.mrb[0].mxu0
  %226 = vmatprep.mubr.bf16.mxu0 0
  %227 = vmatmul.mubr.bf16.gmra.mrb[0].mxu0 %v88
  %v228 = vpop.f32.mrb[0].mxu0
  %v229 = vadd.f32 0.0, %v228
  %v230 = vpop.f32.mrb[0].mxu0
  %v231 = vpop.f32.mrb[0].mxu0
  %v232 = vadd.f32 0.0, %v231
  %v233 = vpop.f32.mrb[0].mxu0
  %234 = vmatprep.mubr.bf16.mxu0 0
  %235 = vmatmul.mubr.bf16.gmra.mrb[0].mxu0 %v89
  %v236 = vpop.f32.mrb[0].mxu0
  %v237 = vadd.f32 0.0, %v236
  %v238 = vpop.f32.mrb[0].mxu0
  %v239 = vpop.f32.mrb[0].mxu0
  %v240 = vadd.f32 0.0, %v239
  %v241 = vpop.f32.mrb[0].mxu0
  %242 = vdwg.mxu0
  %v243 = vld [vmem:[%s2] sm:$0x1]
  %v245 = vlaneseq
  %v246 = vshrl.u32 %v245, 7
  %v247 = vsub.s32 0, %v246
  %v248 = vrot.slane %v243, %v247
  %v250 = vmul.f32 %v181, %v248
  %v251 = vmul.f32 %v184, %v248
  %v252 = vmul.f32 %v189, %v248
  %v253 = vmul.f32 %v192, %v248
  %v254 = vmul.f32 %v197, %v248
  %v255 = vmul.f32 %v200, %v248
  %v256 = vmul.f32 %v205, %v248
  %v257 = vmul.f32 %v208, %v248
  %v258 = vmul.f32 %v213, %v248
  %v259 = vmul.f32 %v216, %v248
  %v260 = vmul.f32 %v221, %v248
  %v261 = vmul.f32 %v224, %v248
  %v262 = vmul.f32 %v229, %v248
  %v263 = vmul.f32 %v232, %v248
  %v264 = vmul.f32 %v237, %v248
  %v265 = vmul.f32 %v240, %v248
  %v266 = vld [vmem:[%s3] sm:$0x1]
  %v268 = vlaneseq
  %v269 = vshrl.u32 %v268, 7
  %v270 = vsub.s32 0, %v269
  %v271 = vrot.slane %v266, %v270
  %v273 = vadd.f32 %v250, %v271
  %v274 = vadd.f32 %v251, %v271
  %v275 = vadd.f32 %v252, %v271
  %v276 = vadd.f32 %v253, %v271
  %v277 = vadd.f32 %v254, %v271
  %v278 = vadd.f32 %v255, %v271
  %v279 = vadd.f32 %v256, %v271
  %v280 = vadd.f32 %v257, %v271
  %v281 = vadd.f32 %v258, %v271
  %v282 = vadd.f32 %v259, %v271
  %v283 = vadd.f32 %v260, %v271
  %v284 = vadd.f32 %v261, %v271
  %v285 = vadd.f32 %v262, %v271
  %v286 = vadd.f32 %v263, %v271
  %v287 = vadd.f32 %v264, %v271
  %v288 = vadd.f32 %v265, %v271
  %vm289 = vcmp.gt.f32.partialorder %v273, 0.0
  %vm290 = vcmp.gt.f32.partialorder %v274, 0.0
  %vm291 = vcmp.gt.f32.partialorder %v275, 0.0
  %vm292 = vcmp.gt.f32.partialorder %v276, 0.0
  %vm293 = vcmp.gt.f32.partialorder %v277, 0.0
  %vm294 = vcmp.gt.f32.partialorder %v278, 0.0
  %vm295 = vcmp.gt.f32.partialorder %v279, 0.0
  %vm296 = vcmp.gt.f32.partialorder %v280, 0.0
  %vm297 = vcmp.gt.f32.partialorder %v281, 0.0
  %vm298 = vcmp.gt.f32.partialorder %v282, 0.0
  %vm299 = vcmp.gt.f32.partialorder %v283, 0.0
  %vm300 = vcmp.gt.f32.partialorder %v284, 0.0
  %vm301 = vcmp.gt.f32.partialorder %v285, 0.0
  %vm302 = vcmp.gt.f32.partialorder %v286, 0.0
  %vm303 = vcmp.gt.f32.partialorder %v287, 0.0
  %vm304 = vcmp.gt.f32.partialorder %v288, 0.0
  %v305 = vmul.f32 %v273, 0.2
  %v306 = vmul.f32 %v274, 0.2
  %v307 = vmul.f32 %v275, 0.2
  %v308 = vmul.f32 %v276, 0.2
  %v309 = vmul.f32 %v277, 0.2
  %v310 = vmul.f32 %v278, 0.2
  %v311 = vmul.f32 %v279, 0.2
  %v312 = vmul.f32 %v280, 0.2
  %v313 = vmul.f32 %v281, 0.2
  %v314 = vmul.f32 %v282, 0.2
  %v315 = vmul.f32 %v283, 0.2
  %v316 = vmul.f32 %v284, 0.2
  %v317 = vmul.f32 %v285, 0.2
  %v318 = vmul.f32 %v286, 0.2
  %v319 = vmul.f32 %v287, 0.2
  %v320 = vmul.f32 %v288, 0.2
  %v321 = vsel %vm289, %v273, %v305
  %v322 = vsel %vm290, %v274, %v306
  %v323 = vsel %vm291, %v275, %v307
  %v324 = vsel %vm292, %v276, %v308
  %v325 = vsel %vm293, %v277, %v309
  %v326 = vsel %vm294, %v278, %v310
  %v327 = vsel %vm295, %v279, %v311
  %v328 = vsel %vm296, %v280, %v312
  %v329 = vsel %vm297, %v281, %v313
  %v330 = vsel %vm298, %v282, %v314
  %v331 = vsel %vm299, %v283, %v315
  %v332 = vsel %vm300, %v284, %v316
  %v333 = vsel %vm301, %v285, %v317
  %v334 = vsel %vm302, %v286, %v318
  %v335 = vsel %vm303, %v287, %v319
  %v336 = vsel %vm304, %v288, %v320
  %337 = vst [vmem:[%s4] sm:$0xff] %v321
  %338 = vst [vmem:[%s4 + $0x8] sm:$0xff] %v322
  %339 = vst [vmem:[%s4 + $0x10] sm:$0xff] %v323
  %340 = vst [vmem:[%s4 + $0x18] sm:$0xff] %v324
  %341 = vst [vmem:[%s4 + $0x20] sm:$0xff] %v325
  %342 = vst [vmem:[%s4 + $0x28] sm:$0xff] %v326
  %343 = vst [vmem:[%s4 + $0x30] sm:$0xff] %v327
  %344 = vst [vmem:[%s4 + $0x38] sm:$0xff] %v328
  %345 = vst [vmem:[%s4 + $0x40] sm:$0xff] %v329
  %346 = vst [vmem:[%s4 + $0x48] sm:$0xff] %v330
  %347 = vst [vmem:[%s4 + $0x50] sm:$0xff] %v331
  %348 = vst [vmem:[%s4 + $0x58] sm:$0xff] %v332
  %349 = vst [vmem:[%s4 + $0x60] sm:$0xff] %v333
  %350 = vst [vmem:[%s4 + $0x68] sm:$0xff] %v334
  %351 = vst [vmem:[%s4 + $0x70] sm:$0xff] %v335
  %352 = vst [vmem:[%s4 + $0x78] sm:$0xff] %v336
  // Predicated region
  $region18: #{forward.12} parent=0 // pred_check
    _
  $region19: #{forward.12} parent=0 // pred_check_branch
    %354 = sbr.rel (0) target = $region21
  $region20: #{forward.12} parent=0 // pred_region
    _
  $region21: #{forward.12} parent=0 // pred_fallthru
    _
  // Predicated region
  $region22: #{forward.12} parent=0 // pred_check
    _
  $region23: #{forward.12} parent=0 // pred_check_branch
    %356 = sbr.rel (0) target = $region25
  $region24: #{forward.12} parent=0 // pred_region
    _
  $region25: #{forward.12} parent=0 // pred_fallthru
    _

// kernel: forward.13
$region0: #{forward.13}
  #allocation0 [shape = 'u32[]', space=smem, size = 0x4, offset = 0x4, fixed_abs, tag = 'smem constant byte address 0x4 - core index']
  #allocation1 [shape = 'u32[144,128]{1,0:T(1,128)}', space=vmem, size = 0x12000, scoped, tag = 'internal scratch']
  %s0 = inlined_call_operand.vmem [shape: bf16[512,128], index: 0, kind: input, shape index: {}]
  %s1 = inlined_call_operand.vmem [shape: bf16[128,128], index: 1, kind: input, shape index: {}]
  %s2 = inlined_call_operand.vmem [shape: f32[1,128], index: 2, kind: input, shape index: {}]
  %s3 = inlined_call_operand.vmem [shape: bf16[128,128], index: 3, kind: input, shape index: {}]
  %s4 = inlined_call_operand.vmem [shape: f32[1,128], index: 4, kind: input, shape index: {}]
  %s5 = inlined_call_operand.vmem [shape: f32[512,128], index: 5, kind: output, shape index: {}]
  %s6 = sld [smem:[#allocation0]]
  $region30: #{forward.13} parent=0
    _
  %s8 = ssub.s32 1, %s6
  %s9 = scalar_select 0, %s8, %s6
  // Predicated region
  $region2: #{forward.13} parent=0 // pred_check
    _
  $region3: #{forward.13} parent=0 // pred_check_branch
    %11 = sbr.rel (0) target = $region5
  $region4: #{forward.13} parent=0 // pred_region
    _
  $region5: #{forward.13} parent=0 // pred_fallthru
    _
  // Predicated region
  $region6: #{forward.13} parent=0 // pred_check
    _
  $region7: #{forward.13} parent=0 // pred_check_branch
    %13 = sbr.rel (0) target = $region9
  $region8: #{forward.13} parent=0 // pred_region
    _
  $region9: #{forward.13} parent=0 // pred_fallthru
    _
  // Predicated region
  $region10: #{forward.13} parent=0 // pred_check
    _
  $region11: #{forward.13} parent=0 // pred_check_branch
    %15 = sbr.rel (0) target = $region13
  $region12: #{forward.13} parent=0 // pred_region
    _
  $region13: #{forward.13} parent=0 // pred_fallthru
    _
  // Predicated region
  $region14: #{forward.13} parent=0 // pred_check
    _
  $region15: #{forward.13} parent=0 // pred_check_branch
    %17 = sbr.rel (0) target = $region17
  $region16: #{forward.13} parent=0 // pred_region
    _
  $region17: #{forward.13} parent=0 // pred_fallthru
    _
  // Predicated region
  $region18: #{forward.13} parent=0 // pred_check
    _
  $region19: #{forward.13} parent=0 // pred_check_branch
    %19 = sbr.rel (0) target = $region21
  $region20: #{forward.13} parent=0 // pred_region
    _
  $region21: #{forward.13} parent=0 // pred_fallthru
    _
  %v21 = vld [vmem:[%s0] sm:$0xf]
  %v22 = vld [vmem:[%s0 + $0x4] sm:$0xf]
  %v23 = vld [vmem:[%s0 + $0x8] sm:$0xf]
  %v24 = vld [vmem:[%s0 + $0xc] sm:$0xf]
  %v25 = vld [vmem:[%s0 + $0x10] sm:$0xf]
  %v26 = vld [vmem:[%s0 + $0x14] sm:$0xf]
  %v27 = vld [vmem:[%s0 + $0x18] sm:$0xf]
  %v28 = vld [vmem:[%s0 + $0x1c] sm:$0xf]
  %v29 = vld [vmem:[%s0 + $0x20] sm:$0xf]
  %v30 = vld [vmem:[%s0 + $0x24] sm:$0xf]
  %v31 = vld [vmem:[%s0 + $0x28] sm:$0xf]
  %v32 = vld [vmem:[%s0 + $0x2c] sm:$0xf]
  %v33 = vld [vmem:[%s0 + $0x30] sm:$0xf]
  %v34 = vld [vmem:[%s0 + $0x34] sm:$0xf]
  %v35 = vld [vmem:[%s0 + $0x38] sm:$0xf]
  %v36 = vld [vmem:[%s0 + $0x3c] sm:$0xf]
  %v37 = vld [vmem:[%s0 + $0x40] sm:$0xf]
  %v38 = vld [vmem:[%s0 + $0x44] sm:$0xf]
  %v39 = vld [vmem:[%s0 + $0x48] sm:$0xf]
  %v40 = vld [vmem:[%s0 + $0x4c] sm:$0xf]
  %v41 = vld [vmem:[%s0 + $0x50] sm:$0xf]
  %v42 = vld [vmem:[%s0 + $0x54] sm:$0xf]
  %v43 = vld [vmem:[%s0 + $0x58] sm:$0xf]
  %v44 = vld [vmem:[%s0 + $0x5c] sm:$0xf]
  %v45 = vld [vmem:[%s0 + $0x60] sm:$0xf]
  %v46 = vld [vmem:[%s0 + $0x64] sm:$0xf]
  %v47 = vld [vmem:[%s0 + $0x68] sm:$0xf]
  %v48 = vld [vmem:[%s0 + $0x6c] sm:$0xf]
  %v49 = vld [vmem:[%s0 + $0x70] sm:$0xf]
  %v50 = vld [vmem:[%s0 + $0x74] sm:$0xf]
  %v51 = vld [vmem:[%s0 + $0x78] sm:$0xf]
  %v52 = vld [vmem:[%s0 + $0x7c] sm:$0xf]
  %v53 = vld [vmem:[%s0 + $0x80] sm:$0xf]
  %v54 = vld [vmem:[%s0 + $0x84] sm:$0xf]
  %v55 = vld [vmem:[%s0 + $0x88] sm:$0xf]
  %v56 = vld [vmem:[%s0 + $0x8c] sm:$0xf]
  %v57 = vld [vmem:[%s0 + $0x90] sm:$0xf]
  %v58 = vld [vmem:[%s0 + $0x94] sm:$0xf]
  %v59 = vld [vmem:[%s0 + $0x98] sm:$0xf]
  %v60 = vld [vmem:[%s0 + $0x9c] sm:$0xf]
  %v61 = vld [vmem:[%s0 + $0xa0] sm:$0xf]
  %v62 = vld [vmem:[%s0 + $0xa4] sm:$0xf]
  %v63 = vld [vmem:[%s0 + $0xa8] sm:$0xf]
  %v64 = vld [vmem:[%s0 + $0xac] sm:$0xf]
  %v65 = vld [vmem:[%s0 + $0xb0] sm:$0xf]
  %v66 = vld [vmem:[%s0 + $0xb4] sm:$0xf]
  %v67 = vld [vmem:[%s0 + $0xb8] sm:$0xf]
  %v68 = vld [vmem:[%s0 + $0xbc] sm:$0xf]
  %v69 = vld [vmem:[%s0 + $0xc0] sm:$0xf]
  %v70 = vld [vmem:[%s0 + $0xc4] sm:$0xf]
  %v71 = vld [vmem:[%s0 + $0xc8] sm:$0xf]
  %v72 = vld [vmem:[%s0 + $0xcc] sm:$0xf]
  %v73 = vld [vmem:[%s0 + $0xd0] sm:$0xf]
  %v74 = vld [vmem:[%s0 + $0xd4] sm:$0xf]
  %v75 = vld [vmem:[%s0 + $0xd8] sm:$0xf]
  %v76 = vld [vmem:[%s0 + $0xdc] sm:$0xf]
  %v77 = vld [vmem:[%s0 + $0xe0] sm:$0xf]
  %v78 = vld [vmem:[%s0 + $0xe4] sm:$0xf]
  %v79 = vld [vmem:[%s0 + $0xe8] sm:$0xf]
  %v80 = vld [vmem:[%s0 + $0xec] sm:$0xf]
  %v81 = vld [vmem:[%s0 + $0xf0] sm:$0xf]
  %v82 = vld [vmem:[%s0 + $0xf4] sm:$0xf]
  %v83 = vld [vmem:[%s0 + $0xf8] sm:$0xf]
  %v84 = vld [vmem:[%s0 + $0xfc] sm:$0xf]
  %v85 = vld [vmem:[%s1] sm:$0xf]
  %v86 = vld [vmem:[%s1 + $0x4] sm:$0xf]
  %v87 = vld [vmem:[%s1 + $0x8] sm:$0xf]
  %v88 = vld [vmem:[%s1 + $0xc] sm:$0xf]
  %v89 = vld [vmem:[%s1 + $0x10] sm:$0xf]
  %v90 = vld [vmem:[%s1 + $0x14] sm:$0xf]
  %v91 = vld [vmem:[%s1 + $0x18] sm:$0xf]
  %v92 = vld [vmem:[%s1 + $0x1c] sm:$0xf]
  %v93 = vld [vmem:[%s1 + $0x20] sm:$0xf]
  %v94 = vld [vmem:[%s1 + $0x24] sm:$0xf]
  %v95 = vld [vmem:[%s1 + $0x28] sm:$0xf]
  %v96 = vld [vmem:[%s1 + $0x2c] sm:$0xf]
  %v97 = vld [vmem:[%s1 + $0x30] sm:$0xf]
  %v98 = vld [vmem:[%s1 + $0x34] sm:$0xf]
  %v99 = vld [vmem:[%s1 + $0x38] sm:$0xf]
  %v100 = vld [vmem:[%s1 + $0x3c] sm:$0xf]
  %v101 = vld [vmem:[%s2] sm:$0x1]
  %v103 = vlaneseq
  %v104 = vshrl.u32 %v103, 7
  %v105 = vsub.s32 0, %v104
  %v106 = vrot.slane %v101, %v105
  %v172 = vunpack.c.l.b16 %v21
  %v173 = vunpack.c.l.b16 %v22
  %v174 = vunpack.c.l.b16 %v23
  %v175 = vunpack.c.l.b16 %v24
  %v176 = vunpack.c.l.b16 %v25
  %v177 = vunpack.c.l.b16 %v26
  %v178 = vunpack.c.l.b16 %v27
  %v179 = vunpack.c.l.b16 %v28
  %v180 = vunpack.c.l.b16 %v29
  %v181 = vunpack.c.l.b16 %v30
  %v182 = vunpack.c.l.b16 %v31
  %v183 = vunpack.c.l.b16 %v32
  %v184 = vunpack.c.l.b16 %v33
  %v185 = vunpack.c.l.b16 %v34
  %v186 = vunpack.c.l.b16 %v35
  %v187 = vunpack.c.l.b16 %v36
  %v188 = vunpack.c.l.b16 %v37
  %v189 = vunpack.c.l.b16 %v38
  %v190 = vunpack.c.l.b16 %v39
  %v191 = vunpack.c.l.b16 %v40
  %v192 = vunpack.c.l.b16 %v41
  %v193 = vunpack.c.l.b16 %v42
  %v194 = vunpack.c.l.b16 %v43
  %v195 = vunpack.c.l.b16 %v44
  %v196 = vunpack.c.l.b16 %v45
  %v197 = vunpack.c.l.b16 %v46
  %v198 = vunpack.c.l.b16 %v47
  %v199 = vunpack.c.l.b16 %v48
  %v200 = vunpack.c.l.b16 %v49
  %v201 = vunpack.c.l.b16 %v50
  %v202 = vunpack.c.l.b16 %v51
  %v203 = vunpack.c.l.b16 %v52
  %v204 = vunpack.c.l.b16 %v53
  %v205 = vunpack.c.l.b16 %v54
  %v206 = vunpack.c.l.b16 %v55
  %v207 = vunpack.c.l.b16 %v56
  %v208 = vunpack.c.l.b16 %v57
  %v209 = vunpack.c.l.b16 %v58
  %v210 = vunpack.c.l.b16 %v59
  %v211 = vunpack.c.l.b16 %v60
  %v212 = vunpack.c.l.b16 %v61
  %v213 = vunpack.c.l.b16 %v62
  %v214 = vunpack.c.l.b16 %v63
  %v215 = vunpack.c.l.b16 %v64
  %v216 = vunpack.c.l.b16 %v65
  %v217 = vunpack.c.l.b16 %v66
  %v218 = vunpack.c.l.b16 %v67
  %v219 = vunpack.c.l.b16 %v68
  %v220 = vunpack.c.l.b16 %v69
  %v221 = vunpack.c.l.b16 %v70
  %v222 = vunpack.c.l.b16 %v71
  %v223 = vunpack.c.l.b16 %v72
  %v224 = vunpack.c.l.b16 %v73
  %v225 = vunpack.c.l.b16 %v74
  %v226 = vunpack.c.l.b16 %v75
  %v227 = vunpack.c.l.b16 %v76
  %v228 = vunpack.c.l.b16 %v77
  %v229 = vunpack.c.l.b16 %v78
  %v230 = vunpack.c.l.b16 %v79
  %v231 = vunpack.c.l.b16 %v80
  %v232 = vunpack.c.l.b16 %v81
  %v233 = vunpack.c.l.b16 %v82
  %v234 = vunpack.c.l.b16 %v83
  %v235 = vunpack.c.l.b16 %v84
  %v236 = vpack.c.b16 %v173, %v172
  %v237 = vpack.c.b16 %v175, %v174
  %v238 = vpack.c.b16 %v177, %v176
  %v239 = vpack.c.b16 %v179, %v178
  %v240 = vpack.c.b16 %v181, %v180
  %v241 = vpack.c.b16 %v183, %v182
  %v242 = vpack.c.b16 %v185, %v184
  %v243 = vpack.c.b16 %v187, %v186
  %v244 = vpack.c.b16 %v189, %v188
  %v245 = vpack.c.b16 %v191, %v190
  %v246 = vpack.c.b16 %v193, %v192
  %v247 = vpack.c.b16 %v195, %v194
  %v248 = vpack.c.b16 %v197, %v196
  %v249 = vpack.c.b16 %v199, %v198
  %v250 = vpack.c.b16 %v201, %v200
  %v251 = vpack.c.b16 %v203, %v202
  %v252 = vpack.c.b16 %v205, %v204
  %v253 = vpack.c.b16 %v207, %v206
  %v254 = vpack.c.b16 %v209, %v208
  %v255 = vpack.c.b16 %v211, %v210
  %v256 = vpack.c.b16 %v213, %v212
  %v257 = vpack.c.b16 %v215, %v214
  %v258 = vpack.c.b16 %v217, %v216
  %v259 = vpack.c.b16 %v219, %v218
  %v260 = vpack.c.b16 %v221, %v220
  %v261 = vpack.c.b16 %v223, %v222
  %v262 = vpack.c.b16 %v225, %v224
  %v263 = vpack.c.b16 %v227, %v226
  %v264 = vpack.c.b16 %v229, %v228
  %v265 = vpack.c.b16 %v231, %v230
  %v266 = vpack.c.b16 %v233, %v232
  %v267 = vpack.c.b16 %v235, %v234
  %v316 = vunpack.c.l.b16 %v85
  %v317 = vunpack.c.l.b16 %v86
  %v318 = vunpack.c.l.b16 %v87
  %v319 = vunpack.c.l.b16 %v88
  %v320 = vunpack.c.l.b16 %v89
  %v321 = vunpack.c.l.b16 %v90
  %v322 = vunpack.c.l.b16 %v91
  %v323 = vunpack.c.l.b16 %v92
  %v324 = vunpack.c.l.b16 %v93
  %v325 = vunpack.c.l.b16 %v94
  %v326 = vunpack.c.l.b16 %v95
  %v327 = vunpack.c.l.b16 %v96
  %v328 = vunpack.c.l.b16 %v97
  %v329 = vunpack.c.l.b16 %v98
  %v330 = vunpack.c.l.b16 %v99
  %v331 = vunpack.c.l.b16 %v100
  %v332 = vpack.c.b16 %v317, %v316
  %v333 = vpack.c.b16 %v319, %v318
  %v334 = vpack.c.b16 %v321, %v320
  %v335 = vpack.c.b16 %v323, %v322
  %v336 = vpack.c.b16 %v325, %v324
  %v337 = vpack.c.b16 %v327, %v326
  %v338 = vpack.c.b16 %v329, %v328
  %v339 = vpack.c.b16 %v331, %v330
  %348 = vmatprep.subr.bf16.mxu0 0
  %349 = vmatpush1.bf16.msra.mxu0 %v332
  %350 = vmatprep.subr.bf16.mxu0 0
  %351 = vmatpush1.bf16.msra.mxu0 %v333
  %352 = vmatprep.subr.bf16.mxu0 0
  %353 = vmatpush1.bf16.msra.mxu0 %v334
  %354 = vmatprep.subr.bf16.mxu0 0
  %355 = vmatpush1.bf16.msra.mxu0 %v335
  %356 = vmatprep.subr.bf16.mxu0 0
  %357 = vmatpush1.bf16.msra.mxu0 %v336
  %358 = vmatprep.subr.bf16.mxu0 0
  %359 = vmatpush1.bf16.msra.mxu0 %v337
  %360 = vmatprep.subr.bf16.mxu0 0
  %361 = vmatpush1.bf16.msra.mxu0 %v338
  %362 = vmatprep.subr.bf16.mxu0 0
  %363 = vmatpush1.bf16.msra.mxu0 %v339
  %364 = vmatprep.subr.bf16.mxu0 0
  %365 = vmatpush1.bf16.msra.mxu0 0
  %366 = vmatprep.subr.bf16.mxu0 0
  %367 = vmatpush1.bf16.msra.mxu0 0
  %368 = vmatprep.subr.bf16.mxu0 0
  %369 = vmatpush1.bf16.msra.mxu0 0
  %370 = vmatprep.subr.bf16.mxu0 0
  %371 = vmatpush1.bf16.msra.mxu0 0
  %372 = vmatprep.subr.bf16.mxu0 0
  %373 = vmatpush1.bf16.msra.mxu0 0
  %374 = vmatprep.subr.bf16.mxu0 0
  %375 = vmatpush1.bf16.msra.mxu0 0
  %376 = vmatprep.subr.bf16.mxu0 0
  %377 = vmatpush1.bf16.msra.mxu0 0
  %378 = vmatprep.subr.bf16.mxu0 0
  %379 = vmatpush1.bf16.msra.mxu0 0
  %380 = vmatprep.mubr.bf16.mxu0 0
  %381 = vmatmul.mubr.bf16.gmra.mrb[0].mxu0 %v236
  %v382 = vpop.f32.mrb[0].mxu0
  %v383 = vadd.f32 %v106, %v382
  %v384 = vpop.f32.mrb[0].mxu0
  %v385 = vpop.f32.mrb[0].mxu0
  %v386 = vadd.f32 %v106, %v385
  %v387 = vpop.f32.mrb[0].mxu0
  %388 = vmatprep.mubr.bf16.mxu0 0
  %389 = vmatmul.mubr.bf16.gmra.mrb[0].mxu0 %v237
  %v390 = vpop.f32.mrb[0].mxu0
  %v391 = vadd.f32 %v106, %v390
  %v392 = vpop.f32.mrb[0].mxu0
  %v393 = vpop.f32.mrb[0].mxu0
  %v394 = vadd.f32 %v106, %v393
  %v395 = vpop.f32.mrb[0].mxu0
  %396 = vmatprep.mubr.bf16.mxu0 0
  %397 = vmatmul.mubr.bf16.gmra.mrb[0].mxu0 %v238
  %v398 = vpop.f32.mrb[0].mxu0
  %v399 = vadd.f32 %v106, %v398
  %v400 = vpop.f32.mrb[0].mxu0
  %v401 = vpop.f32.mrb[0].mxu0
  %v402 = vadd.f32 %v106, %v401
  %v403 = vpop.f32.mrb[0].mxu0
  %404 = vmatprep.mubr.bf16.mxu0 0
  %405 = vmatmul.mubr.bf16.gmra.mrb[0].mxu0 %v239
  %v406 = vpop.f32.mrb[0].mxu0
  %v407 = vadd.f32 %v106, %v406
  %v408 = vpop.f32.mrb[0].mxu0
  %v409 = vpop.f32.mrb[0].mxu0
  %v410 = vadd.f32 %v106, %v409
  %v411 = vpop.f32.mrb[0].mxu0
  %412 = vmatprep.mubr.bf16.mxu0 0
  %413 = vmatmul.mubr.bf16.gmra.mrb[0].mxu0 %v240
  %v414 = vpop.f32.mrb[0].mxu0
  %v415 = vadd.f32 %v106, %v414
  %v416 = vpop.f32.mrb[0].mxu0
  %v417 = vpop.f32.mrb[0].mxu0
  %v418 = vadd.f32 %v106, %v417
  %v419 = vpop.f32.mrb[0].mxu0
  %420 = vmatprep.mubr.bf16.mxu0 0
  %421 = vmatmul.mubr.bf16.gmra.mrb[0].mxu0 %v241
  %v422 = vpop.f32.mrb[0].mxu0
  %v423 = vadd.f32 %v106, %v422
  %v424 = vpop.f32.mrb[0].mxu0
  %v425 = vpop.f32.mrb[0].mxu0
  %v426 = vadd.f32 %v106, %v425
  %v427 = vpop.f32.mrb[0].mxu0
  %428 = vmatprep.mubr.bf16.mxu0 0
  %429 = vmatmul.mubr.bf16.gmra.mrb[0].mxu0 %v242
  %v430 = vpop.f32.mrb[0].mxu0
  %v431 = vadd.f32 %v106, %v430
  %v432 = vpop.f32.mrb[0].mxu0
  %v433 = vpop.f32.mrb[0].mxu0
  %v434 = vadd.f32 %v106, %v433
  %v435 = vpop.f32.mrb[0].mxu0
  %436 = vmatprep.mubr.bf16.mxu0 0
  %437 = vmatmul.mubr.bf16.gmra.mrb[0].mxu0 %v243
  %v438 = vpop.f32.mrb[0].mxu0
  %v439 = vadd.f32 %v106, %v438
  %v440 = vpop.f32.mrb[0].mxu0
  %v441 = vpop.f32.mrb[0].mxu0
  %v442 = vadd.f32 %v106, %v441
  %v443 = vpop.f32.mrb[0].mxu0
  %444 = vmatprep.mubr.bf16.mxu0 0
  %445 = vmatmul.mubr.bf16.gmra.mrb[0].mxu0 %v244
  %v446 = vpop.f32.mrb[0].mxu0
  %v447 = vadd.f32 %v106, %v446
  %v448 = vpop.f32.mrb[0].mxu0
  %v449 = vpop.f32.mrb[0].mxu0
  %v450 = vadd.f32 %v106, %v449
  %v451 = vpop.f32.mrb[0].mxu0
  %452 = vmatprep.mubr.bf16.mxu0 0
  %453 = vmatmul.mubr.bf16.gmra.mrb[0].mxu0 %v245
  %v454 = vpop.f32.mrb[0].mxu0
  %v455 = vadd.f32 %v106, %v454
  %v456 = vpop.f32.mrb[0].mxu0
  %v457 = vpop.f32.mrb[0].mxu0
  %v458 = vadd.f32 %v106, %v457
  %v459 = vpop.f32.mrb[0].mxu0
  %460 = vmatprep.mubr.bf16.mxu0 0
  %461 = vmatmul.mubr.bf16.gmra.mrb[0].mxu0 %v246
  %v462 = vpop.f32.mrb[0].mxu0
  %v463 = vadd.f32 %v106, %v462
  %v464 = vpop.f32.mrb[0].mxu0
  %v465 = vpop.f32.mrb[0].mxu0
  %v466 = vadd.f32 %v106, %v465
  %v467 = vpop.f32.mrb[0].mxu0
  %468 = vmatprep.mubr.bf16.mxu0 0
  %469 = vmatmul.mubr.bf16.gmra.mrb[0].mxu0 %v247
  %v470 = vpop.f32.mrb[0].mxu0
  %v471 = vadd.f32 %v106, %v470
  %v472 = vpop.f32.mrb[0].mxu0
  %v473 = vpop.f32.mrb[0].mxu0
  %v474 = vadd.f32 %v106, %v473
  %v475 = vpop.f32.mrb[0].mxu0
  %476 = vmatprep.mubr.bf16.mxu0 0
  %477 = vmatmul.mubr.bf16.gmra.mrb[0].mxu0 %v248
  %v478 = vpop.f32.mrb[0].mxu0
  %v479 = vadd.f32 %v106, %v478
  %v480 = vpop.f32.mrb[0].mxu0
  %v481 = vpop.f32.mrb[0].mxu0
  %v482 = vadd.f32 %v106, %v481
  %v483 = vpop.f32.mrb[0].mxu0
  %484 = vmatprep.mubr.bf16.mxu0 0
  %485 = vmatmul.mubr.bf16.gmra.mrb[0].mxu0 %v249
  %v486 = vpop.f32.mrb[0].mxu0
  %v487 = vadd.f32 %v106, %v486
  %v488 = vpop.f32.mrb[0].mxu0
  %v489 = vpop.f32.mrb[0].mxu0
  %v490 = vadd.f32 %v106, %v489
  %v491 = vpop.f32.mrb[0].mxu0
  %492 = vmatprep.mubr.bf16.mxu0 0
  %493 = vmatmul.mubr.bf16.gmra.mrb[0].mxu0 %v250
  %v494 = vpop.f32.mrb[0].mxu0
  %v495 = vadd.f32 %v106, %v494
  %v496 = vpop.f32.mrb[0].mxu0
  %v497 = vpop.f32.mrb[0].mxu0
  %v498 = vadd.f32 %v106, %v497
  %v499 = vpop.f32.mrb[0].mxu0
  %500 = vmatprep.mubr.bf16.mxu0 0
  %501 = vmatmul.mubr.bf16.gmra.mrb[0].mxu0 %v251
  %v502 = vpop.f32.mrb[0].mxu0
  %v503 = vadd.f32 %v106, %v502
  %v504 = vpop.f32.mrb[0].mxu0
  %v505 = vpop.f32.mrb[0].mxu0
  %v506 = vadd.f32 %v106, %v505
  %v507 = vpop.f32.mrb[0].mxu0
  %508 = vmatprep.mubr.bf16.mxu0 0
  %509 = vmatmul.mubr.bf16.gmra.mrb[0].mxu0 %v252
  %v510 = vpop.f32.mrb[0].mxu0
  %v511 = vadd.f32 %v106, %v510
  %v512 = vpop.f32.mrb[0].mxu0
  %v513 = vpop.f32.mrb[0].mxu0
  %v514 = vadd.f32 %v106, %v513
  %v515 = vpop.f32.mrb[0].mxu0
  %516 = vmatprep.mubr.bf16.mxu0 0
  %517 = vmatmul.mubr.bf16.gmra.mrb[0].mxu0 %v253
  %v518 = vpop.f32.mrb[0].mxu0
  %v519 = vadd.f32 %v106, %v518
  %v520 = vpop.f32.mrb[0].mxu0
  %v521 = vpop.f32.mrb[0].mxu0
  %v522 = vadd.f32 %v106, %v521
  %v523 = vpop.f32.mrb[0].mxu0
  %524 = vmatprep.mubr.bf16.mxu0 0
  %525 = vmatmul.mubr.bf16.gmra.mrb[0].mxu0 %v254
  %v526 = vpop.f32.mrb[0].mxu0
  %v527 = vadd.f32 %v106, %v526
  %v528 = vpop.f32.mrb[0].mxu0
  %v529 = vpop.f32.mrb[0].mxu0
  %v530 = vadd.f32 %v106, %v529
  %v531 = vpop.f32.mrb[0].mxu0
  %532 = vmatprep.mubr.bf16.mxu0 0
  %533 = vmatmul.mubr.bf16.gmra.mrb[0].mxu0 %v255
  %v534 = vpop.f32.mrb[0].mxu0
  %v535 = vadd.f32 %v106, %v534
  %v536 = vpop.f32.mrb[0].mxu0
  %v537 = vpop.f32.mrb[0].mxu0
  %v538 = vadd.f32 %v106, %v537
  %v539 = vpop.f32.mrb[0].mxu0
  %540 = vmatprep.mubr.bf16.mxu0 0
  %541 = vmatmul.mubr.bf16.gmra.mrb[0].mxu0 %v256
  %v542 = vpop.f32.mrb[0].mxu0
  %v543 = vadd.f32 %v106, %v542
  %v544 = vpop.f32.mrb[0].mxu0
  %v545 = vpop.f32.mrb[0].mxu0
  %v546 = vadd.f32 %v106, %v545
  %v547 = vpop.f32.mrb[0].mxu0
  %548 = vmatprep.mubr.bf16.mxu0 0
  %549 = vmatmul.mubr.bf16.gmra.mrb[0].mxu0 %v257
  %v550 = vpop.f32.mrb[0].mxu0
  %v551 = vadd.f32 %v106, %v550
  %v552 = vpop.f32.mrb[0].mxu0
  %v553 = vpop.f32.mrb[0].mxu0
  %v554 = vadd.f32 %v106, %v553
  %v555 = vpop.f32.mrb[0].mxu0
  %556 = vmatprep.mubr.bf16.mxu0 0
  %557 = vmatmul.mubr.bf16.gmra.mrb[0].mxu0 %v258
  %v558 = vpop.f32.mrb[0].mxu0
  %v559 = vadd.f32 %v106, %v558
  %v560 = vpop.f32.mrb[0].mxu0
  %v561 = vpop.f32.mrb[0].mxu0
  %v562 = vadd.f32 %v106, %v561
  %v563 = vpop.f32.mrb[0].mxu0
  %564 = vmatprep.mubr.bf16.mxu0 0
  %565 = vmatmul.mubr.bf16.gmra.mrb[0].mxu0 %v259
  %v566 = vpop.f32.mrb[0].mxu0
  %v567 = vadd.f32 %v106, %v566
  %v568 = vpop.f32.mrb[0].mxu0
  %v569 = vpop.f32.mrb[0].mxu0
  %v570 = vadd.f32 %v106, %v569
  %v571 = vpop.f32.mrb[0].mxu0
  %572 = vmatprep.mubr.bf16.mxu0 0
  %573 = vmatmul.mubr.bf16.gmra.mrb[0].mxu0 %v260
  %v574 = vpop.f32.mrb[0].mxu0
  %v575 = vadd.f32 %v106, %v574
  %v576 = vpop.f32.mrb[0].mxu0
  %v577 = vpop.f32.mrb[0].mxu0
  %v578 = vadd.f32 %v106, %v577
  %v579 = vpop.f32.mrb[0].mxu0
  %580 = vmatprep.mubr.bf16.mxu0 0
  %581 = vmatmul.mubr.bf16.gmra.mrb[0].mxu0 %v261
  %v582 = vpop.f32.mrb[0].mxu0
  %v583 = vadd.f32 %v106, %v582
  %v584 = vpop.f32.mrb[0].mxu0
  %v585 = vpop.f32.mrb[0].mxu0
  %v586 = vadd.f32 %v106, %v585
  %v587 = vpop.f32.mrb[0].mxu0
  %588 = vmatprep.mubr.bf16.mxu0 0
  %589 = vmatmul.mubr.bf16.gmra.mrb[0].mxu0 %v262
  %v590 = vpop.f32.mrb[0].mxu0
  %v591 = vadd.f32 %v106, %v590
  %v592 = vpop.f32.mrb[0].mxu0
  %v593 = vpop.f32.mrb[0].mxu0
  %v594 = vadd.f32 %v106, %v593
  %v595 = vpop.f32.mrb[0].mxu0
  %596 = vmatprep.mubr.bf16.mxu0 0
  %597 = vmatmul.mubr.bf16.gmra.mrb[0].mxu0 %v263
  %v598 = vpop.f32.mrb[0].mxu0
  %v599 = vadd.f32 %v106, %v598
  %v600 = vpop.f32.mrb[0].mxu0
  %v601 = vpop.f32.mrb[0].mxu0
  %v602 = vadd.f32 %v106, %v601
  %v603 = vpop.f32.mrb[0].mxu0
  %604 = vmatprep.mubr.bf16.mxu0 0
  %605 = vmatmul.mubr.bf16.gmra.mrb[0].mxu0 %v264
  %v606 = vpop.f32.mrb[0].mxu0
  %v607 = vadd.f32 %v106, %v606
  %v608 = vpop.f32.mrb[0].mxu0
  %v609 = vpop.f32.mrb[0].mxu0
  %v610 = vadd.f32 %v106, %v609
  %v611 = vpop.f32.mrb[0].mxu0
  %612 = vmatprep.mubr.bf16.mxu0 0
  %613 = vmatmul.mubr.bf16.gmra.mrb[0].mxu0 %v265
  %v614 = vpop.f32.mrb[0].mxu0
  %v615 = vadd.f32 %v106, %v614
  %v616 = vpop.f32.mrb[0].mxu0
  %v617 = vpop.f32.mrb[0].mxu0
  %v618 = vadd.f32 %v106, %v617
  %v619 = vpop.f32.mrb[0].mxu0
  %620 = vmatprep.mubr.bf16.mxu0 0
  %621 = vmatmul.mubr.bf16.gmra.mrb[0].mxu0 %v266
  %v622 = vpop.f32.mrb[0].mxu0
  %v623 = vadd.f32 %v106, %v622
  %v624 = vpop.f32.mrb[0].mxu0
  %v625 = vpop.f32.mrb[0].mxu0
  %v626 = vadd.f32 %v106, %v625
  %v627 = vpop.f32.mrb[0].mxu0
  %628 = vmatprep.mubr.bf16.mxu0 0
  %629 = vmatmul.mubr.bf16.gmra.mrb[0].mxu0 %v267
  %v630 = vpop.f32.mrb[0].mxu0
  %v631 = vadd.f32 %v106, %v630
  %v632 = vpop.f32.mrb[0].mxu0
  %v633 = vpop.f32.mrb[0].mxu0
  %v634 = vadd.f32 %v106, %v633
  %v635 = vpop.f32.mrb[0].mxu0
  %636 = vdwg.mxu0
  %v637 = vxor.u32 %v383, 2147483648
  %v638 = vxor.u32 %v386, 2147483648
  %v639 = vxor.u32 %v391, 2147483648
  %v640 = vxor.u32 %v394, 2147483648
  %v641 = vxor.u32 %v399, 2147483648
  %v642 = vxor.u32 %v402, 2147483648
  %v643 = vxor.u32 %v407, 2147483648
  %v644 = vxor.u32 %v410, 2147483648
  %v645 = vxor.u32 %v415, 2147483648
  %v646 = vxor.u32 %v418, 2147483648
  %v647 = vxor.u32 %v423, 2147483648
  %v648 = vxor.u32 %v426, 2147483648
  %v649 = vxor.u32 %v431, 2147483648
  %v650 = vxor.u32 %v434, 2147483648
  %v651 = vxor.u32 %v439, 2147483648
  %v652 = vxor.u32 %v442, 2147483648
  %v653 = vxor.u32 %v447, 2147483648
  %v654 = vxor.u32 %v450, 2147483648
  %v655 = vxor.u32 %v455, 2147483648
  %v656 = vxor.u32 %v458, 2147483648
  %v657 = vxor.u32 %v463, 2147483648
  %v658 = vxor.u32 %v466, 2147483648
  %v659 = vxor.u32 %v471, 2147483648
  %v660 = vxor.u32 %v474, 2147483648
  %v661 = vxor.u32 %v479, 2147483648
  %v662 = vxor.u32 %v482, 2147483648
  %v663 = vxor.u32 %v487, 2147483648
  %v664 = vxor.u32 %v490, 2147483648
  %v665 = vxor.u32 %v495, 2147483648
  %v666 = vxor.u32 %v498, 2147483648
  %v667 = vxor.u32 %v503, 2147483648
  %v668 = vxor.u32 %v506, 2147483648
  %v669 = vxor.u32 %v511, 2147483648
  %v670 = vxor.u32 %v514, 2147483648
  %v671 = vxor.u32 %v519, 2147483648
  %v672 = vxor.u32 %v522, 2147483648
  %v673 = vxor.u32 %v527, 2147483648
  %v674 = vxor.u32 %v530, 2147483648
  %v675 = vxor.u32 %v535, 2147483648
  %v676 = vxor.u32 %v538, 2147483648
  %v677 = vxor.u32 %v543, 2147483648
  %v678 = vxor.u32 %v546, 2147483648
  %v679 = vxor.u32 %v551, 2147483648
  %v680 = vxor.u32 %v554, 2147483648
  %v681 = vxor.u32 %v559, 2147483648
  %v682 = vxor.u32 %v562, 2147483648
  %v683 = vxor.u32 %v567, 2147483648
  %v684 = vxor.u32 %v570, 2147483648
  %v685 = vxor.u32 %v575, 2147483648
  %v686 = vxor.u32 %v578, 2147483648
  %v687 = vxor.u32 %v583, 2147483648
  %v688 = vxor.u32 %v586, 2147483648
  %v689 = vxor.u32 %v591, 2147483648
  %v690 = vxor.u32 %v594, 2147483648
  %v691 = vxor.u32 %v599, 2147483648
  %v692 = vxor.u32 %v602, 2147483648
  %v693 = vxor.u32 %v607, 2147483648
  %v694 = vxor.u32 %v610, 2147483648
  %v695 = vxor.u32 %v615, 2147483648
  %v696 = vxor.u32 %v618, 2147483648
  %v697 = vxor.u32 %v623, 2147483648
  %v698 = vxor.u32 %v626, 2147483648
  %v699 = vxor.u32 %v631, 2147483648
  %v700 = vxor.u32 %v634, 2147483648
  %v701 = vmul.f32 %v637, 1.442695
  %v702 = vpow.pop %v701
  %v703 = vmul.f32 %v638, 1.442695
  %v704 = vpow.pop %v703
  %v705 = vmul.f32 %v639, 1.442695
  %v706 = vpow.pop %v705
  %v707 = vmul.f32 %v640, 1.442695
  %v708 = vpow.pop %v707
  %v709 = vmul.f32 %v641, 1.442695
  %v710 = vpow.pop %v709
  %v711 = vmul.f32 %v642, 1.442695
  %v712 = vpow.pop %v711
  %v713 = vmul.f32 %v643, 1.442695
  %v714 = vpow.pop %v713
  %v715 = vmul.f32 %v644, 1.442695
  %v716 = vpow.pop %v715
  %v717 = vmul.f32 %v645, 1.442695
  %v718 = vpow.pop %v717
  %v719 = vmul.f32 %v646, 1.442695
  %v720 = vpow.pop %v719
  %v721 = vmul.f32 %v647, 1.442695
  %v722 = vpow.pop %v721
  %v723 = vmul.f32 %v648, 1.442695
  %v724 = vpow.pop %v723
  %v725 = vmul.f32 %v649, 1.442695
  %v726 = vpow.pop %v725
  %v727 = vmul.f32 %v650, 1.442695
  %v728 = vpow.pop %v727
  %v729 = vmul.f32 %v651, 1.442695
  %v730 = vpow.pop %v729
  %v731 = vmul.f32 %v652, 1.442695
  %v732 = vpow.pop %v731
  %v733 = vmul.f32 %v653, 1.442695
  %v734 = vpow.pop %v733
  %v735 = vmul.f32 %v654, 1.442695
  %v736 = vpow.pop %v735
  %v737 = vmul.f32 %v655, 1.442695
  %v738 = vpow.pop %v737
  %v739 = vmul.f32 %v656, 1.442695
  %v740 = vpow.pop %v739
  %v741 = vmul.f32 %v657, 1.442695
  %v742 = vpow.pop %v741
  %v743 = vmul.f32 %v658, 1.442695
  %v744 = vpow.pop %v743
  %v745 = vmul.f32 %v659, 1.442695
  %v746 = vpow.pop %v745
  %v747 = vmul.f32 %v660, 1.442695
  %v748 = vpow.pop %v747
  %v749 = vmul.f32 %v661, 1.442695
  %v750 = vpow.pop %v749
  %v751 = vmul.f32 %v662, 1.442695
  %v752 = vpow.pop %v751
  %v753 = vmul.f32 %v663, 1.442695
  %v754 = vpow.pop %v753
  %v755 = vmul.f32 %v664, 1.442695
  %v756 = vpow.pop %v755
  %v757 = vmul.f32 %v665, 1.442695
  %v758 = vpow.pop %v757
  %v759 = vmul.f32 %v666, 1.442695
  %v760 = vpow.pop %v759
  %v761 = vmul.f32 %v667, 1.442695
  %v762 = vpow.pop %v761
  %v763 = vmul.f32 %v668, 1.442695
  %v764 = vpow.pop %v763
  %v765 = vmul.f32 %v669, 1.442695
  %v766 = vpow.pop %v765
  %v767 = vmul.f32 %v670, 1.442695
  %v768 = vpow.pop %v767
  %v769 = vmul.f32 %v671, 1.442695
  %v770 = vpow.pop %v769
  %v771 = vmul.f32 %v672, 1.442695
  %v772 = vpow.pop %v771
  %v773 = vmul.f32 %v673, 1.442695
  %v774 = vpow.pop %v773
  %v775 = vmul.f32 %v674, 1.442695
  %v776 = vpow.pop %v775
  %v777 = vmul.f32 %v675, 1.442695
  %v778 = vpow.pop %v777
  %v779 = vmul.f32 %v676, 1.442695
  %v780 = vpow.pop %v779
  %v781 = vmul.f32 %v677, 1.442695
  %v782 = vpow.pop %v781
  %v783 = vmul.f32 %v678, 1.442695
  %v784 = vpow.pop %v783
  %v785 = vmul.f32 %v679, 1.442695
  %v786 = vpow.pop %v785
  %v787 = vmul.f32 %v680, 1.442695
  %v788 = vpow.pop %v787
  %v789 = vmul.f32 %v681, 1.442695
  %v790 = vpow.pop %v789
  %v791 = vmul.f32 %v682, 1.442695
  %v792 = vpow.pop %v791
  %v793 = vmul.f32 %v683, 1.442695
  %v794 = vpow.pop %v793
  %v795 = vmul.f32 %v684, 1.442695
  %v796 = vpow.pop %v795
  %v797 = vmul.f32 %v685, 1.442695
  %v798 = vpow.pop %v797
  %v799 = vmul.f32 %v686, 1.442695
  %v800 = vpow.pop %v799
  %v801 = vmul.f32 %v687, 1.442695
  %v802 = vpow.pop %v801
  %v803 = vmul.f32 %v688, 1.442695
  %v804 = vpow.pop %v803
  %v805 = vmul.f32 %v689, 1.442695
  %v806 = vpow.pop %v805
  %v807 = vmul.f32 %v690, 1.442695
  %v808 = vpow.pop %v807
  %v809 = vmul.f32 %v691, 1.442695
  %v810 = vpow.pop %v809
  %v811 = vmul.f32 %v692, 1.442695
  %v812 = vpow.pop %v811
  %v813 = vmul.f32 %v693, 1.442695
  %v814 = vpow.pop %v813
  %v815 = vmul.f32 %v694, 1.442695
  %v816 = vpow.pop %v815
  %v817 = vmul.f32 %v695, 1.442695
  %v818 = vpow.pop %v817
  %v819 = vmul.f32 %v696, 1.442695
  %v820 = vpow.pop %v819
  %v821 = vmul.f32 %v697, 1.442695
  %v822 = vpow.pop %v821
  %v823 = vmul.f32 %v698, 1.442695
  %v824 = vpow.pop %v823
  %v825 = vmul.f32 %v699, 1.442695
  %v826 = vpow.pop %v825
  %v827 = vmul.f32 %v700, 1.442695
  %v828 = vpow.pop %v827
  %v829 = vadd.f32 %v702, 1.0
  %v830 = vadd.f32 %v704, 1.0
  %v831 = vadd.f32 %v706, 1.0
  %v832 = vadd.f32 %v708, 1.0
  %v833 = vadd.f32 %v710, 1.0
  %v834 = vadd.f32 %v712, 1.0
  %v835 = vadd.f32 %v714, 1.0
  %v836 = vadd.f32 %v716, 1.0
  %v837 = vadd.f32 %v718, 1.0
  %v838 = vadd.f32 %v720, 1.0
  %v839 = vadd.f32 %v722, 1.0
  %v840 = vadd.f32 %v724, 1.0
  %v841 = vadd.f32 %v726, 1.0
  %v842 = vadd.f32 %v728, 1.0
  %v843 = vadd.f32 %v730, 1.0
  %v844 = vadd.f32 %v732, 1.0
  %v845 = vadd.f32 %v734, 1.0
  %v846 = vadd.f32 %v736, 1.0
  %v847 = vadd.f32 %v738, 1.0
  %v848 = vadd.f32 %v740, 1.0
  %v849 = vadd.f32 %v742, 1.0
  %v850 = vadd.f32 %v744, 1.0
  %v851 = vadd.f32 %v746, 1.0
  %v852 = vadd.f32 %v748, 1.0
  %v853 = vadd.f32 %v750, 1.0
  %v854 = vadd.f32 %v752, 1.0
  %v855 = vadd.f32 %v754, 1.0
  %v856 = vadd.f32 %v756, 1.0
  %v857 = vadd.f32 %v758, 1.0
  %v858 = vadd.f32 %v760, 1.0
  %v859 = vadd.f32 %v762, 1.0
  %v860 = vadd.f32 %v764, 1.0
  %v861 = vadd.f32 %v766, 1.0
  %v862 = vadd.f32 %v768, 1.0
  %v863 = vadd.f32 %v770, 1.0
  %v864 = vadd.f32 %v772, 1.0
  %v865 = vadd.f32 %v774, 1.0
  %v866 = vadd.f32 %v776, 1.0
  %v867 = vadd.f32 %v778, 1.0
  %v868 = vadd.f32 %v780, 1.0
  %v869 = vadd.f32 %v782, 1.0
  %v870 = vadd.f32 %v784, 1.0
  %v871 = vadd.f32 %v786, 1.0
  %v872 = vadd.f32 %v788, 1.0
  %v873 = vadd.f32 %v790, 1.0
  %v874 = vadd.f32 %v792, 1.0
  %v875 = vadd.f32 %v794, 1.0
  %v876 = vadd.f32 %v796, 1.0
  %v877 = vadd.f32 %v798, 1.0
  %v878 = vadd.f32 %v800, 1.0
  %v879 = vadd.f32 %v802, 1.0
  %v880 = vadd.f32 %v804, 1.0
  %v881 = vadd.f32 %v806, 1.0
  %v882 = vadd.f32 %v808, 1.0
  %v883 = vadd.f32 %v810, 1.0
  %v884 = vadd.f32 %v812, 1.0
  %v885 = vadd.f32 %v814, 1.0
  %v886 = vadd.f32 %v816, 1.0
  %v887 = vadd.f32 %v818, 1.0
  %v888 = vadd.f32 %v820, 1.0
  %v889 = vadd.f32 %v822, 1.0
  %v890 = vadd.f32 %v824, 1.0
  %v891 = vadd.f32 %v826, 1.0
  %v892 = vadd.f32 %v828, 1.0
  %v893 = vrcp.pop %v829
  %v894 = vmul.f32 1.0, %v893
  %v895 = vrcp.pop %v830
  %v896 = vmul.f32 1.0, %v895
  %v897 = vrcp.pop %v831
  %v898 = vmul.f32 1.0, %v897
  %v899 = vrcp.pop %v832
  %v900 = vmul.f32 1.0, %v899
  %v901 = vrcp.pop %v833
  %v902 = vmul.f32 1.0, %v901
  %v903 = vrcp.pop %v834
  %v904 = vmul.f32 1.0, %v903
  %v905 = vrcp.pop %v835
  %v906 = vmul.f32 1.0, %v905
  %v907 = vrcp.pop %v836
  %v908 = vmul.f32 1.0, %v907
  %v909 = vrcp.pop %v837
  %v910 = vmul.f32 1.0, %v909
  %v911 = vrcp.pop %v838
  %v912 = vmul.f32 1.0, %v911
  %v913 = vrcp.pop %v839
  %v914 = vmul.f32 1.0, %v913
  %v915 = vrcp.pop %v840
  %v916 = vmul.f32 1.0, %v915
  %v917 = vrcp.pop %v841
  %v918 = vmul.f32 1.0, %v917
  %v919 = vrcp.pop %v842
  %v920 = vmul.f32 1.0, %v919
  %v921 = vrcp.pop %v843
  %v922 = vmul.f32 1.0, %v921
  %v923 = vrcp.pop %v844
  %v924 = vmul.f32 1.0, %v923
  %v925 = vrcp.pop %v845
  %v926 = vmul.f32 1.0, %v925
  %v927 = vrcp.pop %v846
  %v928 = vmul.f32 1.0, %v927
  %v929 = vrcp.pop %v847
  %v930 = vmul.f32 1.0, %v929
  %v931 = vrcp.pop %v848
  %v932 = vmul.f32 1.0, %v931
  %v933 = vrcp.pop %v849
  %v934 = vmul.f32 1.0, %v933
  %v935 = vrcp.pop %v850
  %v936 = vmul.f32 1.0, %v935
  %v937 = vrcp.pop %v851
  %v938 = vmul.f32 1.0, %v937
  %v939 = vrcp.pop %v852
  %v940 = vmul.f32 1.0, %v939
  %v941 = vrcp.pop %v853
  %v942 = vmul.f32 1.0, %v941
  %v943 = vrcp.pop %v854
  %v944 = vmul.f32 1.0, %v943
  %v945 = vrcp.pop %v855
  %v946 = vmul.f32 1.0, %v945
  %v947 = vrcp.pop %v856
  %v948 = vmul.f32 1.0, %v947
  %v949 = vrcp.pop %v857
  %v950 = vmul.f32 1.0, %v949
  %v951 = vrcp.pop %v858
  %v952 = vmul.f32 1.0, %v951
  %v953 = vrcp.pop %v859
  %v954 = vmul.f32 1.0, %v953
  %v955 = vrcp.pop %v860
  %v956 = vmul.f32 1.0, %v955
  %v957 = vrcp.pop %v861
  %v958 = vmul.f32 1.0, %v957
  %v959 = vrcp.pop %v862
  %v960 = vmul.f32 1.0, %v959
  %v961 = vrcp.pop %v863
  %v962 = vmul.f32 1.0, %v961
  %v963 = vrcp.pop %v864
  %v964 = vmul.f32 1.0, %v963
  %v965 = vrcp.pop %v865
  %v966 = vmul.f32 1.0, %v965
  %v967 = vrcp.pop %v866
  %v968 = vmul.f32 1.0, %v967
  %v969 = vrcp.pop %v867
  %v970 = vmul.f32 1.0, %v969
  %v971 = vrcp.pop %v868
  %v972 = vmul.f32 1.0, %v971
  %v973 = vrcp.pop %v869
  %v974 = vmul.f32 1.0, %v973
  %v975 = vrcp.pop %v870
  %v976 = vmul.f32 1.0, %v975
  %v977 = vrcp.pop %v871
  %v978 = vmul.f32 1.0, %v977
  %v979 = vrcp.pop %v872
  %v980 = vmul.f32 1.0, %v979
  %v981 = vrcp.pop %v873
  %v982 = vmul.f32 1.0, %v981
  %v983 = vrcp.pop %v874
  %v984 = vmul.f32 1.0, %v983
  %v985 = vrcp.pop %v875
  %v986 = vmul.f32 1.0, %v985
  %v987 = vrcp.pop %v876
  %v988 = vmul.f32 1.0, %v987
  %v989 = vrcp.pop %v877
  %v990 = vmul.f32 1.0, %v989
  %v991 = vrcp.pop %v878
  %v992 = vmul.f32 1.0, %v991
  %v993 = vrcp.pop %v879
  %v994 = vmul.f32 1.0, %v993
  %v995 = vrcp.pop %v880
  %v996 = vmul.f32 1.0, %v995
  %v997 = vrcp.pop %v881
  %v998 = vmul.f32 1.0, %v997
  %v999 = vrcp.pop %v882
  %v1000 = vmul.f32 1.0, %v999
  %v1001 = vrcp.pop %v883
  %v1002 = vmul.f32 1.0, %v1001
  %v1003 = vrcp.pop %v884
  %v1004 = vmul.f32 1.0, %v1003
  %v1005 = vrcp.pop %v885
  %v1006 = vmul.f32 1.0, %v1005
  %v1007 = vrcp.pop %v886
  %v1008 = vmul.f32 1.0, %v1007
  %v1009 = vrcp.pop %v887
  %v1010 = vmul.f32 1.0, %v1009
  %v1011 = vrcp.pop %v888
  %v1012 = vmul.f32 1.0, %v1011
  %v1013 = vrcp.pop %v889
  %v1014 = vmul.f32 1.0, %v1013
  %v1015 = vrcp.pop %v890
  %v1016 = vmul.f32 1.0, %v1015
  %v1017 = vrcp.pop %v891
  %v1018 = vmul.f32 1.0, %v1017
  %v1019 = vrcp.pop %v892
  %v1020 = vmul.f32 1.0, %v1019
  %v1021 = vunpack.c.l.bf16 %v21
  %v1022 = vunpack.c.l.bf16 %v22
  %v1023 = vunpack.c.l.bf16 %v23
  %v1024 = vunpack.c.l.bf16 %v24
  %v1025 = vunpack.c.l.bf16 %v25
  %v1026 = vunpack.c.l.bf16 %v26
  %v1027 = vunpack.c.l.bf16 %v27
  %v1028 = vunpack.c.l.bf16 %v28
  %v1029 = vunpack.c.l.bf16 %v29
  %v1030 = vunpack.c.l.bf16 %v30
  %v1031 = vunpack.c.l.bf16 %v31
  %v1032 = vunpack.c.l.bf16 %v32
  %v1033 = vunpack.c.l.bf16 %v33
  %v1034 = vunpack.c.l.bf16 %v34
  %v1035 = vunpack.c.l.bf16 %v35
  %v1036 = vunpack.c.l.bf16 %v36
  %v1037 = vunpack.c.l.bf16 %v37
  %v1038 = vunpack.c.l.bf16 %v38
  %v1039 = vunpack.c.l.bf16 %v39
  %v1040 = vunpack.c.l.bf16 %v40
  %v1041 = vunpack.c.l.bf16 %v41
  %v1042 = vunpack.c.l.bf16 %v42
  %v1043 = vunpack.c.l.bf16 %v43
  %v1044 = vunpack.c.l.bf16 %v44
  %v1045 = vunpack.c.l.bf16 %v45
  %v1046 = vunpack.c.l.bf16 %v46
  %v1047 = vunpack.c.l.bf16 %v47
  %v1048 = vunpack.c.l.bf16 %v48
  %v1049 = vunpack.c.l.bf16 %v49
  %v1050 = vunpack.c.l.bf16 %v50
  %v1051 = vunpack.c.l.bf16 %v51
  %v1052 = vunpack.c.l.bf16 %v52
  %v1053 = vunpack.c.l.bf16 %v53
  %v1054 = vunpack.c.l.bf16 %v54
  %v1055 = vunpack.c.l.bf16 %v55
  %v1056 = vunpack.c.l.bf16 %v56
  %v1057 = vunpack.c.l.bf16 %v57
  %v1058 = vunpack.c.l.bf16 %v58
  %v1059 = vunpack.c.l.bf16 %v59
  %v1060 = vunpack.c.l.bf16 %v60
  %v1061 = vunpack.c.l.bf16 %v61
  %v1062 = vunpack.c.l.bf16 %v62
  %v1063 = vunpack.c.l.bf16 %v63
  %v1064 = vunpack.c.l.bf16 %v64
  %v1065 = vunpack.c.l.bf16 %v65
  %v1066 = vunpack.c.l.bf16 %v66
  %v1067 = vunpack.c.l.bf16 %v67
  %v1068 = vunpack.c.l.bf16 %v68
  %v1069 = vunpack.c.l.bf16 %v69
  %v1070 = vunpack.c.l.bf16 %v70
  %v1071 = vunpack.c.l.bf16 %v71
  %v1072 = vunpack.c.l.bf16 %v72
  %v1073 = vunpack.c.l.bf16 %v73
  %v1074 = vunpack.c.l.bf16 %v74
  %v1075 = vunpack.c.l.bf16 %v75
  %v1076 = vunpack.c.l.bf16 %v76
  %v1077 = vunpack.c.l.bf16 %v77
  %v1078 = vunpack.c.l.bf16 %v78
  %v1079 = vunpack.c.l.bf16 %v79
  %v1080 = vunpack.c.l.bf16 %v80
  %v1081 = vunpack.c.l.bf16 %v81
  %v1082 = vunpack.c.l.bf16 %v82
  %v1083 = vunpack.c.l.bf16 %v83
  %v1084 = vunpack.c.l.bf16 %v84
  %v1085 = vmul.f32 %v1021, %v894
  %v1086 = vmul.f32 %v1022, %v896
  %v1087 = vmul.f32 %v1023, %v898
  %v1088 = vmul.f32 %v1024, %v900
  %v1089 = vmul.f32 %v1025, %v902
  %v1090 = vmul.f32 %v1026, %v904
  %v1091 = vmul.f32 %v1027, %v906
  %v1092 = vmul.f32 %v1028, %v908
  %v1093 = vmul.f32 %v1029, %v910
  %v1094 = vmul.f32 %v1030, %v912
  %v1095 = vmul.f32 %v1031, %v914
  %v1096 = vmul.f32 %v1032, %v916
  %v1097 = vmul.f32 %v1033, %v918
  %v1098 = vmul.f32 %v1034, %v920
  %v1099 = vmul.f32 %v1035, %v922
  %v1100 = vmul.f32 %v1036, %v924
  %v1101 = vmul.f32 %v1037, %v926
  %v1102 = vmul.f32 %v1038, %v928
  %v1103 = vmul.f32 %v1039, %v930
  %v1104 = vmul.f32 %v1040, %v932
  %v1105 = vmul.f32 %v1041, %v934
  %v1106 = vmul.f32 %v1042, %v936
  %v1107 = vmul.f32 %v1043, %v938
  %v1108 = vmul.f32 %v1044, %v940
  %v1109 = vmul.f32 %v1045, %v942
  %v1110 = vmul.f32 %v1046, %v944
  %v1111 = vmul.f32 %v1047, %v946
  %v1112 = vmul.f32 %v1048, %v948
  %v1113 = vmul.f32 %v1049, %v950
  %v1114 = vmul.f32 %v1050, %v952
  %v1115 = vmul.f32 %v1051, %v954
  %v1116 = vmul.f32 %v1052, %v956
  %v1117 = vmul.f32 %v1053, %v958
  %v1118 = vmul.f32 %v1054, %v960
  %v1119 = vmul.f32 %v1055, %v962
  %v1120 = vmul.f32 %v1056, %v964
  %v1121 = vmul.f32 %v1057, %v966
  %v1122 = vmul.f32 %v1058, %v968
  %v1123 = vmul.f32 %v1059, %v970
  %v1124 = vmul.f32 %v1060, %v972
  %v1125 = vmul.f32 %v1061, %v974
  %v1126 = vmul.f32 %v1062, %v976
  %v1127 = vmul.f32 %v1063, %v978
  %v1128 = vmul.f32 %v1064, %v980
  %v1129 = vmul.f32 %v1065, %v982
  %v1130 = vmul.f32 %v1066, %v984
  %v1131 = vmul.f32 %v1067, %v986
  %v1132 = vmul.f32 %v1068, %v988
  %v1133 = vmul.f32 %v1069, %v990
  %v1134 = vmul.f32 %v1070, %v992
  %v1135 = vmul.f32 %v1071, %v994
  %v1136 = vmul.f32 %v1072, %v996
  %v1137 = vmul.f32 %v1073, %v998
  %v1138 = vmul.f32 %v1074, %v1000
  %v1139 = vmul.f32 %v1075, %v1002
  %v1140 = vmul.f32 %v1076, %v1004
  %v1141 = vmul.f32 %v1077, %v1006
  %v1142 = vmul.f32 %v1078, %v1008
  %v1143 = vmul.f32 %v1079, %v1010
  %v1144 = vmul.f32 %v1080, %v1012
  %v1145 = vmul.f32 %v1081, %v1014
  %v1146 = vmul.f32 %v1082, %v1016
  %v1147 = vmul.f32 %v1083, %v1018
  %v1148 = vmul.f32 %v1084, %v1020
  %v1149 = vpack.c.bf16 %v1086, %v1085
  %v1150 = vpack.c.bf16 %v1088, %v1087
  %v1151 = vpack.c.bf16 %v1090, %v1089
  %v1152 = vpack.c.bf16 %v1092, %v1091
  %v1153 = vpack.c.bf16 %v1094, %v1093
  %v1154 = vpack.c.bf16 %v1096, %v1095
  %v1155 = vpack.c.bf16 %v1098, %v1097
  %v1156 = vpack.c.bf16 %v1100, %v1099
  %v1157 = vpack.c.bf16 %v1102, %v1101
  %v1158 = vpack.c.bf16 %v1104, %v1103
  %v1159 = vpack.c.bf16 %v1106, %v1105
  %v1160 = vpack.c.bf16 %v1108, %v1107
  %v1161 = vpack.c.bf16 %v1110, %v1109
  %v1162 = vpack.c.bf16 %v1112, %v1111
  %v1163 = vpack.c.bf16 %v1114, %v1113
  %v1164 = vpack.c.bf16 %v1116, %v1115
  %v1165 = vpack.c.bf16 %v1118, %v1117
  %v1166 = vpack.c.bf16 %v1120, %v1119
  %v1167 = vpack.c.bf16 %v1122, %v1121
  %v1168 = vpack.c.bf16 %v1124, %v1123
  %v1169 = vpack.c.bf16 %v1126, %v1125
  %v1170 = vpack.c.bf16 %v1128, %v1127
  %v1171 = vpack.c.bf16 %v1130, %v1129
  %v1172 = vpack.c.bf16 %v1132, %v1131
  %v1173 = vpack.c.bf16 %v1134, %v1133
  %v1174 = vpack.c.bf16 %v1136, %v1135
  %v1175 = vpack.c.bf16 %v1138, %v1137
  %v1176 = vpack.c.bf16 %v1140, %v1139
  %v1177 = vpack.c.bf16 %v1142, %v1141
  %v1178 = vpack.c.bf16 %v1144, %v1143
  %v1179 = vpack.c.bf16 %v1146, %v1145
  %v1180 = vpack.c.bf16 %v1148, %v1147
  %v1181 = vld [vmem:[%s3] sm:$0xf]
  %v1182 = vld [vmem:[%s3 + $0x4] sm:$0xf]
  %v1183 = vld [vmem:[%s3 + $0x8] sm:$0xf]
  %v1184 = vld [vmem:[%s3 + $0xc] sm:$0xf]
  %v1185 = vld [vmem:[%s3 + $0x10] sm:$0xf]
  %v1186 = vld [vmem:[%s3 + $0x14] sm:$0xf]
  %v1187 = vld [vmem:[%s3 + $0x18] sm:$0xf]
  %v1188 = vld [vmem:[%s3 + $0x1c] sm:$0xf]
  %v1189 = vld [vmem:[%s3 + $0x20] sm:$0xf]
  %v1190 = vld [vmem:[%s3 + $0x24] sm:$0xf]
  %v1191 = vld [vmem:[%s3 + $0x28] sm:$0xf]
  %v1192 = vld [vmem:[%s3 + $0x2c] sm:$0xf]
  %v1193 = vld [vmem:[%s3 + $0x30] sm:$0xf]
  %v1194 = vld [vmem:[%s3 + $0x34] sm:$0xf]
  %v1195 = vld [vmem:[%s3 + $0x38] sm:$0xf]
  %v1196 = vld [vmem:[%s3 + $0x3c] sm:$0xf]
  %v1197 = vld [vmem:[%s4] sm:$0x1]
  %v1199 = vlaneseq
  %v1200 = vshrl.u32 %v1199, 7
  %v1201 = vsub.s32 0, %v1200
  %v1202 = vrot.slane %v1197, %v1201
  %v1220 = vunpack.c.l.b16 %v1181
  %v1221 = vunpack.c.l.b16 %v1182
  %v1222 = vunpack.c.l.b16 %v1183
  %v1223 = vunpack.c.l.b16 %v1184
  %v1224 = vunpack.c.l.b16 %v1185
  %v1225 = vunpack.c.l.b16 %v1186
  %v1226 = vunpack.c.l.b16 %v1187
  %v1227 = vunpack.c.l.b16 %v1188
  %v1228 = vunpack.c.l.b16 %v1189
  %v1229 = vunpack.c.l.b16 %v1190
  %v1230 = vunpack.c.l.b16 %v1191
  %v1231 = vunpack.c.l.b16 %v1192
  %v1232 = vunpack.c.l.b16 %v1193
  %v1233 = vunpack.c.l.b16 %v1194
  %v1234 = vunpack.c.l.b16 %v1195
  %v1235 = vunpack.c.l.b16 %v1196
  %v1236 = vpack.c.b16 %v1221, %v1220
  %v1237 = vpack.c.b16 %v1223, %v1222
  %v1238 = vpack.c.b16 %v1225, %v1224
  %v1239 = vpack.c.b16 %v1227, %v1226
  %v1240 = vpack.c.b16 %v1229, %v1228
  %v1241 = vpack.c.b16 %v1231, %v1230
  %v1242 = vpack.c.b16 %v1233, %v1232
  %v1243 = vpack.c.b16 %v1235, %v1234
  %1252 = vmatprep.subr.bf16.mxu0 0
  %1253 = vmatpush1.bf16.msra.mxu0 %v1236
  %1254 = vmatprep.subr.bf16.mxu0 0
  %1255 = vmatpush1.bf16.msra.mxu0 %v1237
  %1256 = vmatprep.subr.bf16.mxu0 0
  %1257 = vmatpush1.bf16.msra.mxu0 %v1238
  %1258 = vmatprep.subr.bf16.mxu0 0
  %1259 = vmatpush1.bf16.msra.mxu0 %v1239
  %1260 = vmatprep.subr.bf16.mxu0 0
  %1261 = vmatpush1.bf16.msra.mxu0 %v1240
  %1262 = vmatprep.subr.bf16.mxu0 0
  %1263 = vmatpush1.bf16.msra.mxu0 %v1241
  %1264 = vmatprep.subr.bf16.mxu0 0
  %1265 = vmatpush1.bf16.msra.mxu0 %v1242
  %1266 = vmatprep.subr.bf16.mxu0 0
  %1267 = vmatpush1.bf16.msra.mxu0 %v1243
  %1268 = vmatprep.subr.bf16.mxu0 0
  %1269 = vmatpush1.bf16.msra.mxu0 0
  %1270 = vmatprep.subr.bf16.mxu0 0
  %1271 = vmatpush1.bf16.msra.mxu0 0
  %1272 = vmatprep.subr.bf16.mxu0 0
  %1273 = vmatpush1.bf16.msra.mxu0 0
  %1274 = vmatprep.subr.bf16.mxu0 0
  %1275 = vmatpush1.bf16.msra.mxu0 0
  %1276 = vmatprep.subr.bf16.mxu0 0
  %1277 = vmatpush1.bf16.msra.mxu0 0
  %1278 = vmatprep.subr.bf16.mxu0 0
  %1279 = vmatpush1.bf16.msra.mxu0 0
  %1280 = vmatprep.subr.bf16.mxu0 0
  %1281 = vmatpush1.bf16.msra.mxu0 0
  %1282 = vmatprep.subr.bf16.mxu0 0
  %1283 = vmatpush1.bf16.msra.mxu0 0
  %1284 = vmatprep.mubr.bf16.mxu0 0
  %1285 = vmatmul.mubr.bf16.gmra.mrb[0].mxu0 %v1149
  %v1286 = vpop.f32.mrb[0].mxu0
  %v1287 = vadd.f32 %v1202, %v1286
  %v1288 = vpop.f32.mrb[0].mxu0
  %v1289 = vpop.f32.mrb[0].mxu0
  %v1290 = vadd.f32 %v1202, %v1289
  %v1291 = vpop.f32.mrb[0].mxu0
  %1292 = vmatprep.mubr.bf16.mxu0 0
  %1293 = vmatmul.mubr.bf16.gmra.mrb[0].mxu0 %v1150
  %v1294 = vpop.f32.mrb[0].mxu0
  %v1295 = vadd.f32 %v1202, %v1294
  %v1296 = vpop.f32.mrb[0].mxu0
  %v1297 = vpop.f32.mrb[0].mxu0
  %v1298 = vadd.f32 %v1202, %v1297
  %v1299 = vpop.f32.mrb[0].mxu0
  %1300 = vmatprep.mubr.bf16.mxu0 0
  %1301 = vmatmul.mubr.bf16.gmra.mrb[0].mxu0 %v1151
  %v1302 = vpop.f32.mrb[0].mxu0
  %v1303 = vadd.f32 %v1202, %v1302
  %v1304 = vpop.f32.mrb[0].mxu0
  %v1305 = vpop.f32.mrb[0].mxu0
  %v1306 = vadd.f32 %v1202, %v1305
  %v1307 = vpop.f32.mrb[0].mxu0
  %1308 = vmatprep.mubr.bf16.mxu0 0
  %1309 = vmatmul.mubr.bf16.gmra.mrb[0].mxu0 %v1152
  %v1310 = vpop.f32.mrb[0].mxu0
  %v1311 = vadd.f32 %v1202, %v1310
  %v1312 = vpop.f32.mrb[0].mxu0
  %v1313 = vpop.f32.mrb[0].mxu0
  %v1314 = vadd.f32 %v1202, %v1313
  %v1315 = vpop.f32.mrb[0].mxu0
  %1316 = vmatprep.mubr.bf16.mxu0 0
  %1317 = vmatmul.mubr.bf16.gmra.mrb[0].mxu0 %v1153
  %v1318 = vpop.f32.mrb[0].mxu0
  %v1319 = vadd.f32 %v1202, %v1318
  %v1320 = vpop.f32.mrb[0].mxu0
  %v1321 = vpop.f32.mrb[0].mxu0
  %v1322 = vadd.f32 %v1202, %v1321
  %v1323 = vpop.f32.mrb[0].mxu0
  %1324 = vmatprep.mubr.bf16.mxu0 0
  %1325 = vmatmul.mubr.bf16.gmra.mrb[0].mxu0 %v1154
  %v1326 = vpop.f32.mrb[0].mxu0
  %v1327 = vadd.f32 %v1202, %v1326
  %v1328 = vpop.f32.mrb[0].mxu0
  %v1329 = vpop.f32.mrb[0].mxu0
  %v1330 = vadd.f32 %v1202, %v1329
  %v1331 = vpop.f32.mrb[0].mxu0
  %1332 = vmatprep.mubr.bf16.mxu0 0
  %1333 = vmatmul.mubr.bf16.gmra.mrb[0].mxu0 %v1155
  %v1334 = vpop.f32.mrb[0].mxu0
  %v1335 = vadd.f32 %v1202, %v1334
  %v1336 = vpop.f32.mrb[0].mxu0
  %v1337 = vpop.f32.mrb[0].mxu0
  %v1338 = vadd.f32 %v1202, %v1337
  %v1339 = vpop.f32.mrb[0].mxu0
  %1340 = vmatprep.mubr.bf16.mxu0 0
  %1341 = vmatmul.mubr.bf16.gmra.mrb[0].mxu0 %v1156
  %v1342 = vpop.f32.mrb[0].mxu0
  %v1343 = vadd.f32 %v1202, %v1342
  %v1344 = vpop.f32.mrb[0].mxu0
  %v1345 = vpop.f32.mrb[0].mxu0
  %v1346 = vadd.f32 %v1202, %v1345
  %v1347 = vpop.f32.mrb[0].mxu0
  %1348 = vmatprep.mubr.bf16.mxu0 0
  %1349 = vmatmul.mubr.bf16.gmra.mrb[0].mxu0 %v1157
  %v1350 = vpop.f32.mrb[0].mxu0
  %v1351 = vadd.f32 %v1202, %v1350
  %v1352 = vpop.f32.mrb[0].mxu0
  %v1353 = vpop.f32.mrb[0].mxu0
  %v1354 = vadd.f32 %v1202, %v1353
  %v1355 = vpop.f32.mrb[0].mxu0
  %1356 = vmatprep.mubr.bf16.mxu0 0
  %1357 = vmatmul.mubr.bf16.gmra.mrb[0].mxu0 %v1158
  %v1358 = vpop.f32.mrb[0].mxu0
  %v1359 = vadd.f32 %v1202, %v1358
  %v1360 = vpop.f32.mrb[0].mxu0
  %v1361 = vpop.f32.mrb[0].mxu0
  %v1362 = vadd.f32 %v1202, %v1361
  %v1363 = vpop.f32.mrb[0].mxu0
  %1364 = vmatprep.mubr.bf16.mxu0 0
  %1365 = vmatmul.mubr.bf16.gmra.mrb[0].mxu0 %v1159
  %v1366 = vpop.f32.mrb[0].mxu0
  %v1367 = vadd.f32 %v1202, %v1366
  %v1368 = vpop.f32.mrb[0].mxu0
  %v1369 = vpop.f32.mrb[0].mxu0
  %v1370 = vadd.f32 %v1202, %v1369
  %v1371 = vpop.f32.mrb[0].mxu0
  %1372 = vmatprep.mubr.bf16.mxu0 0
  %1373 = vmatmul.mubr.bf16.gmra.mrb[0].mxu0 %v1160
  %v1374 = vpop.f32.mrb[0].mxu0
  %v1375 = vadd.f32 %v1202, %v1374
  %v1376 = vpop.f32.mrb[0].mxu0
  %v1377 = vpop.f32.mrb[0].mxu0
  %v1378 = vadd.f32 %v1202, %v1377
  %v1379 = vpop.f32.mrb[0].mxu0
  %1380 = vmatprep.mubr.bf16.mxu0 0
  %1381 = vmatmul.mubr.bf16.gmra.mrb[0].mxu0 %v1161
  %v1382 = vpop.f32.mrb[0].mxu0
  %v1383 = vadd.f32 %v1202, %v1382
  %v1384 = vpop.f32.mrb[0].mxu0
  %v1385 = vpop.f32.mrb[0].mxu0
  %v1386 = vadd.f32 %v1202, %v1385
  %v1387 = vpop.f32.mrb[0].mxu0
  %1388 = vmatprep.mubr.bf16.mxu0 0
  %1389 = vmatmul.mubr.bf16.gmra.mrb[0].mxu0 %v1162
  %v1390 = vpop.f32.mrb[0].mxu0
  %v1391 = vadd.f32 %v1202, %v1390
  %v1392 = vpop.f32.mrb[0].mxu0
  %v1393 = vpop.f32.mrb[0].mxu0
  %v1394 = vadd.f32 %v1202, %v1393
  %v1395 = vpop.f32.mrb[0].mxu0
  %1396 = vmatprep.mubr.bf16.mxu0 0
  %1397 = vmatmul.mubr.bf16.gmra.mrb[0].mxu0 %v1163
  %v1398 = vpop.f32.mrb[0].mxu0
  %v1399 = vadd.f32 %v1202, %v1398
  %v1400 = vpop.f32.mrb[0].mxu0
  %v1401 = vpop.f32.mrb[0].mxu0
  %v1402 = vadd.f32 %v1202, %v1401
  %v1403 = vpop.f32.mrb[0].mxu0
  %1404 = vmatprep.mubr.bf16.mxu0 0
  %1405 = vmatmul.mubr.bf16.gmra.mrb[0].mxu0 %v1164
  %v1406 = vpop.f32.mrb[0].mxu0
  %v1407 = vadd.f32 %v1202, %v1406
  %v1408 = vpop.f32.mrb[0].mxu0
  %v1409 = vpop.f32.mrb[0].mxu0
  %v1410 = vadd.f32 %v1202, %v1409
  %v1411 = vpop.f32.mrb[0].mxu0
  %1412 = vmatprep.mubr.bf16.mxu0 0
  %1413 = vmatmul.mubr.bf16.gmra.mrb[0].mxu0 %v1165
  %v1414 = vpop.f32.mrb[0].mxu0
  %v1415 = vadd.f32 %v1202, %v1414
  %v1416 = vpop.f32.mrb[0].mxu0
  %v1417 = vpop.f32.mrb[0].mxu0
  %v1418 = vadd.f32 %v1202, %v1417
  %v1419 = vpop.f32.mrb[0].mxu0
  %1420 = vmatprep.mubr.bf16.mxu0 0
  %1421 = vmatmul.mubr.bf16.gmra.mrb[0].mxu0 %v1166
  %v1422 = vpop.f32.mrb[0].mxu0
  %v1423 = vadd.f32 %v1202, %v1422
  %v1424 = vpop.f32.mrb[0].mxu0
  %v1425 = vpop.f32.mrb[0].mxu0
  %v1426 = vadd.f32 %v1202, %v1425
  %v1427 = vpop.f32.mrb[0].mxu0
  %1428 = vmatprep.mubr.bf16.mxu0 0
  %1429 = vmatmul.mubr.bf16.gmra.mrb[0].mxu0 %v1167
  %v1430 = vpop.f32.mrb[0].mxu0
  %v1431 = vadd.f32 %v1202, %v1430
  %v1432 = vpop.f32.mrb[0].mxu0
  %v1433 = vpop.f32.mrb[0].mxu0
  %v1434 = vadd.f32 %v1202, %v1433
  %v1435 = vpop.f32.mrb[0].mxu0
  %1436 = vmatprep.mubr.bf16.mxu0 0
  %1437 = vmatmul.mubr.bf16.gmra.mrb[0].mxu0 %v1168
  %v1438 = vpop.f32.mrb[0].mxu0
  %v1439 = vadd.f32 %v1202, %v1438
  %v1440 = vpop.f32.mrb[0].mxu0
  %v1441 = vpop.f32.mrb[0].mxu0
  %v1442 = vadd.f32 %v1202, %v1441
  %v1443 = vpop.f32.mrb[0].mxu0
  %1444 = vmatprep.mubr.bf16.mxu0 0
  %1445 = vmatmul.mubr.bf16.gmra.mrb[0].mxu0 %v1169
  %v1446 = vpop.f32.mrb[0].mxu0
  %v1447 = vadd.f32 %v1202, %v1446
  %v1448 = vpop.f32.mrb[0].mxu0
  %v1449 = vpop.f32.mrb[0].mxu0
  %v1450 = vadd.f32 %v1202, %v1449
  %v1451 = vpop.f32.mrb[0].mxu0
  %1452 = vmatprep.mubr.bf16.mxu0 0
  %1453 = vmatmul.mubr.bf16.gmra.mrb[0].mxu0 %v1170
  %v1454 = vpop.f32.mrb[0].mxu0
  %v1455 = vadd.f32 %v1202, %v1454
  %v1456 = vpop.f32.mrb[0].mxu0
  %v1457 = vpop.f32.mrb[0].mxu0
  %v1458 = vadd.f32 %v1202, %v1457
  %v1459 = vpop.f32.mrb[0].mxu0
  %1460 = vmatprep.mubr.bf16.mxu0 0
  %1461 = vmatmul.mubr.bf16.gmra.mrb[0].mxu0 %v1171
  %v1462 = vpop.f32.mrb[0].mxu0
  %v1463 = vadd.f32 %v1202, %v1462
  %v1464 = vpop.f32.mrb[0].mxu0
  %v1465 = vpop.f32.mrb[0].mxu0
  %v1466 = vadd.f32 %v1202, %v1465
  %v1467 = vpop.f32.mrb[0].mxu0
  %1468 = vmatprep.mubr.bf16.mxu0 0
  %1469 = vmatmul.mubr.bf16.gmra.mrb[0].mxu0 %v1172
  %v1470 = vpop.f32.mrb[0].mxu0
  %v1471 = vadd.f32 %v1202, %v1470
  %v1472 = vpop.f32.mrb[0].mxu0
  %v1473 = vpop.f32.mrb[0].mxu0
  %v1474 = vadd.f32 %v1202, %v1473
  %v1475 = vpop.f32.mrb[0].mxu0
  %1476 = vmatprep.mubr.bf16.mxu0 0
  %1477 = vmatmul.mubr.bf16.gmra.mrb[0].mxu0 %v1173
  %v1478 = vpop.f32.mrb[0].mxu0
  %v1479 = vadd.f32 %v1202, %v1478
  %v1480 = vpop.f32.mrb[0].mxu0
  %v1481 = vpop.f32.mrb[0].mxu0
  %v1482 = vadd.f32 %v1202, %v1481
  %v1483 = vpop.f32.mrb[0].mxu0
  %1484 = vmatprep.mubr.bf16.mxu0 0
  %1485 = vmatmul.mubr.bf16.gmra.mrb[0].mxu0 %v1174
  %v1486 = vpop.f32.mrb[0].mxu0
  %v1487 = vadd.f32 %v1202, %v1486
  %v1488 = vpop.f32.mrb[0].mxu0
  %v1489 = vpop.f32.mrb[0].mxu0
  %v1490 = vadd.f32 %v1202, %v1489
  %v1491 = vpop.f32.mrb[0].mxu0
  %1492 = vmatprep.mubr.bf16.mxu0 0
  %1493 = vmatmul.mubr.bf16.gmra.mrb[0].mxu0 %v1175
  %v1494 = vpop.f32.mrb[0].mxu0
  %v1495 = vadd.f32 %v1202, %v1494
  %v1496 = vpop.f32.mrb[0].mxu0
  %v1497 = vpop.f32.mrb[0].mxu0
  %v1498 = vadd.f32 %v1202, %v1497
  %v1499 = vpop.f32.mrb[0].mxu0
  %1500 = vmatprep.mubr.bf16.mxu0 0
  %1501 = vmatmul.mubr.bf16.gmra.mrb[0].mxu0 %v1176
  %v1502 = vpop.f32.mrb[0].mxu0
  %v1503 = vadd.f32 %v1202, %v1502
  %v1504 = vpop.f32.mrb[0].mxu0
  %v1505 = vpop.f32.mrb[0].mxu0
  %v1506 = vadd.f32 %v1202, %v1505
  %v1507 = vpop.f32.mrb[0].mxu0
  %1508 = vmatprep.mubr.bf16.mxu0 0
  %1509 = vmatmul.mubr.bf16.gmra.mrb[0].mxu0 %v1177
  %v1510 = vpop.f32.mrb[0].mxu0
  %v1511 = vadd.f32 %v1202, %v1510
  %v1512 = vpop.f32.mrb[0].mxu0
  %v1513 = vpop.f32.mrb[0].mxu0
  %v1514 = vadd.f32 %v1202, %v1513
  %v1515 = vpop.f32.mrb[0].mxu0
  %1516 = vmatprep.mubr.bf16.mxu0 0
  %1517 = vmatmul.mubr.bf16.gmra.mrb[0].mxu0 %v1178
  %v1518 = vpop.f32.mrb[0].mxu0
  %v1519 = vadd.f32 %v1202, %v1518
  %v1520 = vpop.f32.mrb[0].mxu0
  %v1521 = vpop.f32.mrb[0].mxu0
  %v1522 = vadd.f32 %v1202, %v1521
  %v1523 = vpop.f32.mrb[0].mxu0
  %1524 = vmatprep.mubr.bf16.mxu0 0
  %1525 = vmatmul.mubr.bf16.gmra.mrb[0].mxu0 %v1179
  %v1526 = vpop.f32.mrb[0].mxu0
  %v1527 = vadd.f32 %v1202, %v1526
  %v1528 = vpop.f32.mrb[0].mxu0
  %v1529 = vpop.f32.mrb[0].mxu0
  %v1530 = vadd.f32 %v1202, %v1529
  %v1531 = vpop.f32.mrb[0].mxu0
  %1532 = vmatprep.mubr.bf16.mxu0 0
  %1533 = vmatmul.mubr.bf16.gmra.mrb[0].mxu0 %v1180
  %v1534 = vpop.f32.mrb[0].mxu0
  %v1535 = vadd.f32 %v1202, %v1534
  %v1536 = vpop.f32.mrb[0].mxu0
  %v1537 = vpop.f32.mrb[0].mxu0
  %v1538 = vadd.f32 %v1202, %v1537
  %v1539 = vpop.f32.mrb[0].mxu0
  %1540 = vdwg.mxu0
  %1541 = vst [vmem:[%s5] sm:$0xff] %v1287
  %1542 = vst [vmem:[%s5 + $0x8] sm:$0xff] %v1290
  %1543 = vst [vmem:[%s5 + $0x10] sm:$0xff] %v1295
  %1544 = vst [vmem:[%s5 + $0x18] sm:$0xff] %v1298
  %1545 = vst [vmem:[%s5 + $0x20] sm:$0xff] %v1303
  %1546 = vst [vmem:[%s5 + $0x28] sm:$0xff] %v1306
  %1547 = vst [vmem:[%s5 + $0x30] sm:$0xff] %v1311
  %1548 = vst [vmem:[%s5 + $0x38] sm:$0xff] %v1314
  %1549 = vst [vmem:[%s5 + $0x40] sm:$0xff] %v1319
  %1550 = vst [vmem:[%s5 + $0x48] sm:$0xff] %v1322
  %1551 = vst [vmem:[%s5 + $0x50] sm:$0xff] %v1327
  %1552 = vst [vmem:[%s5 + $0x58] sm:$0xff] %v1330
  %1553 = vst [vmem:[%s5 + $0x60] sm:$0xff] %v1335
  %1554 = vst [vmem:[%s5 + $0x68] sm:$0xff] %v1338
  %1555 = vst [vmem:[%s5 + $0x70] sm:$0xff] %v1343
  %1556 = vst [vmem:[%s5 + $0x78] sm:$0xff] %v1346
  %1557 = vst [vmem:[%s5 + $0x80] sm:$0xff] %v1351
  %1558 = vst [vmem:[%s5 + $0x88] sm:$0xff] %v1354
  %1559 = vst [vmem:[%s5 + $0x90] sm:$0xff] %v1359
  %1560 = vst [vmem:[%s5 + $0x98] sm:$0xff] %v1362
  %1561 = vst [vmem:[%s5 + $0xa0] sm:$0xff] %v1367
  %1562 = vst [vmem:[%s5 + $0xa8] sm:$0xff] %v1370
  %1563 = vst [vmem:[%s5 + $0xb0] sm:$0xff] %v1375
  %1564 = vst [vmem:[%s5 + $0xb8] sm:$0xff] %v1378
  %1565 = vst [vmem:[%s5 + $0xc0] sm:$0xff] %v1383
  %1566 = vst [vmem:[%s5 + $0xc8] sm:$0xff] %v1386
  %1567 = vst [vmem:[%s5 + $0xd0] sm:$0xff] %v1391
  %1568 = vst [vmem:[%s5 + $0xd8] sm:$0xff] %v1394
  %1569 = vst [vmem:[%s5 + $0xe0] sm:$0xff] %v1399
  %1570 = vst [vmem:[%s5 + $0xe8] sm:$0xff] %v1402
  %1571 = vst [vmem:[%s5 + $0xf0] sm:$0xff] %v1407
  %1572 = vst [vmem:[%s5 + $0xf8] sm:$0xff] %v1410
  %1573 = vst [vmem:[%s5 + $0x100] sm:$0xff] %v1415
  %1574 = vst [vmem:[%s5 + $0x108] sm:$0xff] %v1418
  %1575 = vst [vmem:[%s5 + $0x110] sm:$0xff] %v1423
  %1576 = vst [vmem:[%s5 + $0x118] sm:$0xff] %v1426
  %1577 = vst [vmem:[%s5 + $0x120] sm:$0xff] %v1431
  %1578 = vst [vmem:[%s5 + $0x128] sm:$0xff] %v1434
  %1579 = vst [vmem:[%s5 + $0x130] sm:$0xff] %v1439
  %1580 = vst [vmem:[%s5 + $0x138] sm:$0xff] %v1442
  %1581 = vst [vmem:[%s5 + $0x140] sm:$0xff] %v1447
  %1582 = vst [vmem:[%s5 + $0x148] sm:$0xff] %v1450
  %1583 = vst [vmem:[%s5 + $0x150] sm:$0xff] %v1455
  %1584 = vst [vmem:[%s5 + $0x158] sm:$0xff] %v1458
  %1585 = vst [vmem:[%s5 + $0x160] sm:$0xff] %v1463
  %1586 = vst [vmem:[%s5 + $0x168] sm:$0xff] %v1466
  %1587 = vst [vmem:[%s5 + $0x170] sm:$0xff] %v1471
  %1588 = vst [vmem:[%s5 + $0x178] sm:$0xff] %v1474
  %1589 = vst [vmem:[%s5 + $0x180] sm:$0xff] %v1479
  %1590 = vst [vmem:[%s5 + $0x188] sm:$0xff] %v1482
  %1591 = vst [vmem:[%s5 + $0x190] sm:$0xff] %v1487
  %1592 = vst [vmem:[%s5 + $0x198] sm:$0xff] %v1490
  %1593 = vst [vmem:[%s5 + $0x1a0] sm:$0xff] %v1495
  %1594 = vst [vmem:[%s5 + $0x1a8] sm:$0xff] %v1498
  %1595 = vst [vmem:[%s5 + $0x1b0] sm:$0xff] %v1503
  %1596 = vst [vmem:[%s5 + $0x1b8] sm:$0xff] %v1506
  %1597 = vst [vmem:[%s5 + $0x1c0] sm:$0xff] %v1511
  %1598 = vst [vmem:[%s5 + $0x1c8] sm:$0xff] %v1514
  %1599 = vst [vmem:[%s5 + $0x1d0] sm:$0xff] %v1519
  %1600 = vst [vmem:[%s5 + $0x1d8] sm:$0xff] %v1522
  %1601 = vst [vmem:[%s5 + $0x1e0] sm:$0xff] %v1527
  %1602 = vst [vmem:[%s5 + $0x1e8] sm:$0xff] %v1530
  %1603 = vst [vmem:[%s5 + $0x1f0] sm:$0xff] %v1535
  %1604 = vst [vmem:[%s5 + $0x1f8] sm:$0xff] %v1538
  // Predicated region
  $region22: #{forward.13} parent=0 // pred_check
    _
  $region23: #{forward.13} parent=0 // pred_check_branch
    %1606 = sbr.rel (0) target = $region25
  $region24: #{forward.13} parent=0 // pred_region
    _
  $region25: #{forward.13} parent=0 // pred_fallthru
    _
  // Predicated region
  $region26: #{forward.13} parent=0 // pred_check
    _
  $region27: #{forward.13} parent=0 // pred_check_branch
    %1608 = sbr.rel (0) target = $region29
  $region28: #{forward.13} parent=0 // pred_region
    _
  $region29: #{forward.13} parent=0 // pred_fallthru
    _

</llo_original>
